<compile_context>
chip_gen: v7x
topology: tpu7x:2x2x1
jax: 0.10.0
libtpu: 0.0.40
codegen_flags: <defaults>
</compile_context>

<pallas_src>
import math
import numpy as np
import jax
import jax.numpy as jnp
from jax.experimental import pallas as pl
from jax.experimental.pallas import tpu as pltpu

# ---- model hyper-parameters (small, consistent with the module defaults) ----
D_MODEL    = 32
D_FF       = 64
NUM_HEADS  = 8
NUM_LAYERS = 2
VOCAB      = 50
PAD_ID     = 0
B          = 2
T          = 8
D_HEAD     = D_MODEL // NUM_HEADS
LN_EPS     = 1e-5
NEG_BIAS   = -1e9                      # finite additive mask bias (== -inf masking here)
VEC_W      = max(D_MODEL, D_FF)        # lane width of the packed per-layer vector slab


def _layer_norm(x, g, b):
    mu  = jnp.mean(x, axis=-1, keepdims=True)
    var = jnp.mean((x - mu) ** 2, axis=-1, keepdims=True)
    return (x - mu) / jnp.sqrt(var + LN_EPS) * g + b


# ----------------------------- Pallas kernel --------------------------------
def encoder_stack_kernel(x_ref, bias_ref, wqkv_ref, wo_ref, w1_ref, w2_ref, vecs_ref, out_ref):
    """Whole TransformerEncoder stack (both layers) in one kernel invocation.

    x_ref    : (B*T, D)          flattened activations
    bias_ref : (B, H*T, T)       additive attention-mask bias (0 / -1e9)
    wqkv_ref : (3*L, D, D)       stacked [wq, wk, wv] per layer (dense, not head-split)
    wo_ref   : (L, D, D)         output projection
    w1_ref   : (L, D, D_FF), w2_ref: (L, D_FF, D)
    vecs_ref : (L, 10, VEC_W)    rows = [b1, bq, bk, bv, bo, b2, ln1_g, ln1_b, ln2_g, ln2_b]
                                 (32-wide vectors zero-padded to VEC_W lanes)
    """
    scale = 1.0 / math.sqrt(D_HEAD)
    x    = x_ref[...]                                    # (B*T, D)
    bias = bias_ref[...]                                 # (B, H*T, T)

    # Head-selection mask (hoisted out of the layer loop): head_mask[h, d] = 1 iff lane d
    # belongs to head h (columns h*Dh .. h*Dh+Dh-1 of the QKV projections).
    lane    = jax.lax.broadcasted_iota(jnp.int32, (NUM_HEADS, D_MODEL), 1)
    head_lo = jax.lax.broadcasted_iota(jnp.int32, (NUM_HEADS, D_MODEL), 0) * D_HEAD
    head_mask = ((lane >= head_lo) & (lane < head_lo + D_HEAD)).astype(jnp.float32)    # (H, D)
    hm4 = jnp.broadcast_to(head_mask[None, :, None, :], (B, NUM_HEADS, T, D_MODEL))    # (B,H,T,D)

    for l in range(NUM_LAYERS):                          # static unrolled layer loop
        wq = wqkv_ref[3 * l + 0]                         # (D, D)
        wk = wqkv_ref[3 * l + 1]
        wv = wqkv_ref[3 * l + 2]
        wo = wo_ref[l]                                   # (D, D)
        w1 = w1_ref[l]                                   # (D, D_FF)
        w2 = w2_ref[l]                                   # (D_FF, D)
        vec = vecs_ref[l]                                # (10, VEC_W)
        b1  = vec[0:1, 0:D_FF]                           # (1, D_FF)
        bq  = vec[1:2, 0:D_MODEL]
        bk  = vec[2:3, 0:D_MODEL]
        bv  = vec[3:4, 0:D_MODEL]
        bo  = vec[4:5, 0:D_MODEL]
        b2  = vec[5:6, 0:D_MODEL]
        ln1_g = vec[6:7, 0:D_MODEL]
        ln1_b = vec[7:8, 0:D_MODEL]
        ln2_g = vec[8:9, 0:D_MODEL]
        ln2_b = vec[9:10, 0:D_MODEL]

        # ---- Q/K/V projections on the flat slab: 3 dense (16,32)@(32,32) MXU pushes ----
        q = (jnp.dot(x, wq, preferred_element_type=jnp.float32) + bq).reshape(B, T, D_MODEL)
        k = (jnp.dot(x, wk, preferred_element_type=jnp.float32) + bk).reshape(B, T, D_MODEL)
        v = (jnp.dot(x, wv, preferred_element_type=jnp.float32) + bv).reshape(B, T, D_MODEL)

        # ---- multi-head attention, all B*H heads batched ----
        # qt[b, h*T+i, :] = q[b, i, :] * head_mask[h, :]  (other heads' lanes are exact zeros)
        qt = (jnp.broadcast_to(q[:, None, :, :], (B, NUM_HEADS, T, D_MODEL)) * hm4)
        qt = qt.reshape(B, NUM_HEADS * T, D_MODEL)       # (B, H*T, D)

        # scores over a full-depth (D=32) contraction: one batched push per batch element
        s = jnp.einsum('bqd,bkd->bqk', qt, k, preferred_element_type=jnp.float32) * scale
        s = s + bias                                     # additive pad-mask bias  (B, H*T, T)

        m = jnp.max(s, axis=-1, keepdims=True)
        e = jnp.exp(s - m)
        p = e * pl.reciprocal(jnp.sum(e, axis=-1, keepdims=True), approx=True)

        # full-width context per head block, then per-lane head selection + combine
        c   = jnp.einsum('bqk,bkd->bqd', p, v, preferred_element_type=jnp.float32)   # (B,H*T,D)
        c   = c.reshape(B, NUM_HEADS, T, D_MODEL) * hm4
        ctx = jnp.sum(c, axis=1).reshape(B * T, D_MODEL)  # == concat-heads layout     (B*T, D)

        # ---- output projection, Add & Norm, position-wise FFN, Add & Norm ----
        attn = jnp.dot(ctx, wo, preferred_element_type=jnp.float32) + bo
        y    = _layer_norm(attn + x, ln1_g, ln1_b)
        hid  = jnp.maximum(jnp.dot(y, w1, preferred_element_type=jnp.float32) + b1, 0.0)
        ff   = jnp.dot(hid, w2, preferred_element_type=jnp.float32) + b2
        x    = _layer_norm(ff + y, ln2_g, ln2_b)

    out_ref[...] = x                                     # single store of the whole slab


# --------------------------- wrapper / param packing -------------------------
def pack_encoder_params(layers):
    wqkv = jnp.stack([p[k] for p in layers for k in ("wq", "wk", "wv")])   # (3L, D, D)
    wo   = jnp.stack([p["wo"] for p in layers])                            # (L, D, D)
    w1   = jnp.stack([p["w1"] for p in layers])                            # (L, D, D_FF)
    w2   = jnp.stack([p["w2"] for p in layers])                            # (L, D_FF, D)

    def row(v):                    # (1, n) -> (1, VEC_W), zero padded on lanes
        return jnp.pad(v, ((0, 0), (0, VEC_W - v.shape[1])))

    vecs = jnp.stack([
        jnp.concatenate([row(p["b1"]),
                         row(p["bq"]), row(p["bk"]), row(p["bv"]),
                         row(p["bo"]), row(p["b2"]),
                         row(p["ln1_g"]), row(p["ln1_b"]),
                         row(p["ln2_g"]), row(p["ln2_b"])], axis=0)
        for p in layers])                                                  # (L, 10, VEC_W)
    return wqkv, wo, w1, w2, vecs


def build_attn_bias(input_lengths):
    """get_attn_pad_mask as an additive (B, H*T, T) bias, reproducing the exact (B*H)
    head-major vs batch-major flatten mismatch of the PyTorch MultiHeadAttention code:
    the computation for (batch b, head h) uses the pad mask of batch (h*B + b) // H."""
    key_pos = jnp.arange(T)[None, :]                          # (1, T)
    pad = key_pos >= input_lengths[:, None]                   # (B, T), True where key padded
    eff_b = (np.arange(NUM_HEADS)[None, :] * B + np.arange(B)[:, None]) // NUM_HEADS   # (B, H)
    eff_pad = pad[eff_b]                                      # (B, H, T)
    bias = jnp.where(eff_pad[:, :, None, :], NEG_BIAS, 0.0)   # (B, H, 1, T)
    bias = jnp.broadcast_to(bias, (B, NUM_HEADS, T, T))
    return bias.reshape(B, NUM_HEADS * T, T).astype(jnp.float32)


def transformer_encoder(inputs, input_lengths, params):
    # Embedding * sqrt(d_model) + positional encoding; input dropout = identity (eval).
    # Kept in XLA (one-time gather; no benefit in-kernel).
    x = params["embedding"][inputs] * math.sqrt(D_MODEL) + params["pe"][:T][None]
    bias = build_attn_bias(input_lengths)
    wqkv, wo, w1, w2, vecs = pack_encoder_params(params["layers"])

    vmem = pl.BlockSpec(memory_space=pltpu.MemorySpace.VMEM)
    out2d = pl.pallas_call(
        encoder_stack_kernel,
        out_shape=jax.ShapeDtypeStruct((B * T, D_MODEL), jnp.float32),
        in_specs=[vmem] * 7,
        out_specs=vmem,
    )(x.reshape(B * T, D_MODEL), bias, wqkv, wo, w1, w2, vecs)
    return out2d.reshape(B, T, D_MODEL)


# ------------------------------- init / reference ---------------------------
def positional_encoding(max_len, d_model):
    pos = np.arange(max_len, dtype=np.float32)[:, None]
    div = np.exp(np.arange(0, d_model, 2, dtype=np.float32) *
                 -(math.log(10000.0) / d_model))
    pe = np.zeros((max_len, d_model), np.float32)
    pe[:, 0::2] = np.sin(pos * div)
    pe[:, 1::2] = np.cos(pos * div)
    return jnp.asarray(pe)


def init_params(key):
    def lin(k, fan_in, fan_out):
        kw, kb = jax.random.split(k)
        return (jax.random.normal(kw, (fan_in, fan_out), jnp.float32) * 0.05,
                jax.random.normal(kb, (1, fan_out), jnp.float32) * 0.05)

    keys = jax.random.split(key, NUM_LAYERS + 1)
    emb = jax.random.normal(keys[0], (VOCAB, D_MODEL), jnp.float32) * 0.05
    emb = emb.at[PAD_ID].set(0.0)                          # padding_idx row = 0

    layers = []
    for li in range(NUM_LAYERS):
        lk = jax.random.split(keys[li + 1], 6)
        wq, bq = lin(lk[0], D_MODEL, D_MODEL)
        wk, bk = lin(lk[1], D_MODEL, D_MODEL)
        wv, bv = lin(lk[2], D_MODEL, D_MODEL)
        wo, bo = lin(lk[3], D_MODEL, D_MODEL)
        w1, b1 = lin(lk[4], D_MODEL, D_FF)
        w2, b2 = lin(lk[5], D_FF, D_MODEL)
        layers.append(dict(
            wq=wq, bq=bq, wk=wk, bk=bk, wv=wv, bv=bv, wo=wo, bo=bo,
            ln1_g=jnp.ones((1, D_MODEL), jnp.float32),
            ln1_b=jnp.zeros((1, D_MODEL), jnp.float32),
            w1=w1, b1=b1, w2=w2, b2=b2,
            ln2_g=jnp.ones((1, D_MODEL), jnp.float32),
            ln2_b=jnp.zeros((1, D_MODEL), jnp.float32),
        ))
    return dict(embedding=emb, pe=positional_encoding(5000, D_MODEL), layers=layers)


def _ref_layer(x, attn_pad_mask, p):
    q = (x @ p["wq"] + p["bq"]).reshape(B, T, NUM_HEADS, D_HEAD)
    k = (x @ p["wk"] + p["bk"]).reshape(B, T, NUM_HEADS, D_HEAD)
    v = (x @ p["wv"] + p["bv"]).reshape(B, T, NUM_HEADS, D_HEAD)
    q = jnp.transpose(q, (2, 0, 1, 3)).reshape(B * NUM_HEADS, T, D_HEAD)
    k = jnp.transpose(k, (2, 0, 1, 3)).reshape(B * NUM_HEADS, T, D_HEAD)
    v = jnp.transpose(v, (2, 0, 1, 3)).reshape(B * NUM_HEADS, T, D_HEAD)
    score = jnp.einsum("bqd,bkd->bqk", q, k) / math.sqrt(D_HEAD)
    mask = jnp.broadcast_to(attn_pad_mask[:, None], (B, NUM_HEADS, T, T)
                            ).reshape(B * NUM_HEADS, T, T)
    score = jnp.where(mask, -jnp.inf, score)
    attn = jax.nn.softmax(score, axis=-1)
    ctx = jnp.einsum("bqk,bkd->bqd", attn, v)
    ctx = jnp.transpose(ctx.reshape(NUM_HEADS, B, T, D_HEAD), (1, 2, 0, 3)
                        ).reshape(B, T, D_MODEL)
    attn_out = ctx @ p["wo"] + p["bo"]
    y = _layer_norm(attn_out + x, p["ln1_g"], p["ln1_b"])
    ff = jnp.maximum(y @ p["w1"] + p["b1"], 0.0) @ p["w2"] + p["b2"]
    return _layer_norm(ff + y, p["ln2_g"], p["ln2_b"])


def transformer_encoder_ref(inputs, input_lengths, params):
    x = params["embedding"][inputs] * math.sqrt(D_MODEL) + params["pe"][:T][None]
    key_pos = jnp.arange(T)[None, :]
    pad = key_pos >= input_lengths[:, None]
    attn_pad_mask = jnp.broadcast_to(pad[:, None, :], (B, T, T))
    for layer in params["layers"]:
        x = _ref_layer(x, attn_pad_mask, layer)
    return x


# ---------------------------------- main -------------------------------------
if __name__ == "__main__":
    key = jax.random.PRNGKey(0)
    k_params, k_inp = jax.random.split(key)
    params = init_params(k_params)

    inputs = jax.random.randint(k_inp, (B, T), 1, VOCAB, dtype=jnp.int32)
    input_lengths = jnp.array([8, 6], dtype=jnp.int32)
    inputs = inputs.at[1, 6:].set(PAD_ID)   # pad positions beyond length

    out = jax.jit(transformer_encoder)(inputs, input_lengths, params)
    out = jax.block_until_ready(out)

    ref = jax.block_until_ready(transformer_encoder_ref(inputs, input_lengths, params))
    # Tolerance budget: the only deliberate deviation from the f32 reference is the EUP
    # approximate reciprocal in the softmax denominator (rel. err <~1e-3 end-to-end).
    np.testing.assert_allclose(np.asarray(out), np.asarray(ref), rtol=5e-3, atol=5e-3)

    print("KERNEL_OK")
</pallas_src>

<mosaic_0001>
module attributes {stable_mosaic.version = 11 : i64} {
  func.func @encoder_stack_kernel(%arg0: memref<16x32xf32, #tpu.memory_space<vmem>>, %arg1: memref<2x64x8xf32, #tpu.memory_space<vmem>>, %arg2: memref<6x32x32xf32, #tpu.memory_space<vmem>>, %arg3: memref<2x32x32xf32, #tpu.memory_space<vmem>>, %arg4: memref<2x32x64xf32, #tpu.memory_space<vmem>>, %arg5: memref<2x64x32xf32, #tpu.memory_space<vmem>>, %arg6: memref<2x10x64xf32, #tpu.memory_space<vmem>>, %arg7: memref<16x32xf32, #tpu.memory_space<vmem>>) attributes {dimension_semantics = [], scalar_prefetch = 0 : i64, scratch_operands = 0 : i64, tpu.core_type = #tpu.core_type<tc>} {
    %c0 = arith.constant 0 : index
    %c0_0 = arith.constant 0 : index
    %0 = vector.load %arg0[%c0, %c0_0] : memref<16x32xf32, #tpu.memory_space<vmem>>, vector<16x32xf32>
    %c0_1 = arith.constant 0 : index
    %c0_2 = arith.constant 0 : index
    %c0_3 = arith.constant 0 : index
    %1 = vector.load %arg1[%c0_1, %c0_2, %c0_3] : memref<2x64x8xf32, #tpu.memory_space<vmem>>, vector<2x64x8xf32>
    %2 = tpu.iota {dimensions = array<i32: 1>} : vector<8x32xi32>
    %3 = tpu.iota {dimensions = array<i32: 0>} : vector<8x32xi32>
    %c4_i32 = arith.constant 4 : i32
    %4 = vector.broadcast %c4_i32 : i32 to vector<8x32xi32>
    %5 = arith.muli %3, %4 : vector<8x32xi32>
    %6 = arith.cmpi sge, %2, %5 : vector<8x32xi32>
    %c4_i32_4 = arith.constant 4 : i32
    %7 = vector.broadcast %c4_i32_4 : i32 to vector<8x32xi32>
    %8 = arith.addi %5, %7 : vector<8x32xi32>
    %9 = arith.cmpi slt, %2, %8 : vector<8x32xi32>
    %10 = arith.andi %6, %9 : vector<8x32xi1>
    %11 = arith.extui %10 : vector<8x32xi1> to vector<8x32xi32>
    %12 = arith.sitofp %11 : vector<8x32xi32> to vector<8x32xf32>
    %13 = vector.shape_cast %12 : vector<8x32xf32> to vector<1x8x1x32xf32>
    %14 = vector.shape_cast %13 : vector<1x8x1x32xf32> to vector<1x8x1x32xf32>
    %15 = vector.broadcast %14 : vector<1x8x1x32xf32> to vector<2x8x8x32xf32>
    %c0_5 = arith.constant 0 : index
    %c0_6 = arith.constant 0 : index
    %c0_7 = arith.constant 0 : index
    %16 = vector.load %arg2[%c0_5, %c0_6, %c0_7] : memref<6x32x32xf32, #tpu.memory_space<vmem>>, vector<1x32x32xf32>
    %17 = vector.shape_cast %16 : vector<1x32x32xf32> to vector<32x32xf32>
    %c1 = arith.constant 1 : index
    %c0_8 = arith.constant 0 : index
    %c0_9 = arith.constant 0 : index
    %18 = vector.load %arg2[%c1, %c0_8, %c0_9] : memref<6x32x32xf32, #tpu.memory_space<vmem>>, vector<1x32x32xf32>
    %19 = vector.shape_cast %18 : vector<1x32x32xf32> to vector<32x32xf32>
    %c2 = arith.constant 2 : index
    %c0_10 = arith.constant 0 : index
    %c0_11 = arith.constant 0 : index
    %20 = vector.load %arg2[%c2, %c0_10, %c0_11] : memref<6x32x32xf32, #tpu.memory_space<vmem>>, vector<1x32x32xf32>
    %21 = vector.shape_cast %20 : vector<1x32x32xf32> to vector<32x32xf32>
    %c0_12 = arith.constant 0 : index
    %c0_13 = arith.constant 0 : index
    %c0_14 = arith.constant 0 : index
    %22 = vector.load %arg3[%c0_12, %c0_13, %c0_14] : memref<2x32x32xf32, #tpu.memory_space<vmem>>, vector<1x32x32xf32>
    %23 = vector.shape_cast %22 : vector<1x32x32xf32> to vector<32x32xf32>
    %c0_15 = arith.constant 0 : index
    %c0_16 = arith.constant 0 : index
    %c0_17 = arith.constant 0 : index
    %24 = vector.load %arg4[%c0_15, %c0_16, %c0_17] : memref<2x32x64xf32, #tpu.memory_space<vmem>>, vector<1x32x64xf32>
    %25 = vector.shape_cast %24 : vector<1x32x64xf32> to vector<32x64xf32>
    %c0_18 = arith.constant 0 : index
    %c0_19 = arith.constant 0 : index
    %c0_20 = arith.constant 0 : index
    %26 = vector.load %arg5[%c0_18, %c0_19, %c0_20] : memref<2x64x32xf32, #tpu.memory_space<vmem>>, vector<1x64x32xf32>
    %27 = vector.shape_cast %26 : vector<1x64x32xf32> to vector<64x32xf32>
    %c0_21 = arith.constant 0 : index
    %c0_22 = arith.constant 0 : index
    %c0_23 = arith.constant 0 : index
    %28 = vector.load %arg6[%c0_21, %c0_22, %c0_23] : memref<2x10x64xf32, #tpu.memory_space<vmem>>, vector<1x10x64xf32>
    %29 = vector.shape_cast %28 : vector<1x10x64xf32> to vector<10x64xf32>
    %30 = vector.extract_strided_slice %29 {offsets = [0, 0], sizes = [1, 64], strides = [1, 1]} : vector<10x64xf32> to vector<1x64xf32>
    %31 = vector.extract_strided_slice %29 {offsets = [1, 0], sizes = [1, 32], strides = [1, 1]} : vector<10x64xf32> to vector<1x32xf32>
    %32 = vector.extract_strided_slice %29 {offsets = [2, 0], sizes = [1, 32], strides = [1, 1]} : vector<10x64xf32> to vector<1x32xf32>
    %33 = vector.extract_strided_slice %29 {offsets = [3, 0], sizes = [1, 32], strides = [1, 1]} : vector<10x64xf32> to vector<1x32xf32>
    %34 = vector.extract_strided_slice %29 {offsets = [4, 0], sizes = [1, 32], strides = [1, 1]} : vector<10x64xf32> to vector<1x32xf32>
    %35 = vector.extract_strided_slice %29 {offsets = [5, 0], sizes = [1, 32], strides = [1, 1]} : vector<10x64xf32> to vector<1x32xf32>
    %36 = vector.extract_strided_slice %29 {offsets = [6, 0], sizes = [1, 32], strides = [1, 1]} : vector<10x64xf32> to vector<1x32xf32>
    %37 = vector.extract_strided_slice %29 {offsets = [7, 0], sizes = [1, 32], strides = [1, 1]} : vector<10x64xf32> to vector<1x32xf32>
    %38 = vector.extract_strided_slice %29 {offsets = [8, 0], sizes = [1, 32], strides = [1, 1]} : vector<10x64xf32> to vector<1x32xf32>
    %39 = vector.extract_strided_slice %29 {offsets = [9, 0], sizes = [1, 32], strides = [1, 1]} : vector<10x64xf32> to vector<1x32xf32>
    %cst = arith.constant dense<0.000000e+00> : vector<16x32xf32>
    %40 = tpu.matmul %0, %17, %cst {dimension_numbers = #tpu.dot_dimension_numbers<[1], [0], [0], [1], [0, 0, 1, 1], [], []>} : vector<16x32xf32>, vector<32x32xf32>, vector<16x32xf32> -> vector<16x32xf32>
    %41 = vector.broadcast %31 : vector<1x32xf32> to vector<16x32xf32>
    %42 = arith.addf %40, %41 : vector<16x32xf32>
    %43 = vector.shape_cast %42 : vector<16x32xf32> to vector<2x8x32xf32>
    %cst_24 = arith.constant dense<0.000000e+00> : vector<16x32xf32>
    %44 = tpu.matmul %0, %19, %cst_24 {dimension_numbers = #tpu.dot_dimension_numbers<[1], [0], [0], [1], [0, 0, 1, 1], [], []>} : vector<16x32xf32>, vector<32x32xf32>, vector<16x32xf32> -> vector<16x32xf32>
    %45 = vector.broadcast %32 : vector<1x32xf32> to vector<16x32xf32>
    %46 = arith.addf %44, %45 : vector<16x32xf32>
    %47 = vector.shape_cast %46 : vector<16x32xf32> to vector<2x8x32xf32>
    %cst_25 = arith.constant dense<0.000000e+00> : vector<16x32xf32>
    %48 = tpu.matmul %0, %21, %cst_25 {dimension_numbers = #tpu.dot_dimension_numbers<[1], [0], [0], [1], [0, 0, 1, 1], [], []>} : vector<16x32xf32>, vector<32x32xf32>, vector<16x32xf32> -> vector<16x32xf32>
    %49 = vector.broadcast %33 : vector<1x32xf32> to vector<16x32xf32>
    %50 = arith.addf %48, %49 : vector<16x32xf32>
    %51 = vector.shape_cast %50 : vector<16x32xf32> to vector<2x8x32xf32>
    %52 = vector.shape_cast %43 : vector<2x8x32xf32> to vector<2x1x8x32xf32>
    %53 = vector.shape_cast %52 : vector<2x1x8x32xf32> to vector<2x1x8x32xf32>
    %54 = vector.broadcast %53 : vector<2x1x8x32xf32> to vector<2x8x8x32xf32>
    %55 = arith.mulf %54, %15 : vector<2x8x8x32xf32>
    %56 = vector.shape_cast %55 : vector<2x8x8x32xf32> to vector<2x64x32xf32>
    "tpu.trace_start"() <{level = 10 : i32, message = "bqd,bkd->bqk"}> : () -> ()
    %cst_26 = arith.constant dense<0.000000e+00> : vector<2x64x8xf32>
    %57 = tpu.matmul %56, %47, %cst_26 {dimension_numbers = #tpu.dot_dimension_numbers<[2], [2], [1], [1], [0, 0, 0, 1, 1, 1], [0], [0]>} : vector<2x64x32xf32>, vector<2x8x32xf32>, vector<2x64x8xf32> -> vector<2x64x8xf32>
    "tpu.trace_stop"() : () -> ()
    %cst_27 = arith.constant 5.000000e-01 : f32
    %58 = vector.broadcast %cst_27 : f32 to vector<2x64x8xf32>
    %59 = arith.mulf %57, %58 : vector<2x64x8xf32>
    %60 = arith.addf %59, %1 : vector<2x64x8xf32>
    %cst_28 = arith.constant dense<0xFF800000> : vector<2x64xf32>
    %61 = vector.multi_reduction <maximumf>, %60, %cst_28 [2] : vector<2x64x8xf32> to vector<2x64xf32>
    %62 = vector.shape_cast %61 : vector<2x64xf32> to vector<2x64x1xf32>
    %63 = vector.broadcast %62 : vector<2x64x1xf32> to vector<2x64x8xf32>
    %64 = arith.subf %60, %63 : vector<2x64x8xf32>
    %65 = math.exp %64 : vector<2x64x8xf32>
    %cst_29 = arith.constant dense<0.000000e+00> : vector<2x64xf32>
    %66 = vector.multi_reduction <add>, %65, %cst_29 [2] : vector<2x64x8xf32> to vector<2x64xf32>
    %67 = vector.shape_cast %66 : vector<2x64xf32> to vector<2x64x1xf32>
    %68 = tpu.reciprocal %67 {approx = true} : vector<2x64x1xf32> -> vector<2x64x1xf32>
    %69 = vector.broadcast %68 : vector<2x64x1xf32> to vector<2x64x8xf32>
    %70 = arith.mulf %65, %69 : vector<2x64x8xf32>
    "tpu.trace_start"() <{level = 10 : i32, message = "bqk,bkd->bqd"}> : () -> ()
    %cst_30 = arith.constant dense<0.000000e+00> : vector<2x64x32xf32>
    %71 = tpu.matmul %70, %51, %cst_30 {dimension_numbers = #tpu.dot_dimension_numbers<[2], [1], [1], [2], [0, 0, 0, 1, 1, 2], [0], [0]>} : vector<2x64x8xf32>, vector<2x8x32xf32>, vector<2x64x32xf32> -> vector<2x64x32xf32>
    "tpu.trace_stop"() : () -> ()
    %72 = vector.shape_cast %71 : vector<2x64x32xf32> to vector<2x8x8x32xf32>
    %73 = arith.mulf %72, %15 : vector<2x8x8x32xf32>
    %cst_31 = arith.constant dense<0.000000e+00> : vector<2x8x32xf32>
    %74 = vector.multi_reduction <add>, %73, %cst_31 [1] : vector<2x8x8x32xf32> to vector<2x8x32xf32>
    %75 = vector.shape_cast %74 : vector<2x8x32xf32> to vector<16x32xf32>
    %cst_32 = arith.constant dense<0.000000e+00> : vector<16x32xf32>
    %76 = tpu.matmul %75, %23, %cst_32 {dimension_numbers = #tpu.dot_dimension_numbers<[1], [0], [0], [1], [0, 0, 1, 1], [], []>} : vector<16x32xf32>, vector<32x32xf32>, vector<16x32xf32> -> vector<16x32xf32>
    %77 = vector.broadcast %34 : vector<1x32xf32> to vector<16x32xf32>
    %78 = arith.addf %76, %77 : vector<16x32xf32>
    %79 = arith.addf %78, %0 : vector<16x32xf32>
    %cst_33 = arith.constant dense<0.000000e+00> : vector<16xf32>
    %80 = vector.multi_reduction <add>, %79, %cst_33 [1] : vector<16x32xf32> to vector<16xf32>
    %81 = vector.shape_cast %80 : vector<16xf32> to vector<16x1xf32>
    %cst_34 = arith.constant 3.200000e+01 : f32
    %82 = vector.broadcast %cst_34 : f32 to vector<16x1xf32>
    %83 = arith.divf %81, %82 : vector<16x1xf32>
    %84 = vector.broadcast %83 : vector<16x1xf32> to vector<16x32xf32>
    %85 = arith.subf %79, %84 : vector<16x32xf32>
    %86 = arith.mulf %85, %85 : vector<16x32xf32>
    %cst_35 = arith.constant dense<0.000000e+00> : vector<16xf32>
    %87 = vector.multi_reduction <add>, %86, %cst_35 [1] : vector<16x32xf32> to vector<16xf32>
    %88 = vector.shape_cast %87 : vector<16xf32> to vector<16x1xf32>
    %cst_36 = arith.constant 3.200000e+01 : f32
    %89 = vector.broadcast %cst_36 : f32 to vector<16x1xf32>
    %90 = arith.divf %88, %89 : vector<16x1xf32>
    %91 = vector.broadcast %83 : vector<16x1xf32> to vector<16x32xf32>
    %92 = arith.subf %79, %91 : vector<16x32xf32>
    %cst_37 = arith.constant 9.99999974E-6 : f32
    %93 = vector.broadcast %cst_37 : f32 to vector<16x1xf32>
    %94 = arith.addf %90, %93 : vector<16x1xf32>
    %95 = math.sqrt %94 : vector<16x1xf32>
    %96 = vector.broadcast %95 : vector<16x1xf32> to vector<16x32xf32>
    %97 = arith.divf %92, %96 : vector<16x32xf32>
    %98 = vector.broadcast %36 : vector<1x32xf32> to vector<16x32xf32>
    %99 = arith.mulf %97, %98 : vector<16x32xf32>
    %100 = vector.broadcast %37 : vector<1x32xf32> to vector<16x32xf32>
    %101 = arith.addf %99, %100 : vector<16x32xf32>
    %cst_38 = arith.constant dense<0.000000e+00> : vector<16x64xf32>
    %102 = tpu.matmul %101, %25, %cst_38 {dimension_numbers = #tpu.dot_dimension_numbers<[1], [0], [0], [1], [0, 0, 1, 1], [], []>} : vector<16x32xf32>, vector<32x64xf32>, vector<16x64xf32> -> vector<16x64xf32>
    %103 = vector.broadcast %30 : vector<1x64xf32> to vector<16x64xf32>
    %104 = arith.addf %102, %103 : vector<16x64xf32>
    %cst_39 = arith.constant 0.000000e+00 : f32
    %105 = vector.broadcast %cst_39 : f32 to vector<16x64xf32>
    %106 = arith.maximumf %104, %105 : vector<16x64xf32>
    %cst_40 = arith.constant dense<0.000000e+00> : vector<16x32xf32>
    %107 = tpu.matmul %106, %27, %cst_40 {dimension_numbers = #tpu.dot_dimension_numbers<[1], [0], [0], [1], [0, 0, 1, 1], [], []>} : vector<16x64xf32>, vector<64x32xf32>, vector<16x32xf32> -> vector<16x32xf32>
    %108 = vector.broadcast %35 : vector<1x32xf32> to vector<16x32xf32>
    %109 = arith.addf %107, %108 : vector<16x32xf32>
    %110 = arith.addf %109, %101 : vector<16x32xf32>
    %cst_41 = arith.constant dense<0.000000e+00> : vector<16xf32>
    %111 = vector.multi_reduction <add>, %110, %cst_41 [1] : vector<16x32xf32> to vector<16xf32>
    %112 = vector.shape_cast %111 : vector<16xf32> to vector<16x1xf32>
    %cst_42 = arith.constant 3.200000e+01 : f32
    %113 = vector.broadcast %cst_42 : f32 to vector<16x1xf32>
    %114 = arith.divf %112, %113 : vector<16x1xf32>
    %115 = vector.broadcast %114 : vector<16x1xf32> to vector<16x32xf32>
    %116 = arith.subf %110, %115 : vector<16x32xf32>
    %117 = arith.mulf %116, %116 : vector<16x32xf32>
    %cst_43 = arith.constant dense<0.000000e+00> : vector<16xf32>
    %118 = vector.multi_reduction <add>, %117, %cst_43 [1] : vector<16x32xf32> to vector<16xf32>
    %119 = vector.shape_cast %118 : vector<16xf32> to vector<16x1xf32>
    %cst_44 = arith.constant 3.200000e+01 : f32
    %120 = vector.broadcast %cst_44 : f32 to vector<16x1xf32>
    %121 = arith.divf %119, %120 : vector<16x1xf32>
    %122 = vector.broadcast %114 : vector<16x1xf32> to vector<16x32xf32>
    %123 = arith.subf %110, %122 : vector<16x32xf32>
    %cst_45 = arith.constant 9.99999974E-6 : f32
    %124 = vector.broadcast %cst_45 : f32 to vector<16x1xf32>
    %125 = arith.addf %121, %124 : vector<16x1xf32>
    %126 = math.sqrt %125 : vector<16x1xf32>
    %127 = vector.broadcast %126 : vector<16x1xf32> to vector<16x32xf32>
    %128 = arith.divf %123, %127 : vector<16x32xf32>
    %129 = vector.broadcast %38 : vector<1x32xf32> to vector<16x32xf32>
    %130 = arith.mulf %128, %129 : vector<16x32xf32>
    %131 = vector.broadcast %39 : vector<1x32xf32> to vector<16x32xf32>
    %132 = arith.addf %130, %131 : vector<16x32xf32>
    %c3 = arith.constant 3 : index
    %c0_46 = arith.constant 0 : index
    %c0_47 = arith.constant 0 : index
    %133 = vector.load %arg2[%c3, %c0_46, %c0_47] : memref<6x32x32xf32, #tpu.memory_space<vmem>>, vector<1x32x32xf32>
    %134 = vector.shape_cast %133 : vector<1x32x32xf32> to vector<32x32xf32>
    %c4 = arith.constant 4 : index
    %c0_48 = arith.constant 0 : index
    %c0_49 = arith.constant 0 : index
    %135 = vector.load %arg2[%c4, %c0_48, %c0_49] : memref<6x32x32xf32, #tpu.memory_space<vmem>>, vector<1x32x32xf32>
    %136 = vector.shape_cast %135 : vector<1x32x32xf32> to vector<32x32xf32>
    %c5 = arith.constant 5 : index
    %c0_50 = arith.constant 0 : index
    %c0_51 = arith.constant 0 : index
    %137 = vector.load %arg2[%c5, %c0_50, %c0_51] : memref<6x32x32xf32, #tpu.memory_space<vmem>>, vector<1x32x32xf32>
    %138 = vector.shape_cast %137 : vector<1x32x32xf32> to vector<32x32xf32>
    %c1_52 = arith.constant 1 : index
    %c0_53 = arith.constant 0 : index
    %c0_54 = arith.constant 0 : index
    %139 = vector.load %arg3[%c1_52, %c0_53, %c0_54] : memref<2x32x32xf32, #tpu.memory_space<vmem>>, vector<1x32x32xf32>
    %140 = vector.shape_cast %139 : vector<1x32x32xf32> to vector<32x32xf32>
    %c1_55 = arith.constant 1 : index
    %c0_56 = arith.constant 0 : index
    %c0_57 = arith.constant 0 : index
    %141 = vector.load %arg4[%c1_55, %c0_56, %c0_57] : memref<2x32x64xf32, #tpu.memory_space<vmem>>, vector<1x32x64xf32>
    %142 = vector.shape_cast %141 : vector<1x32x64xf32> to vector<32x64xf32>
    %c1_58 = arith.constant 1 : index
    %c0_59 = arith.constant 0 : index
    %c0_60 = arith.constant 0 : index
    %143 = vector.load %arg5[%c1_58, %c0_59, %c0_60] : memref<2x64x32xf32, #tpu.memory_space<vmem>>, vector<1x64x32xf32>
    %144 = vector.shape_cast %143 : vector<1x64x32xf32> to vector<64x32xf32>
    %c1_61 = arith.constant 1 : index
    %c0_62 = arith.constant 0 : index
    %c0_63 = arith.constant 0 : index
    %145 = vector.load %arg6[%c1_61, %c0_62, %c0_63] : memref<2x10x64xf32, #tpu.memory_space<vmem>>, vector<1x10x64xf32>
    %146 = vector.shape_cast %145 : vector<1x10x64xf32> to vector<10x64xf32>
    %147 = vector.extract_strided_slice %146 {offsets = [0, 0], sizes = [1, 64], strides = [1, 1]} : vector<10x64xf32> to vector<1x64xf32>
    %148 = vector.extract_strided_slice %146 {offsets = [1, 0], sizes = [1, 32], strides = [1, 1]} : vector<10x64xf32> to vector<1x32xf32>
    %149 = vector.extract_strided_slice %146 {offsets = [2, 0], sizes = [1, 32], strides = [1, 1]} : vector<10x64xf32> to vector<1x32xf32>
    %150 = vector.extract_strided_slice %146 {offsets = [3, 0], sizes = [1, 32], strides = [1, 1]} : vector<10x64xf32> to vector<1x32xf32>
    %151 = vector.extract_strided_slice %146 {offsets = [4, 0], sizes = [1, 32], strides = [1, 1]} : vector<10x64xf32> to vector<1x32xf32>
    %152 = vector.extract_strided_slice %146 {offsets = [5, 0], sizes = [1, 32], strides = [1, 1]} : vector<10x64xf32> to vector<1x32xf32>
    %153 = vector.extract_strided_slice %146 {offsets = [6, 0], sizes = [1, 32], strides = [1, 1]} : vector<10x64xf32> to vector<1x32xf32>
    %154 = vector.extract_strided_slice %146 {offsets = [7, 0], sizes = [1, 32], strides = [1, 1]} : vector<10x64xf32> to vector<1x32xf32>
    %155 = vector.extract_strided_slice %146 {offsets = [8, 0], sizes = [1, 32], strides = [1, 1]} : vector<10x64xf32> to vector<1x32xf32>
    %156 = vector.extract_strided_slice %146 {offsets = [9, 0], sizes = [1, 32], strides = [1, 1]} : vector<10x64xf32> to vector<1x32xf32>
    %cst_64 = arith.constant dense<0.000000e+00> : vector<16x32xf32>
    %157 = tpu.matmul %132, %134, %cst_64 {dimension_numbers = #tpu.dot_dimension_numbers<[1], [0], [0], [1], [0, 0, 1, 1], [], []>} : vector<16x32xf32>, vector<32x32xf32>, vector<16x32xf32> -> vector<16x32xf32>
    %158 = vector.broadcast %148 : vector<1x32xf32> to vector<16x32xf32>
    %159 = arith.addf %157, %158 : vector<16x32xf32>
    %160 = vector.shape_cast %159 : vector<16x32xf32> to vector<2x8x32xf32>
    %cst_65 = arith.constant dense<0.000000e+00> : vector<16x32xf32>
    %161 = tpu.matmul %132, %136, %cst_65 {dimension_numbers = #tpu.dot_dimension_numbers<[1], [0], [0], [1], [0, 0, 1, 1], [], []>} : vector<16x32xf32>, vector<32x32xf32>, vector<16x32xf32> -> vector<16x32xf32>
    %162 = vector.broadcast %149 : vector<1x32xf32> to vector<16x32xf32>
    %163 = arith.addf %161, %162 : vector<16x32xf32>
    %164 = vector.shape_cast %163 : vector<16x32xf32> to vector<2x8x32xf32>
    %cst_66 = arith.constant dense<0.000000e+00> : vector<16x32xf32>
    %165 = tpu.matmul %132, %138, %cst_66 {dimension_numbers = #tpu.dot_dimension_numbers<[1], [0], [0], [1], [0, 0, 1, 1], [], []>} : vector<16x32xf32>, vector<32x32xf32>, vector<16x32xf32> -> vector<16x32xf32>
    %166 = vector.broadcast %150 : vector<1x32xf32> to vector<16x32xf32>
    %167 = arith.addf %165, %166 : vector<16x32xf32>
    %168 = vector.shape_cast %167 : vector<16x32xf32> to vector<2x8x32xf32>
    %169 = vector.shape_cast %160 : vector<2x8x32xf32> to vector<2x1x8x32xf32>
    %170 = vector.shape_cast %169 : vector<2x1x8x32xf32> to vector<2x1x8x32xf32>
    %171 = vector.broadcast %170 : vector<2x1x8x32xf32> to vector<2x8x8x32xf32>
    %172 = arith.mulf %171, %15 : vector<2x8x8x32xf32>
    %173 = vector.shape_cast %172 : vector<2x8x8x32xf32> to vector<2x64x32xf32>
    "tpu.trace_start"() <{level = 10 : i32, message = "bqd,bkd->bqk"}> : () -> ()
    %cst_67 = arith.constant dense<0.000000e+00> : vector<2x64x8xf32>
    %174 = tpu.matmul %173, %164, %cst_67 {dimension_numbers = #tpu.dot_dimension_numbers<[2], [2], [1], [1], [0, 0, 0, 1, 1, 1], [0], [0]>} : vector<2x64x32xf32>, vector<2x8x32xf32>, vector<2x64x8xf32> -> vector<2x64x8xf32>
    "tpu.trace_stop"() : () -> ()
    %cst_68 = arith.constant 5.000000e-01 : f32
    %175 = vector.broadcast %cst_68 : f32 to vector<2x64x8xf32>
    %176 = arith.mulf %174, %175 : vector<2x64x8xf32>
    %177 = arith.addf %176, %1 : vector<2x64x8xf32>
    %cst_69 = arith.constant dense<0xFF800000> : vector<2x64xf32>
    %178 = vector.multi_reduction <maximumf>, %177, %cst_69 [2] : vector<2x64x8xf32> to vector<2x64xf32>
    %179 = vector.shape_cast %178 : vector<2x64xf32> to vector<2x64x1xf32>
    %180 = vector.broadcast %179 : vector<2x64x1xf32> to vector<2x64x8xf32>
    %181 = arith.subf %177, %180 : vector<2x64x8xf32>
    %182 = math.exp %181 : vector<2x64x8xf32>
    %cst_70 = arith.constant dense<0.000000e+00> : vector<2x64xf32>
    %183 = vector.multi_reduction <add>, %182, %cst_70 [2] : vector<2x64x8xf32> to vector<2x64xf32>
    %184 = vector.shape_cast %183 : vector<2x64xf32> to vector<2x64x1xf32>
    %185 = tpu.reciprocal %184 {approx = true} : vector<2x64x1xf32> -> vector<2x64x1xf32>
    %186 = vector.broadcast %185 : vector<2x64x1xf32> to vector<2x64x8xf32>
    %187 = arith.mulf %182, %186 : vector<2x64x8xf32>
    "tpu.trace_start"() <{level = 10 : i32, message = "bqk,bkd->bqd"}> : () -> ()
    %cst_71 = arith.constant dense<0.000000e+00> : vector<2x64x32xf32>
    %188 = tpu.matmul %187, %168, %cst_71 {dimension_numbers = #tpu.dot_dimension_numbers<[2], [1], [1], [2], [0, 0, 0, 1, 1, 2], [0], [0]>} : vector<2x64x8xf32>, vector<2x8x32xf32>, vector<2x64x32xf32> -> vector<2x64x32xf32>
    "tpu.trace_stop"() : () -> ()
    %189 = vector.shape_cast %188 : vector<2x64x32xf32> to vector<2x8x8x32xf32>
    %190 = arith.mulf %189, %15 : vector<2x8x8x32xf32>
    %cst_72 = arith.constant dense<0.000000e+00> : vector<2x8x32xf32>
    %191 = vector.multi_reduction <add>, %190, %cst_72 [1] : vector<2x8x8x32xf32> to vector<2x8x32xf32>
    %192 = vector.shape_cast %191 : vector<2x8x32xf32> to vector<16x32xf32>
    %cst_73 = arith.constant dense<0.000000e+00> : vector<16x32xf32>
    %193 = tpu.matmul %192, %140, %cst_73 {dimension_numbers = #tpu.dot_dimension_numbers<[1], [0], [0], [1], [0, 0, 1, 1], [], []>} : vector<16x32xf32>, vector<32x32xf32>, vector<16x32xf32> -> vector<16x32xf32>
    %194 = vector.broadcast %151 : vector<1x32xf32> to vector<16x32xf32>
    %195 = arith.addf %193, %194 : vector<16x32xf32>
    %196 = arith.addf %195, %132 : vector<16x32xf32>
    %cst_74 = arith.constant dense<0.000000e+00> : vector<16xf32>
    %197 = vector.multi_reduction <add>, %196, %cst_74 [1] : vector<16x32xf32> to vector<16xf32>
    %198 = vector.shape_cast %197 : vector<16xf32> to vector<16x1xf32>
    %cst_75 = arith.constant 3.200000e+01 : f32
    %199 = vector.broadcast %cst_75 : f32 to vector<16x1xf32>
    %200 = arith.divf %198, %199 : vector<16x1xf32>
    %201 = vector.broadcast %200 : vector<16x1xf32> to vector<16x32xf32>
    %202 = arith.subf %196, %201 : vector<16x32xf32>
    %203 = arith.mulf %202, %202 : vector<16x32xf32>
    %cst_76 = arith.constant dense<0.000000e+00> : vector<16xf32>
    %204 = vector.multi_reduction <add>, %203, %cst_76 [1] : vector<16x32xf32> to vector<16xf32>
    %205 = vector.shape_cast %204 : vector<16xf32> to vector<16x1xf32>
    %cst_77 = arith.constant 3.200000e+01 : f32
    %206 = vector.broadcast %cst_77 : f32 to vector<16x1xf32>
    %207 = arith.divf %205, %206 : vector<16x1xf32>
    %208 = vector.broadcast %200 : vector<16x1xf32> to vector<16x32xf32>
    %209 = arith.subf %196, %208 : vector<16x32xf32>
    %cst_78 = arith.constant 9.99999974E-6 : f32
    %210 = vector.broadcast %cst_78 : f32 to vector<16x1xf32>
    %211 = arith.addf %207, %210 : vector<16x1xf32>
    %212 = math.sqrt %211 : vector<16x1xf32>
    %213 = vector.broadcast %212 : vector<16x1xf32> to vector<16x32xf32>
    %214 = arith.divf %209, %213 : vector<16x32xf32>
    %215 = vector.broadcast %153 : vector<1x32xf32> to vector<16x32xf32>
    %216 = arith.mulf %214, %215 : vector<16x32xf32>
    %217 = vector.broadcast %154 : vector<1x32xf32> to vector<16x32xf32>
    %218 = arith.addf %216, %217 : vector<16x32xf32>
    %cst_79 = arith.constant dense<0.000000e+00> : vector<16x64xf32>
    %219 = tpu.matmul %218, %142, %cst_79 {dimension_numbers = #tpu.dot_dimension_numbers<[1], [0], [0], [1], [0, 0, 1, 1], [], []>} : vector<16x32xf32>, vector<32x64xf32>, vector<16x64xf32> -> vector<16x64xf32>
    %220 = vector.broadcast %147 : vector<1x64xf32> to vector<16x64xf32>
    %221 = arith.addf %219, %220 : vector<16x64xf32>
    %cst_80 = arith.constant 0.000000e+00 : f32
    %222 = vector.broadcast %cst_80 : f32 to vector<16x64xf32>
    %223 = arith.maximumf %221, %222 : vector<16x64xf32>
    %cst_81 = arith.constant dense<0.000000e+00> : vector<16x32xf32>
    %224 = tpu.matmul %223, %144, %cst_81 {dimension_numbers = #tpu.dot_dimension_numbers<[1], [0], [0], [1], [0, 0, 1, 1], [], []>} : vector<16x64xf32>, vector<64x32xf32>, vector<16x32xf32> -> vector<16x32xf32>
    %225 = vector.broadcast %152 : vector<1x32xf32> to vector<16x32xf32>
    %226 = arith.addf %224, %225 : vector<16x32xf32>
    %227 = arith.addf %226, %218 : vector<16x32xf32>
    %cst_82 = arith.constant dense<0.000000e+00> : vector<16xf32>
    %228 = vector.multi_reduction <add>, %227, %cst_82 [1] : vector<16x32xf32> to vector<16xf32>
    %229 = vector.shape_cast %228 : vector<16xf32> to vector<16x1xf32>
    %cst_83 = arith.constant 3.200000e+01 : f32
    %230 = vector.broadcast %cst_83 : f32 to vector<16x1xf32>
    %231 = arith.divf %229, %230 : vector<16x1xf32>
    %232 = vector.broadcast %231 : vector<16x1xf32> to vector<16x32xf32>
    %233 = arith.subf %227, %232 : vector<16x32xf32>
    %234 = arith.mulf %233, %233 : vector<16x32xf32>
    %cst_84 = arith.constant dense<0.000000e+00> : vector<16xf32>
    %235 = vector.multi_reduction <add>, %234, %cst_84 [1] : vector<16x32xf32> to vector<16xf32>
    %236 = vector.shape_cast %235 : vector<16xf32> to vector<16x1xf32>
    %cst_85 = arith.constant 3.200000e+01 : f32
    %237 = vector.broadcast %cst_85 : f32 to vector<16x1xf32>
    %238 = arith.divf %236, %237 : vector<16x1xf32>
    %239 = vector.broadcast %231 : vector<16x1xf32> to vector<16x32xf32>
    %240 = arith.subf %227, %239 : vector<16x32xf32>
    %cst_86 = arith.constant 9.99999974E-6 : f32
    %241 = vector.broadcast %cst_86 : f32 to vector<16x1xf32>
    %242 = arith.addf %238, %241 : vector<16x1xf32>
    %243 = math.sqrt %242 : vector<16x1xf32>
    %244 = vector.broadcast %243 : vector<16x1xf32> to vector<16x32xf32>
    %245 = arith.divf %240, %244 : vector<16x32xf32>
    %246 = vector.broadcast %155 : vector<1x32xf32> to vector<16x32xf32>
    %247 = arith.mulf %245, %246 : vector<16x32xf32>
    %248 = vector.broadcast %156 : vector<1x32xf32> to vector<16x32xf32>
    %249 = arith.addf %247, %248 : vector<16x32xf32>
    %c0_87 = arith.constant 0 : index
    %c0_88 = arith.constant 0 : index
    %250 = vector.load %arg7[%c0_87, %c0_88] : memref<16x32xf32, #tpu.memory_space<vmem>>, vector<16x32xf32>
    tpu.vector_store %arg7[%c0_87, %c0_88], %249 {strides = array<i32>} : memref<16x32xf32, #tpu.memory_space<vmem>>, vector<16x32xf32>,
    return
  }
}

</mosaic_0001>

<llo_original>
// kernel: transformer_encoder.1
$region0: #{transformer_encoder.1}
  #allocation0 [shape = 'u32[]', space=smem, size = 0x4, offset = 0x4, fixed_abs, tag = 'smem constant byte address 0x4 - core index']
  #allocation1 [shape = 'u32[144,128]{1,0:T(1,128)}', space=vmem, size = 0x12000, scoped, tag = 'internal scratch']
  %s0 = inlined_call_operand.vmem [shape: f32[16,32], index: 0, kind: input, shape index: {}]
  %s1 = inlined_call_operand.vmem [shape: f32[2,64,8], index: 1, kind: input, shape index: {}]
  %s2 = inlined_call_operand.vmem [shape: f32[6,32,32], index: 2, kind: input, shape index: {}]
  %s3 = inlined_call_operand.vmem [shape: f32[2,32,32], index: 3, kind: input, shape index: {}]
  %s4 = inlined_call_operand.vmem [shape: f32[2,32,64], index: 4, kind: input, shape index: {}]
  %s5 = inlined_call_operand.vmem [shape: f32[2,64,32], index: 5, kind: input, shape index: {}]
  %s6 = inlined_call_operand.vmem [shape: f32[2,10,64], index: 6, kind: input, shape index: {}]
  %s7 = inlined_call_operand.hbm [shape: f32[16,32], index: 7, kind: output, shape index: {}]
  %s8 = sld [smem:[#allocation0]]
  $region38: #{transformer_encoder.1} parent=0
    _
  %s10 = ssub.s32 1, %s8
  %s11 = scalar_select 0, %s10, %s8
  $region1: #{transformer_encoder.1} parent=0
    #allocation2 [shape = 'u8[8192]{0}', space=vmem, size = 0x2000, scoped, tag = 'output window, operand 0, single buffered']
    #allocation3 [shape = 's32[1]{0}', space=sflag, size = 0x4, scoped, tag = 'scoped memory for transformer_encoder.1']
    %12 = vsyncpa [#allocation3], 0
    // Predicated region
    $region2: #{transformer_encoder.1} parent=1 // pred_check
      _
    $region3: #{transformer_encoder.1} parent=1 // pred_check_branch
      %14 = sbr.rel (0) target = $region5
    $region4: #{transformer_encoder.1} parent=1 // pred_region
      _
    $region5: #{transformer_encoder.1} parent=1 // pred_fallthru
      _
    // Predicated region
    $region6: #{transformer_encoder.1} parent=1 // pred_check
      _
    $region7: #{transformer_encoder.1} parent=1 // pred_check_branch
      %16 = sbr.rel (0) target = $region9
    $region8: #{transformer_encoder.1} parent=1 // pred_region
      _
    $region9: #{transformer_encoder.1} parent=1 // pred_fallthru
      _
    // Predicated region
    $region10: #{transformer_encoder.1} parent=1 // pred_check
      _
    $region11: #{transformer_encoder.1} parent=1 // pred_check_branch
      %18 = sbr.rel (0) target = $region13
    $region12: #{transformer_encoder.1} parent=1 // pred_region
      _
    $region13: #{transformer_encoder.1} parent=1 // pred_fallthru
      _
    // Predicated region
    $region14: #{transformer_encoder.1} parent=1 // pred_check
      _
    $region15: #{transformer_encoder.1} parent=1 // pred_check_branch
      %20 = sbr.rel (0) target = $region17
    $region16: #{transformer_encoder.1} parent=1 // pred_region
      _
    $region17: #{transformer_encoder.1} parent=1 // pred_fallthru
      _
    // Predicated region
    $region18: #{transformer_encoder.1} parent=1 // pred_check
      _
    $region19: #{transformer_encoder.1} parent=1 // pred_check_branch
      %22 = sbr.rel (0) target = $region21
    $region20: #{transformer_encoder.1} parent=1 // pred_region
      _
    $region21: #{transformer_encoder.1} parent=1 // pred_fallthru
      _
    // Predicated region
    $region22: #{transformer_encoder.1} parent=1 // pred_check
      _
    $region23: #{transformer_encoder.1} parent=1 // pred_check_branch
      %24 = sbr.rel (0) target = $region25
    $region24: #{transformer_encoder.1} parent=1 // pred_region
      _
    $region25: #{transformer_encoder.1} parent=1 // pred_fallthru
      _
    // Predicated region
    $region26: #{transformer_encoder.1} parent=1 // pred_check
      _
    $region27: #{transformer_encoder.1} parent=1 // pred_check_branch
      %26 = sbr.rel (0) target = $region29
    $region28: #{transformer_encoder.1} parent=1 // pred_region
      _
    $region29: #{transformer_encoder.1} parent=1 // pred_fallthru
      _
    %v27 = vld [vmem:[%s0] sm:$0xff]
    %v28 = vld [vmem:[%s0 + $0x8] sm:$0xff]
    %v29 = vld [vmem:[%s1] sm:$0xff]
    %v30 = vld [vmem:[%s1 + $0x8] sm:$0xff]
    %v31 = vld [vmem:[%s1 + $0x10] sm:$0xff]
    %v32 = vld [vmem:[%s1 + $0x18] sm:$0xff]
    %v33 = vld [vmem:[%s1 + $0x20] sm:$0xff]
    %v34 = vld [vmem:[%s1 + $0x28] sm:$0xff]
    %v35 = vld [vmem:[%s1 + $0x30] sm:$0xff]
    %v36 = vld [vmem:[%s1 + $0x38] sm:$0xff]
    %v37 = vld [vmem:[%s1 + $0x40] sm:$0xff]
    %v38 = vld [vmem:[%s1 + $0x48] sm:$0xff]
    %v39 = vld [vmem:[%s1 + $0x50] sm:$0xff]
    %v40 = vld [vmem:[%s1 + $0x58] sm:$0xff]
    %v41 = vld [vmem:[%s1 + $0x60] sm:$0xff]
    %v42 = vld [vmem:[%s1 + $0x68] sm:$0xff]
    %v43 = vld [vmem:[%s1 + $0x70] sm:$0xff]
    %v44 = vld [vmem:[%s1 + $0x78] sm:$0xff]
    %v45 = vlaneseq
    %v46 = vand.u32 %v45, 127
    %v47 = vlaneseq
    %v48 = vshrl.u32 %v47, 7
    %v49 = vmul.u32 %v48, 4
    %vm50 = vcmp.ge.s32.totalorder %v46, %v49
    %v51 = vadd.s32 %v49, 4
    %vm52 = vcmp.lt.s32.totalorder %v46, %v51
    %vm53 = vmand %vm50, %vm52
    %v54 = vsel %vm53, 1, 0
    %v55 = vcvt.s32.f32 %v54
    %v57 = vcombine.high %v55, %v55
    %v59 = vunpack.c.l.s4 1966171168
    %v60 = vunpack.c.0.s8 %v59
    %v61 = vlaneseq
    %v62 = vshrl.u32 %v61, 7
    %v63 = vsub.s32 %v60, %v62
    %v64 = vrot.slane %v55, %v63
    %v66 = vunpack.c.l.s4 1966171168
    %v67 = vunpack.c.0.s8 %v66
    %v68 = vlaneseq
    %v69 = vshrl.u32 %v68, 7
    %v70 = vsub.s32 %v67, %v69
    %v71 = vrot.slane %v57, %v70
    %v72 = vcombine.high %v64, %v64
    %v73 = vcombine.high %v71, %v71
    %v75 = vunpack.c.l.s4 1966171168
    %v76 = vunpack.c.0.s8 %v75
    %v77 = vlaneseq
    %v78 = vshrl.u32 %v77, 7
    %v79 = vsub.s32 %v76, %v78
    %v80 = vrot.slane %v64, %v79
    %v82 = vunpack.c.l.s4 1966171168
    %v83 = vunpack.c.0.s8 %v82
    %v84 = vlaneseq
    %v85 = vshrl.u32 %v84, 7
    %v86 = vsub.s32 %v83, %v85
    %v87 = vrot.slane %v71, %v86
    %v89 = vunpack.c.l.s4 1966171168
    %v90 = vunpack.c.0.s8 %v89
    %v91 = vlaneseq
    %v92 = vshrl.u32 %v91, 7
    %v93 = vsub.s32 %v90, %v92
    %v94 = vrot.slane %v72, %v93
    %v96 = vunpack.c.l.s4 1966171168
    %v97 = vunpack.c.0.s8 %v96
    %v98 = vlaneseq
    %v99 = vshrl.u32 %v98, 7
    %v100 = vsub.s32 %v97, %v99
    %v101 = vrot.slane %v73, %v100
    %v102 = vcombine.high %v80, %v80
    %v103 = vcombine.high %v87, %v87
    %v104 = vcombine.high %v94, %v94
    %v105 = vcombine.high %v101, %v101
    %v106 = vlaneseq
    %v107 = vshrl.u32 %v106, 7
    %v108 = vsub.s32 0, %v107
    %v109 = vrot.slane %v80, %v108
    %v110 = vlaneseq
    %v111 = vshrl.u32 %v110, 7
    %v112 = vsub.s32 0, %v111
    %v113 = vrot.slane %v94, %v112
    %v114 = vlaneseq
    %v115 = vshrl.u32 %v114, 7
    %v116 = vsub.s32 0, %v115
    %v117 = vrot.slane %v102, %v116
    %v118 = vlaneseq
    %v119 = vshrl.u32 %v118, 7
    %v120 = vsub.s32 0, %v119
    %v121 = vrot.slane %v104, %v120
    %v122 = vlaneseq
    %v123 = vshrl.u32 %v122, 7
    %v124 = vsub.s32 0, %v123
    %v125 = vrot.slane %v87, %v124
    %v126 = vlaneseq
    %v127 = vshrl.u32 %v126, 7
    %v128 = vsub.s32 0, %v127
    %v129 = vrot.slane %v101, %v128
    %v130 = vlaneseq
    %v131 = vshrl.u32 %v130, 7
    %v132 = vsub.s32 0, %v131
    %v133 = vrot.slane %v103, %v132
    %v134 = vlaneseq
    %v135 = vshrl.u32 %v134, 7
    %v136 = vsub.s32 0, %v135
    %v137 = vrot.slane %v105, %v136
    %v146 = vld [vmem:[%s2] sm:$0xff]
    %v147 = vld [vmem:[%s2 + $0x8] sm:$0xff]
    %v148 = vld [vmem:[%s2 + $0x10] sm:$0xff]
    %v149 = vld [vmem:[%s2 + $0x18] sm:$0xff]
    %s150 = scalar_lea.vmem %s2, 32
    %v151 = vld [vmem:[%s150] sm:$0xff]
    %v152 = vld [vmem:[%s150 + $0x8] sm:$0xff]
    %v153 = vld [vmem:[%s150 + $0x10] sm:$0xff]
    %v154 = vld [vmem:[%s150 + $0x18] sm:$0xff]
    %s155 = scalar_lea.vmem %s2, 64
    %v156 = vld [vmem:[%s155] sm:$0xff]
    %v157 = vld [vmem:[%s155 + $0x8] sm:$0xff]
    %v158 = vld [vmem:[%s155 + $0x10] sm:$0xff]
    %v159 = vld [vmem:[%s155 + $0x18] sm:$0xff]
    %v160 = vld [vmem:[%s3] sm:$0xff]
    %v161 = vld [vmem:[%s3 + $0x8] sm:$0xff]
    %v162 = vld [vmem:[%s3 + $0x10] sm:$0xff]
    %v163 = vld [vmem:[%s3 + $0x18] sm:$0xff]
    %v164 = vld [vmem:[%s4] sm:$0xff]
    %v165 = vld [vmem:[%s4 + $0x8] sm:$0xff]
    %v166 = vld [vmem:[%s4 + $0x10] sm:$0xff]
    %v167 = vld [vmem:[%s4 + $0x18] sm:$0xff]
    %v168 = vld [vmem:[%s5] sm:$0xff]
    %v169 = vld [vmem:[%s5 + $0x8] sm:$0xff]
    %v170 = vld [vmem:[%s5 + $0x10] sm:$0xff]
    %v171 = vld [vmem:[%s5 + $0x18] sm:$0xff]
    %v172 = vld [vmem:[%s5 + $0x20] sm:$0xff]
    %v173 = vld [vmem:[%s5 + $0x28] sm:$0xff]
    %v174 = vld [vmem:[%s5 + $0x30] sm:$0xff]
    %v175 = vld [vmem:[%s5 + $0x38] sm:$0xff]
    %v176 = vld [vmem:[%s6] sm:$0xff]
    %v177 = vld [vmem:[%s6 + $0x8] sm:$0x3]
    %v178 = vlaneseq
    %v179 = vshrl.u32 %v178, 7
    %v180 = vsub.s32 1, %v179
    %v181 = vrot.slane %v176, %v180
    %vm182 = vcmask 261120
    %v184 = vsel %vm182, %v27, 0
    %v187 = vsel %vm182, %v28, 0
    %189 = vmatprep.subr.mxu0 0.0
    %190 = vmatpush1.msra.mxu0 %v146
    %191 = vmatprep.subr.mxu0 0.0
    %192 = vmatpush1.msra.mxu0 %v147
    %193 = vmatprep.subr.mxu0 0.0
    %194 = vmatpush1.msra.mxu0 %v148
    %195 = vmatprep.subr.mxu0 0.0
    %196 = vmatpush1.msra.mxu0 %v149
    %197 = vmatprep.subr.mxu0 0.0
    %198 = vmatpush1.msra.mxu0 0.0
    %199 = vmatprep.subr.mxu0 0.0
    %200 = vmatpush1.msra.mxu0 0.0
    %201 = vmatprep.subr.mxu0 0.0
    %202 = vmatpush1.msra.mxu0 0.0
    %203 = vmatprep.subr.mxu0 0.0
    %204 = vmatpush1.msra.mxu0 0.0
    %205 = vmatprep.subr.mxu0 0.0
    %206 = vmatpush1.msra.mxu0 0.0
    %207 = vmatprep.subr.mxu0 0.0
    %208 = vmatpush1.msra.mxu0 0.0
    %209 = vmatprep.subr.mxu0 0.0
    %210 = vmatpush1.msra.mxu0 0.0
    %211 = vmatprep.subr.mxu0 0.0
    %212 = vmatpush1.msra.mxu0 0.0
    %213 = vmatprep.subr.mxu0 0.0
    %214 = vmatpush1.msra.mxu0 0.0
    %215 = vmatprep.subr.mxu0 0.0
    %216 = vmatpush1.msra.mxu0 0.0
    %217 = vmatprep.subr.mxu0 0.0
    %218 = vmatpush1.msra.mxu0 0.0
    %219 = vmatprep.subr.mxu0 0.0
    %220 = vmatpush1.msra.mxu0 0.0
    %221 = vmatprep.subr.mxu0 0.0
    %222 = vmatpush1.msra.mxu0 0.0
    %223 = vmatprep.subr.mxu0 0.0
    %224 = vmatpush1.msra.mxu0 0.0
    %225 = vmatprep.subr.mxu0 0.0
    %226 = vmatpush1.msra.mxu0 0.0
    %227 = vmatprep.subr.mxu0 0.0
    %228 = vmatpush1.msra.mxu0 0.0
    %229 = vmatprep.subr.mxu0 0.0
    %230 = vmatpush1.msra.mxu0 0.0
    %231 = vmatprep.subr.mxu0 0.0
    %232 = vmatpush1.msra.mxu0 0.0
    %233 = vmatprep.subr.mxu0 0.0
    %234 = vmatpush1.msra.mxu0 0.0
    %235 = vmatprep.subr.mxu0 0.0
    %236 = vmatpush1.msra.mxu0 0.0
    %237 = vmatprep.subr.mxu0 0.0
    %238 = vmatpush1.msra.mxu0 0.0
    %239 = vmatprep.subr.mxu0 0.0
    %240 = vmatpush1.msra.mxu0 0.0
    %241 = vmatprep.subr.mxu0 0.0
    %242 = vmatpush1.msra.mxu0 0.0
    %243 = vmatprep.subr.mxu0 0.0
    %244 = vmatpush1.msra.mxu0 0.0
    %245 = vmatprep.subr.mxu0 0.0
    %246 = vmatpush1.msra.mxu0 0.0
    %247 = vmatprep.subr.mxu0 0.0
    %248 = vmatpush1.msra.mxu0 0.0
    %249 = vmatprep.subr.mxu0 0.0
    %250 = vmatpush1.msra.mxu0 0.0
    %251 = vmatprep.subr.mxu0 0.0
    %252 = vmatpush1.msra.mxu0 0.0
    %253 = vmatprep.mubr.f32.mxu0 0.0
    %254 = vmatmul.mubr.f32.gmra.mrb[0].mxu0 %v184
    %v255 = vpop.f32.mrb[0].mxu0
    %v256 = vadd.f32 %v181, %v255
    %v257 = vpop.f32.mrb[0].mxu0
    %258 = vmatprep.mubr.f32.mxu0 0.0
    %259 = vmatmul.mubr.f32.gmra.mrb[0].mxu0 %v187
    %v260 = vpop.f32.mrb[0].mxu0
    %v261 = vadd.f32 %v181, %v260
    %v262 = vpop.f32.mrb[0].mxu0
    %263 = vdwg.mxu0
    %v264 = vlaneseq
    %v265 = vshrl.u32 %v264, 7
    %v266 = vsub.s32 2, %v265
    %v267 = vrot.slane %v176, %v266
    %268 = vmatprep.subr.mxu0 0.0
    %269 = vmatpush1.msra.mxu0 %v151
    %270 = vmatprep.subr.mxu0 0.0
    %271 = vmatpush1.msra.mxu0 %v152
    %272 = vmatprep.subr.mxu0 0.0
    %273 = vmatpush1.msra.mxu0 %v153
    %274 = vmatprep.subr.mxu0 0.0
    %275 = vmatpush1.msra.mxu0 %v154
    %276 = vmatprep.subr.mxu0 0.0
    %277 = vmatpush1.msra.mxu0 0.0
    %278 = vmatprep.subr.mxu0 0.0
    %279 = vmatpush1.msra.mxu0 0.0
    %280 = vmatprep.subr.mxu0 0.0
    %281 = vmatpush1.msra.mxu0 0.0
    %282 = vmatprep.subr.mxu0 0.0
    %283 = vmatpush1.msra.mxu0 0.0
    %284 = vmatprep.subr.mxu0 0.0
    %285 = vmatpush1.msra.mxu0 0.0
    %286 = vmatprep.subr.mxu0 0.0
    %287 = vmatpush1.msra.mxu0 0.0
    %288 = vmatprep.subr.mxu0 0.0
    %289 = vmatpush1.msra.mxu0 0.0
    %290 = vmatprep.subr.mxu0 0.0
    %291 = vmatpush1.msra.mxu0 0.0
    %292 = vmatprep.subr.mxu0 0.0
    %293 = vmatpush1.msra.mxu0 0.0
    %294 = vmatprep.subr.mxu0 0.0
    %295 = vmatpush1.msra.mxu0 0.0
    %296 = vmatprep.subr.mxu0 0.0
    %297 = vmatpush1.msra.mxu0 0.0
    %298 = vmatprep.subr.mxu0 0.0
    %299 = vmatpush1.msra.mxu0 0.0
    %300 = vmatprep.subr.mxu0 0.0
    %301 = vmatpush1.msra.mxu0 0.0
    %302 = vmatprep.subr.mxu0 0.0
    %303 = vmatpush1.msra.mxu0 0.0
    %304 = vmatprep.subr.mxu0 0.0
    %305 = vmatpush1.msra.mxu0 0.0
    %306 = vmatprep.subr.mxu0 0.0
    %307 = vmatpush1.msra.mxu0 0.0
    %308 = vmatprep.subr.mxu0 0.0
    %309 = vmatpush1.msra.mxu0 0.0
    %310 = vmatprep.subr.mxu0 0.0
    %311 = vmatpush1.msra.mxu0 0.0
    %312 = vmatprep.subr.mxu0 0.0
    %313 = vmatpush1.msra.mxu0 0.0
    %314 = vmatprep.subr.mxu0 0.0
    %315 = vmatpush1.msra.mxu0 0.0
    %316 = vmatprep.subr.mxu0 0.0
    %317 = vmatpush1.msra.mxu0 0.0
    %318 = vmatprep.subr.mxu0 0.0
    %319 = vmatpush1.msra.mxu0 0.0
    %320 = vmatprep.subr.mxu0 0.0
    %321 = vmatpush1.msra.mxu0 0.0
    %322 = vmatprep.subr.mxu0 0.0
    %323 = vmatpush1.msra.mxu0 0.0
    %324 = vmatprep.subr.mxu0 0.0
    %325 = vmatpush1.msra.mxu0 0.0
    %326 = vmatprep.subr.mxu0 0.0
    %327 = vmatpush1.msra.mxu0 0.0
    %328 = vmatprep.subr.mxu0 0.0
    %329 = vmatpush1.msra.mxu0 0.0
    %330 = vmatprep.subr.mxu0 0.0
    %331 = vmatpush1.msra.mxu0 0.0
    %332 = vmatprep.mubr.f32.mxu0 0.0
    %333 = vmatmul.mubr.f32.gmra.mrb[0].mxu0 %v184
    %v334 = vpop.f32.mrb[0].mxu0
    %v335 = vadd.f32 %v267, %v334
    %v336 = vpop.f32.mrb[0].mxu0
    %337 = vmatprep.mubr.f32.mxu0 0.0
    %338 = vmatmul.mubr.f32.gmra.mrb[0].mxu0 %v187
    %v339 = vpop.f32.mrb[0].mxu0
    %v340 = vadd.f32 %v267, %v339
    %v341 = vpop.f32.mrb[0].mxu0
    %342 = vdwg.mxu0
    %v343 = vlaneseq
    %v344 = vshrl.u32 %v343, 7
    %v345 = vsub.s32 3, %v344
    %v346 = vrot.slane %v176, %v345
    %347 = vmatprep.subr.mxu0 0.0
    %348 = vmatpush1.msra.mxu0 %v156
    %349 = vmatprep.subr.mxu0 0.0
    %350 = vmatpush1.msra.mxu0 %v157
    %351 = vmatprep.subr.mxu0 0.0
    %352 = vmatpush1.msra.mxu0 %v158
    %353 = vmatprep.subr.mxu0 0.0
    %354 = vmatpush1.msra.mxu0 %v159
    %355 = vmatprep.subr.mxu0 0.0
    %356 = vmatpush1.msra.mxu0 0.0
    %357 = vmatprep.subr.mxu0 0.0
    %358 = vmatpush1.msra.mxu0 0.0
    %359 = vmatprep.subr.mxu0 0.0
    %360 = vmatpush1.msra.mxu0 0.0
    %361 = vmatprep.subr.mxu0 0.0
    %362 = vmatpush1.msra.mxu0 0.0
    %363 = vmatprep.subr.mxu0 0.0
    %364 = vmatpush1.msra.mxu0 0.0
    %365 = vmatprep.subr.mxu0 0.0
    %366 = vmatpush1.msra.mxu0 0.0
    %367 = vmatprep.subr.mxu0 0.0
    %368 = vmatpush1.msra.mxu0 0.0
    %369 = vmatprep.subr.mxu0 0.0
    %370 = vmatpush1.msra.mxu0 0.0
    %371 = vmatprep.subr.mxu0 0.0
    %372 = vmatpush1.msra.mxu0 0.0
    %373 = vmatprep.subr.mxu0 0.0
    %374 = vmatpush1.msra.mxu0 0.0
    %375 = vmatprep.subr.mxu0 0.0
    %376 = vmatpush1.msra.mxu0 0.0
    %377 = vmatprep.subr.mxu0 0.0
    %378 = vmatpush1.msra.mxu0 0.0
    %379 = vmatprep.subr.mxu0 0.0
    %380 = vmatpush1.msra.mxu0 0.0
    %381 = vmatprep.subr.mxu0 0.0
    %382 = vmatpush1.msra.mxu0 0.0
    %383 = vmatprep.subr.mxu0 0.0
    %384 = vmatpush1.msra.mxu0 0.0
    %385 = vmatprep.subr.mxu0 0.0
    %386 = vmatpush1.msra.mxu0 0.0
    %387 = vmatprep.subr.mxu0 0.0
    %388 = vmatpush1.msra.mxu0 0.0
    %389 = vmatprep.subr.mxu0 0.0
    %390 = vmatpush1.msra.mxu0 0.0
    %391 = vmatprep.subr.mxu0 0.0
    %392 = vmatpush1.msra.mxu0 0.0
    %393 = vmatprep.subr.mxu0 0.0
    %394 = vmatpush1.msra.mxu0 0.0
    %395 = vmatprep.subr.mxu0 0.0
    %396 = vmatpush1.msra.mxu0 0.0
    %397 = vmatprep.subr.mxu0 0.0
    %398 = vmatpush1.msra.mxu0 0.0
    %399 = vmatprep.subr.mxu0 0.0
    %400 = vmatpush1.msra.mxu0 0.0
    %401 = vmatprep.subr.mxu0 0.0
    %402 = vmatpush1.msra.mxu0 0.0
    %403 = vmatprep.subr.mxu0 0.0
    %404 = vmatpush1.msra.mxu0 0.0
    %405 = vmatprep.subr.mxu0 0.0
    %406 = vmatpush1.msra.mxu0 0.0
    %407 = vmatprep.subr.mxu0 0.0
    %408 = vmatpush1.msra.mxu0 0.0
    %409 = vmatprep.subr.mxu0 0.0
    %410 = vmatpush1.msra.mxu0 0.0
    %411 = vmatprep.mubr.f32.mxu0 0.0
    %412 = vmatmul.mubr.f32.gmra.mrb[0].mxu0 %v184
    %v413 = vpop.f32.mrb[0].mxu0
    %v414 = vadd.f32 %v346, %v413
    %v415 = vpop.f32.mrb[0].mxu0
    %416 = vmatprep.mubr.f32.mxu0 0.0
    %417 = vmatmul.mubr.f32.gmra.mrb[0].mxu0 %v187
    %v418 = vpop.f32.mrb[0].mxu0
    %v419 = vadd.f32 %v346, %v418
    %v420 = vpop.f32.mrb[0].mxu0
    %421 = vdwg.mxu0
    %v422 = vmul.f32 %v256, %v109
    %v423 = vmul.f32 %v256, %v113
    %v424 = vmul.f32 %v256, %v117
    %v425 = vmul.f32 %v256, %v121
    %v426 = vmul.f32 %v256, %v125
    %v427 = vmul.f32 %v256, %v129
    %v428 = vmul.f32 %v256, %v133
    %v429 = vmul.f32 %v256, %v137
    %v430 = vmul.f32 %v261, %v109
    %v431 = vmul.f32 %v261, %v113
    %v432 = vmul.f32 %v261, %v117
    %v433 = vmul.f32 %v261, %v121
    %v434 = vmul.f32 %v261, %v125
    %v435 = vmul.f32 %v261, %v129
    %v436 = vmul.f32 %v261, %v133
    %v437 = vmul.f32 %v261, %v137
    %v439 = vsel %vm182, %v422, 0
    %v442 = vsel %vm182, %v423, 0
    %v445 = vsel %vm182, %v424, 0
    %v448 = vsel %vm182, %v425, 0
    %v451 = vsel %vm182, %v426, 0
    %v454 = vsel %vm182, %v427, 0
    %v457 = vsel %vm182, %v428, 0
    %v460 = vsel %vm182, %v429, 0
    %v463 = vsel %vm182, %v335, 0
    %465 = vmatprep.subr.mxu0 0.0
    %466 = vmatpush1.xpose.msra.mxu0 %v463
    %467 = vmatprep.subr.mxu0 0.0
    %468 = vmatpush1.xpose.msra.mxu0 0.0
    %469 = vmatprep.subr.mxu0 0.0
    %470 = vmatpush1.xpose.msra.mxu0 0.0
    %471 = vmatprep.subr.mxu0 0.0
    %472 = vmatpush1.xpose.msra.mxu0 0.0
    %473 = vmatprep.subr.mxu0 0.0
    %474 = vmatpush1.xpose.msra.mxu0 0.0
    %475 = vmatprep.subr.mxu0 0.0
    %476 = vmatpush1.xpose.msra.mxu0 0.0
    %477 = vmatprep.subr.mxu0 0.0
    %478 = vmatpush1.xpose.msra.mxu0 0.0
    %479 = vmatprep.subr.mxu0 0.0
    %480 = vmatpush1.xpose.msra.mxu0 0.0
    %481 = vmatprep.subr.mxu0 0.0
    %482 = vmatpush1.xpose.msra.mxu0 0.0
    %483 = vmatprep.subr.mxu0 0.0
    %484 = vmatpush1.xpose.msra.mxu0 0.0
    %485 = vmatprep.subr.mxu0 0.0
    %486 = vmatpush1.xpose.msra.mxu0 0.0
    %487 = vmatprep.subr.mxu0 0.0
    %488 = vmatpush1.xpose.msra.mxu0 0.0
    %489 = vmatprep.subr.mxu0 0.0
    %490 = vmatpush1.xpose.msra.mxu0 0.0
    %491 = vmatprep.subr.mxu0 0.0
    %492 = vmatpush1.xpose.msra.mxu0 0.0
    %493 = vmatprep.subr.mxu0 0.0
    %494 = vmatpush1.xpose.msra.mxu0 0.0
    %495 = vmatprep.subr.mxu0 0.0
    %496 = vmatpush1.xpose.msra.mxu0 0.0
    %497 = vmatprep.subr.mxu0 0.0
    %498 = vmatpush1.xpose.msra.mxu0 0.0
    %499 = vmatprep.subr.mxu0 0.0
    %500 = vmatpush1.xpose.msra.mxu0 0.0
    %501 = vmatprep.subr.mxu0 0.0
    %502 = vmatpush1.xpose.msra.mxu0 0.0
    %503 = vmatprep.subr.mxu0 0.0
    %504 = vmatpush1.xpose.msra.mxu0 0.0
    %505 = vmatprep.subr.mxu0 0.0
    %506 = vmatpush1.xpose.msra.mxu0 0.0
    %507 = vmatprep.subr.mxu0 0.0
    %508 = vmatpush1.xpose.msra.mxu0 0.0
    %509 = vmatprep.subr.mxu0 0.0
    %510 = vmatpush1.xpose.msra.mxu0 0.0
    %511 = vmatprep.subr.mxu0 0.0
    %512 = vmatpush1.xpose.msra.mxu0 0.0
    %513 = vmatprep.subr.mxu0 0.0
    %514 = vmatpush1.xpose.msra.mxu0 0.0
    %515 = vmatprep.subr.mxu0 0.0
    %516 = vmatpush1.xpose.msra.mxu0 0.0
    %517 = vmatprep.subr.mxu0 0.0
    %518 = vmatpush1.xpose.msra.mxu0 0.0
    %519 = vmatprep.subr.mxu0 0.0
    %520 = vmatpush1.xpose.msra.mxu0 0.0
    %521 = vmatprep.subr.mxu0 0.0
    %522 = vmatpush1.xpose.msra.mxu0 0.0
    %523 = vmatprep.subr.mxu0 0.0
    %524 = vmatpush1.xpose.msra.mxu0 0.0
    %525 = vmatprep.subr.mxu0 0.0
    %526 = vmatpush1.xpose.msra.mxu0 0.0
    %527 = vmatprep.subr.mxu0 0.0
    %528 = vmatpush1.xpose.msra.mxu0 0.0
    %529 = vmatprep.mubr.f32.mxu0 0.0
    %530 = vmatmul.mubr.f32.gmra.mrb[0].mxu0 %v439
    %v531 = vpop.f32.mrb[0].mxu0
    %v532 = vadd.f32 0.0, %v531
    %v533 = vpop.f32.mrb[0].mxu0
    %534 = vmatprep.mubr.f32.mxu0 0.0
    %535 = vmatmul.mubr.f32.gmra.mrb[0].mxu0 %v442
    %v536 = vpop.f32.mrb[0].mxu0
    %v537 = vadd.f32 0.0, %v536
    %v538 = vpop.f32.mrb[0].mxu0
    %539 = vmatprep.mubr.f32.mxu0 0.0
    %540 = vmatmul.mubr.f32.gmra.mrb[0].mxu0 %v445
    %v541 = vpop.f32.mrb[0].mxu0
    %v542 = vadd.f32 0.0, %v541
    %v543 = vpop.f32.mrb[0].mxu0
    %544 = vmatprep.mubr.f32.mxu0 0.0
    %545 = vmatmul.mubr.f32.gmra.mrb[0].mxu0 %v448
    %v546 = vpop.f32.mrb[0].mxu0
    %v547 = vadd.f32 0.0, %v546
    %v548 = vpop.f32.mrb[0].mxu0
    %549 = vmatprep.mubr.f32.mxu0 0.0
    %550 = vmatmul.mubr.f32.gmra.mrb[0].mxu0 %v451
    %v551 = vpop.f32.mrb[0].mxu0
    %v552 = vadd.f32 0.0, %v551
    %v553 = vpop.f32.mrb[0].mxu0
    %554 = vmatprep.mubr.f32.mxu0 0.0
    %555 = vmatmul.mubr.f32.gmra.mrb[0].mxu0 %v454
    %v556 = vpop.f32.mrb[0].mxu0
    %v557 = vadd.f32 0.0, %v556
    %v558 = vpop.f32.mrb[0].mxu0
    %559 = vmatprep.mubr.f32.mxu0 0.0
    %560 = vmatmul.mubr.f32.gmra.mrb[0].mxu0 %v457
    %v561 = vpop.f32.mrb[0].mxu0
    %v562 = vadd.f32 0.0, %v561
    %v563 = vpop.f32.mrb[0].mxu0
    %564 = vmatprep.mubr.f32.mxu0 0.0
    %565 = vmatmul.mubr.f32.gmra.mrb[0].mxu0 %v460
    %v566 = vpop.f32.mrb[0].mxu0
    %v567 = vadd.f32 0.0, %v566
    %v568 = vpop.f32.mrb[0].mxu0
    %569 = vdwg.mxu0
    %v571 = vsel %vm182, %v430, 0
    %v574 = vsel %vm182, %v431, 0
    %v577 = vsel %vm182, %v432, 0
    %v580 = vsel %vm182, %v433, 0
    %v583 = vsel %vm182, %v434, 0
    %v586 = vsel %vm182, %v435, 0
    %v589 = vsel %vm182, %v436, 0
    %v592 = vsel %vm182, %v437, 0
    %v595 = vsel %vm182, %v340, 0
    %597 = vmatprep.subr.mxu0 0.0
    %598 = vmatpush1.xpose.msra.mxu0 %v595
    %599 = vmatprep.subr.mxu0 0.0
    %600 = vmatpush1.xpose.msra.mxu0 0.0
    %601 = vmatprep.subr.mxu0 0.0
    %602 = vmatpush1.xpose.msra.mxu0 0.0
    %603 = vmatprep.subr.mxu0 0.0
    %604 = vmatpush1.xpose.msra.mxu0 0.0
    %605 = vmatprep.subr.mxu0 0.0
    %606 = vmatpush1.xpose.msra.mxu0 0.0
    %607 = vmatprep.subr.mxu0 0.0
    %608 = vmatpush1.xpose.msra.mxu0 0.0
    %609 = vmatprep.subr.mxu0 0.0
    %610 = vmatpush1.xpose.msra.mxu0 0.0
    %611 = vmatprep.subr.mxu0 0.0
    %612 = vmatpush1.xpose.msra.mxu0 0.0
    %613 = vmatprep.subr.mxu0 0.0
    %614 = vmatpush1.xpose.msra.mxu0 0.0
    %615 = vmatprep.subr.mxu0 0.0
    %616 = vmatpush1.xpose.msra.mxu0 0.0
    %617 = vmatprep.subr.mxu0 0.0
    %618 = vmatpush1.xpose.msra.mxu0 0.0
    %619 = vmatprep.subr.mxu0 0.0
    %620 = vmatpush1.xpose.msra.mxu0 0.0
    %621 = vmatprep.subr.mxu0 0.0
    %622 = vmatpush1.xpose.msra.mxu0 0.0
    %623 = vmatprep.subr.mxu0 0.0
    %624 = vmatpush1.xpose.msra.mxu0 0.0
    %625 = vmatprep.subr.mxu0 0.0
    %626 = vmatpush1.xpose.msra.mxu0 0.0
    %627 = vmatprep.subr.mxu0 0.0
    %628 = vmatpush1.xpose.msra.mxu0 0.0
    %629 = vmatprep.subr.mxu0 0.0
    %630 = vmatpush1.xpose.msra.mxu0 0.0
    %631 = vmatprep.subr.mxu0 0.0
    %632 = vmatpush1.xpose.msra.mxu0 0.0
    %633 = vmatprep.subr.mxu0 0.0
    %634 = vmatpush1.xpose.msra.mxu0 0.0
    %635 = vmatprep.subr.mxu0 0.0
    %636 = vmatpush1.xpose.msra.mxu0 0.0
    %637 = vmatprep.subr.mxu0 0.0
    %638 = vmatpush1.xpose.msra.mxu0 0.0
    %639 = vmatprep.subr.mxu0 0.0
    %640 = vmatpush1.xpose.msra.mxu0 0.0
    %641 = vmatprep.subr.mxu0 0.0
    %642 = vmatpush1.xpose.msra.mxu0 0.0
    %643 = vmatprep.subr.mxu0 0.0
    %644 = vmatpush1.xpose.msra.mxu0 0.0
    %645 = vmatprep.subr.mxu0 0.0
    %646 = vmatpush1.xpose.msra.mxu0 0.0
    %647 = vmatprep.subr.mxu0 0.0
    %648 = vmatpush1.xpose.msra.mxu0 0.0
    %649 = vmatprep.subr.mxu0 0.0
    %650 = vmatpush1.xpose.msra.mxu0 0.0
    %651 = vmatprep.subr.mxu0 0.0
    %652 = vmatpush1.xpose.msra.mxu0 0.0
    %653 = vmatprep.subr.mxu0 0.0
    %654 = vmatpush1.xpose.msra.mxu0 0.0
    %655 = vmatprep.subr.mxu0 0.0
    %656 = vmatpush1.xpose.msra.mxu0 0.0
    %657 = vmatprep.subr.mxu0 0.0
    %658 = vmatpush1.xpose.msra.mxu0 0.0
    %659 = vmatprep.subr.mxu0 0.0
    %660 = vmatpush1.xpose.msra.mxu0 0.0
    %661 = vmatprep.mubr.f32.mxu0 0.0
    %662 = vmatmul.mubr.f32.gmra.mrb[0].mxu0 %v571
    %v663 = vpop.f32.mrb[0].mxu0
    %v664 = vadd.f32 0.0, %v663
    %v665 = vpop.f32.mrb[0].mxu0
    %666 = vmatprep.mubr.f32.mxu0 0.0
    %667 = vmatmul.mubr.f32.gmra.mrb[0].mxu0 %v574
    %v668 = vpop.f32.mrb[0].mxu0
    %v669 = vadd.f32 0.0, %v668
    %v670 = vpop.f32.mrb[0].mxu0
    %671 = vmatprep.mubr.f32.mxu0 0.0
    %672 = vmatmul.mubr.f32.gmra.mrb[0].mxu0 %v577
    %v673 = vpop.f32.mrb[0].mxu0
    %v674 = vadd.f32 0.0, %v673
    %v675 = vpop.f32.mrb[0].mxu0
    %676 = vmatprep.mubr.f32.mxu0 0.0
    %677 = vmatmul.mubr.f32.gmra.mrb[0].mxu0 %v580
    %v678 = vpop.f32.mrb[0].mxu0
    %v679 = vadd.f32 0.0, %v678
    %v680 = vpop.f32.mrb[0].mxu0
    %681 = vmatprep.mubr.f32.mxu0 0.0
    %682 = vmatmul.mubr.f32.gmra.mrb[0].mxu0 %v583
    %v683 = vpop.f32.mrb[0].mxu0
    %v684 = vadd.f32 0.0, %v683
    %v685 = vpop.f32.mrb[0].mxu0
    %686 = vmatprep.mubr.f32.mxu0 0.0
    %687 = vmatmul.mubr.f32.gmra.mrb[0].mxu0 %v586
    %v688 = vpop.f32.mrb[0].mxu0
    %v689 = vadd.f32 0.0, %v688
    %v690 = vpop.f32.mrb[0].mxu0
    %691 = vmatprep.mubr.f32.mxu0 0.0
    %692 = vmatmul.mubr.f32.gmra.mrb[0].mxu0 %v589
    %v693 = vpop.f32.mrb[0].mxu0
    %v694 = vadd.f32 0.0, %v693
    %v695 = vpop.f32.mrb[0].mxu0
    %696 = vmatprep.mubr.f32.mxu0 0.0
    %697 = vmatmul.mubr.f32.gmra.mrb[0].mxu0 %v592
    %v698 = vpop.f32.mrb[0].mxu0
    %v699 = vadd.f32 0.0, %v698
    %v700 = vpop.f32.mrb[0].mxu0
    %701 = vdwg.mxu0
    %v702 = vmul.f32 %v532, 0.5
    %v703 = vmul.f32 %v537, 0.5
    %v704 = vmul.f32 %v542, 0.5
    %v705 = vmul.f32 %v547, 0.5
    %v706 = vmul.f32 %v552, 0.5
    %v707 = vmul.f32 %v557, 0.5
    %v708 = vmul.f32 %v562, 0.5
    %v709 = vmul.f32 %v567, 0.5
    %v710 = vmul.f32 %v664, 0.5
    %v711 = vmul.f32 %v669, 0.5
    %v712 = vmul.f32 %v674, 0.5
    %v713 = vmul.f32 %v679, 0.5
    %v714 = vmul.f32 %v684, 0.5
    %v715 = vmul.f32 %v689, 0.5
    %v716 = vmul.f32 %v694, 0.5
    %v717 = vmul.f32 %v699, 0.5
    %v718 = vadd.f32 %v702, %v29
    %v719 = vadd.f32 %v703, %v30
    %v720 = vadd.f32 %v704, %v31
    %v721 = vadd.f32 %v705, %v32
    %v722 = vadd.f32 %v706, %v33
    %v723 = vadd.f32 %v707, %v34
    %v724 = vadd.f32 %v708, %v35
    %v725 = vadd.f32 %v709, %v36
    %v726 = vadd.f32 %v710, %v37
    %v727 = vadd.f32 %v711, %v38
    %v728 = vadd.f32 %v712, %v39
    %v729 = vadd.f32 %v713, %v40
    %v730 = vadd.f32 %v714, %v41
    %v731 = vadd.f32 %v715, %v42
    %v732 = vadd.f32 %v716, %v43
    %v733 = vadd.f32 %v717, %v44
    %vm734 = vcmask 64512
    %v735 = vsel %vm734, %v718, -inf
    %736 = vmax.xlane.f32.xlu0 %v735
    %v737 = vpop.xlane.xlu0 %736
    %v738 = vsel %vm734, %v719, -inf
    %739 = vmax.xlane.f32.xlu0 %v738
    %v740 = vpop.xlane.xlu0 %739
    %v741 = vsel %vm734, %v720, -inf
    %742 = vmax.xlane.f32.xlu0 %v741
    %v743 = vpop.xlane.xlu0 %742
    %v744 = vsel %vm734, %v721, -inf
    %745 = vmax.xlane.f32.xlu0 %v744
    %v746 = vpop.xlane.xlu0 %745
    %v747 = vsel %vm734, %v722, -inf
    %748 = vmax.xlane.f32.xlu0 %v747
    %v749 = vpop.xlane.xlu0 %748
    %v750 = vsel %vm734, %v723, -inf
    %751 = vmax.xlane.f32.xlu0 %v750
    %v752 = vpop.xlane.xlu0 %751
    %v753 = vsel %vm734, %v724, -inf
    %754 = vmax.xlane.f32.xlu0 %v753
    %v755 = vpop.xlane.xlu0 %754
    %v756 = vsel %vm734, %v725, -inf
    %757 = vmax.xlane.f32.xlu0 %v756
    %v758 = vpop.xlane.xlu0 %757
    %v759 = vsel %vm734, %v726, -inf
    %760 = vmax.xlane.f32.xlu0 %v759
    %v761 = vpop.xlane.xlu0 %760
    %v762 = vsel %vm734, %v727, -inf
    %763 = vmax.xlane.f32.xlu0 %v762
    %v764 = vpop.xlane.xlu0 %763
    %v765 = vsel %vm734, %v728, -inf
    %766 = vmax.xlane.f32.xlu0 %v765
    %v767 = vpop.xlane.xlu0 %766
    %v768 = vsel %vm734, %v729, -inf
    %769 = vmax.xlane.f32.xlu0 %v768
    %v770 = vpop.xlane.xlu0 %769
    %v771 = vsel %vm734, %v730, -inf
    %772 = vmax.xlane.f32.xlu0 %v771
    %v773 = vpop.xlane.xlu0 %772
    %v774 = vsel %vm734, %v731, -inf
    %775 = vmax.xlane.f32.xlu0 %v774
    %v776 = vpop.xlane.xlu0 %775
    %v777 = vsel %vm734, %v732, -inf
    %778 = vmax.xlane.f32.xlu0 %v777
    %v779 = vpop.xlane.xlu0 %778
    %v780 = vsel %vm734, %v733, -inf
    %781 = vmax.xlane.f32.xlu0 %v780
    %v782 = vpop.xlane.xlu0 %781
    %v783 = vsub.f32 %v718, %v737
    %v784 = vsub.f32 %v719, %v740
    %v785 = vsub.f32 %v720, %v743
    %v786 = vsub.f32 %v721, %v746
    %v787 = vsub.f32 %v722, %v749
    %v788 = vsub.f32 %v723, %v752
    %v789 = vsub.f32 %v724, %v755
    %v790 = vsub.f32 %v725, %v758
    %v791 = vsub.f32 %v726, %v761
    %v792 = vsub.f32 %v727, %v764
    %v793 = vsub.f32 %v728, %v767
    %v794 = vsub.f32 %v729, %v770
    %v795 = vsub.f32 %v730, %v773
    %v796 = vsub.f32 %v731, %v776
    %v797 = vsub.f32 %v732, %v779
    %v798 = vsub.f32 %v733, %v782
    %v799 = vmul.f32 %v783, 1.442695
    %v800 = vpow.pop %v799
    %v801 = vmul.f32 %v784, 1.442695
    %v802 = vpow.pop %v801
    %v803 = vmul.f32 %v785, 1.442695
    %v804 = vpow.pop %v803
    %v805 = vmul.f32 %v786, 1.442695
    %v806 = vpow.pop %v805
    %v807 = vmul.f32 %v787, 1.442695
    %v808 = vpow.pop %v807
    %v809 = vmul.f32 %v788, 1.442695
    %v810 = vpow.pop %v809
    %v811 = vmul.f32 %v789, 1.442695
    %v812 = vpow.pop %v811
    %v813 = vmul.f32 %v790, 1.442695
    %v814 = vpow.pop %v813
    %v815 = vmul.f32 %v791, 1.442695
    %v816 = vpow.pop %v815
    %v817 = vmul.f32 %v792, 1.442695
    %v818 = vpow.pop %v817
    %v819 = vmul.f32 %v793, 1.442695
    %v820 = vpow.pop %v819
    %v821 = vmul.f32 %v794, 1.442695
    %v822 = vpow.pop %v821
    %v823 = vmul.f32 %v795, 1.442695
    %v824 = vpow.pop %v823
    %v825 = vmul.f32 %v796, 1.442695
    %v826 = vpow.pop %v825
    %v827 = vmul.f32 %v797, 1.442695
    %v828 = vpow.pop %v827
    %v829 = vmul.f32 %v798, 1.442695
    %v830 = vpow.pop %v829
    %v831 = vsel %vm734, %v800, 0.0
    %832 = vadd.xlane.f32.xlu0 %v831
    %v833 = vpop.xlane.xlu0 %832
    %v834 = vsel %vm734, %v802, 0.0
    %835 = vadd.xlane.f32.xlu0 %v834
    %v836 = vpop.xlane.xlu0 %835
    %v837 = vsel %vm734, %v804, 0.0
    %838 = vadd.xlane.f32.xlu0 %v837
    %v839 = vpop.xlane.xlu0 %838
    %v840 = vsel %vm734, %v806, 0.0
    %841 = vadd.xlane.f32.xlu0 %v840
    %v842 = vpop.xlane.xlu0 %841
    %v843 = vsel %vm734, %v808, 0.0
    %844 = vadd.xlane.f32.xlu0 %v843
    %v845 = vpop.xlane.xlu0 %844
    %v846 = vsel %vm734, %v810, 0.0
    %847 = vadd.xlane.f32.xlu0 %v846
    %v848 = vpop.xlane.xlu0 %847
    %v849 = vsel %vm734, %v812, 0.0
    %850 = vadd.xlane.f32.xlu0 %v849
    %v851 = vpop.xlane.xlu0 %850
    %v852 = vsel %vm734, %v814, 0.0
    %853 = vadd.xlane.f32.xlu0 %v852
    %v854 = vpop.xlane.xlu0 %853
    %v855 = vsel %vm734, %v816, 0.0
    %856 = vadd.xlane.f32.xlu0 %v855
    %v857 = vpop.xlane.xlu0 %856
    %v858 = vsel %vm734, %v818, 0.0
    %859 = vadd.xlane.f32.xlu0 %v858
    %v860 = vpop.xlane.xlu0 %859
    %v861 = vsel %vm734, %v820, 0.0
    %862 = vadd.xlane.f32.xlu0 %v861
    %v863 = vpop.xlane.xlu0 %862
    %v864 = vsel %vm734, %v822, 0.0
    %865 = vadd.xlane.f32.xlu0 %v864
    %v866 = vpop.xlane.xlu0 %865
    %v867 = vsel %vm734, %v824, 0.0
    %868 = vadd.xlane.f32.xlu0 %v867
    %v869 = vpop.xlane.xlu0 %868
    %v870 = vsel %vm734, %v826, 0.0
    %871 = vadd.xlane.f32.xlu0 %v870
    %v872 = vpop.xlane.xlu0 %871
    %v873 = vsel %vm734, %v828, 0.0
    %874 = vadd.xlane.f32.xlu0 %v873
    %v875 = vpop.xlane.xlu0 %874
    %v876 = vsel %vm734, %v830, 0.0
    %877 = vadd.xlane.f32.xlu0 %v876
    %v878 = vpop.xlane.xlu0 %877
    %v879 = vrcp.pop %v833
    %v880 = vrcp.pop %v836
    %v881 = vrcp.pop %v839
    %v882 = vrcp.pop %v842
    %v883 = vrcp.pop %v845
    %v884 = vrcp.pop %v848
    %v885 = vrcp.pop %v851
    %v886 = vrcp.pop %v854
    %v887 = vrcp.pop %v857
    %v888 = vrcp.pop %v860
    %v889 = vrcp.pop %v863
    %v890 = vrcp.pop %v866
    %v891 = vrcp.pop %v869
    %v892 = vrcp.pop %v872
    %v893 = vrcp.pop %v875
    %v894 = vrcp.pop %v878
    %v895 = vmul.f32 %v800, %v879
    %v896 = vmul.f32 %v802, %v880
    %v897 = vmul.f32 %v804, %v881
    %v898 = vmul.f32 %v806, %v882
    %v899 = vmul.f32 %v808, %v883
    %v900 = vmul.f32 %v810, %v884
    %v901 = vmul.f32 %v812, %v885
    %v902 = vmul.f32 %v814, %v886
    %v903 = vmul.f32 %v816, %v887
    %v904 = vmul.f32 %v818, %v888
    %v905 = vmul.f32 %v820, %v889
    %v906 = vmul.f32 %v822, %v890
    %v907 = vmul.f32 %v824, %v891
    %v908 = vmul.f32 %v826, %v892
    %v909 = vmul.f32 %v828, %v893
    %v910 = vmul.f32 %v830, %v894
    %v912 = vsel %vm734, %v895, 0
    %v915 = vsel %vm734, %v896, 0
    %v918 = vsel %vm734, %v897, 0
    %v921 = vsel %vm734, %v898, 0
    %v924 = vsel %vm734, %v899, 0
    %v927 = vsel %vm734, %v900, 0
    %v930 = vsel %vm734, %v901, 0
    %v933 = vsel %vm734, %v902, 0
    %935 = vmatprep.subr.mxu0 0.0
    %936 = vmatpush1.msra.mxu0 %v414
    %937 = vmatprep.subr.mxu0 0.0
    %938 = vmatpush1.msra.mxu0 0.0
    %939 = vmatprep.subr.mxu0 0.0
    %940 = vmatpush1.msra.mxu0 0.0
    %941 = vmatprep.subr.mxu0 0.0
    %942 = vmatpush1.msra.mxu0 0.0
    %943 = vmatprep.subr.mxu0 0.0
    %944 = vmatpush1.msra.mxu0 0.0
    %945 = vmatprep.subr.mxu0 0.0
    %946 = vmatpush1.msra.mxu0 0.0
    %947 = vmatprep.subr.mxu0 0.0
    %948 = vmatpush1.msra.mxu0 0.0
    %949 = vmatprep.subr.mxu0 0.0
    %950 = vmatpush1.msra.mxu0 0.0
    %951 = vmatprep.subr.mxu0 0.0
    %952 = vmatpush1.msra.mxu0 0.0
    %953 = vmatprep.subr.mxu0 0.0
    %954 = vmatpush1.msra.mxu0 0.0
    %955 = vmatprep.subr.mxu0 0.0
    %956 = vmatpush1.msra.mxu0 0.0
    %957 = vmatprep.subr.mxu0 0.0
    %958 = vmatpush1.msra.mxu0 0.0
    %959 = vmatprep.subr.mxu0 0.0
    %960 = vmatpush1.msra.mxu0 0.0
    %961 = vmatprep.subr.mxu0 0.0
    %962 = vmatpush1.msra.mxu0 0.0
    %963 = vmatprep.subr.mxu0 0.0
    %964 = vmatpush1.msra.mxu0 0.0
    %965 = vmatprep.subr.mxu0 0.0
    %966 = vmatpush1.msra.mxu0 0.0
    %967 = vmatprep.subr.mxu0 0.0
    %968 = vmatpush1.msra.mxu0 0.0
    %969 = vmatprep.subr.mxu0 0.0
    %970 = vmatpush1.msra.mxu0 0.0
    %971 = vmatprep.subr.mxu0 0.0
    %972 = vmatpush1.msra.mxu0 0.0
    %973 = vmatprep.subr.mxu0 0.0
    %974 = vmatpush1.msra.mxu0 0.0
    %975 = vmatprep.subr.mxu0 0.0
    %976 = vmatpush1.msra.mxu0 0.0
    %977 = vmatprep.subr.mxu0 0.0
    %978 = vmatpush1.msra.mxu0 0.0
    %979 = vmatprep.subr.mxu0 0.0
    %980 = vmatpush1.msra.mxu0 0.0
    %981 = vmatprep.subr.mxu0 0.0
    %982 = vmatpush1.msra.mxu0 0.0
    %983 = vmatprep.subr.mxu0 0.0
    %984 = vmatpush1.msra.mxu0 0.0
    %985 = vmatprep.subr.mxu0 0.0
    %986 = vmatpush1.msra.mxu0 0.0
    %987 = vmatprep.subr.mxu0 0.0
    %988 = vmatpush1.msra.mxu0 0.0
    %989 = vmatprep.subr.mxu0 0.0
    %990 = vmatpush1.msra.mxu0 0.0
    %991 = vmatprep.subr.mxu0 0.0
    %992 = vmatpush1.msra.mxu0 0.0
    %993 = vmatprep.subr.mxu0 0.0
    %994 = vmatpush1.msra.mxu0 0.0
    %995 = vmatprep.subr.mxu0 0.0
    %996 = vmatpush1.msra.mxu0 0.0
    %997 = vmatprep.subr.mxu0 0.0
    %998 = vmatpush1.msra.mxu0 0.0
    %999 = vmatprep.mubr.f32.mxu0 0.0
    %1000 = vmatmul.mubr.f32.gmra.mrb[0].mxu0 %v912
    %v1001 = vpop.f32.mrb[0].mxu0
    %v1002 = vadd.f32 0.0, %v1001
    %v1003 = vpop.f32.mrb[0].mxu0
    %1004 = vmatprep.mubr.f32.mxu0 0.0
    %1005 = vmatmul.mubr.f32.gmra.mrb[0].mxu0 %v915
    %v1006 = vpop.f32.mrb[0].mxu0
    %v1007 = vadd.f32 0.0, %v1006
    %v1008 = vpop.f32.mrb[0].mxu0
    %1009 = vmatprep.mubr.f32.mxu0 0.0
    %1010 = vmatmul.mubr.f32.gmra.mrb[0].mxu0 %v918
    %v1011 = vpop.f32.mrb[0].mxu0
    %v1012 = vadd.f32 0.0, %v1011
    %v1013 = vpop.f32.mrb[0].mxu0
    %1014 = vmatprep.mubr.f32.mxu0 0.0
    %1015 = vmatmul.mubr.f32.gmra.mrb[0].mxu0 %v921
    %v1016 = vpop.f32.mrb[0].mxu0
    %v1017 = vadd.f32 0.0, %v1016
    %v1018 = vpop.f32.mrb[0].mxu0
    %1019 = vmatprep.mubr.f32.mxu0 0.0
    %1020 = vmatmul.mubr.f32.gmra.mrb[0].mxu0 %v924
    %v1021 = vpop.f32.mrb[0].mxu0
    %v1022 = vadd.f32 0.0, %v1021
    %v1023 = vpop.f32.mrb[0].mxu0
    %1024 = vmatprep.mubr.f32.mxu0 0.0
    %1025 = vmatmul.mubr.f32.gmra.mrb[0].mxu0 %v927
    %v1026 = vpop.f32.mrb[0].mxu0
    %v1027 = vadd.f32 0.0, %v1026
    %v1028 = vpop.f32.mrb[0].mxu0
    %1029 = vmatprep.mubr.f32.mxu0 0.0
    %1030 = vmatmul.mubr.f32.gmra.mrb[0].mxu0 %v930
    %v1031 = vpop.f32.mrb[0].mxu0
    %v1032 = vadd.f32 0.0, %v1031
    %v1033 = vpop.f32.mrb[0].mxu0
    %1034 = vmatprep.mubr.f32.mxu0 0.0
    %1035 = vmatmul.mubr.f32.gmra.mrb[0].mxu0 %v933
    %v1036 = vpop.f32.mrb[0].mxu0
    %v1037 = vadd.f32 0.0, %v1036
    %v1038 = vpop.f32.mrb[0].mxu0
    %1039 = vdwg.mxu0
    %v1041 = vsel %vm734, %v903, 0
    %v1044 = vsel %vm734, %v904, 0
    %v1047 = vsel %vm734, %v905, 0
    %v1050 = vsel %vm734, %v906, 0
    %v1053 = vsel %vm734, %v907, 0
    %v1056 = vsel %vm734, %v908, 0
    %v1059 = vsel %vm734, %v909, 0
    %v1062 = vsel %vm734, %v910, 0
    %1064 = vmatprep.subr.mxu0 0.0
    %1065 = vmatpush1.msra.mxu0 %v419
    %1066 = vmatprep.subr.mxu0 0.0
    %1067 = vmatpush1.msra.mxu0 0.0
    %1068 = vmatprep.subr.mxu0 0.0
    %1069 = vmatpush1.msra.mxu0 0.0
    %1070 = vmatprep.subr.mxu0 0.0
    %1071 = vmatpush1.msra.mxu0 0.0
    %1072 = vmatprep.subr.mxu0 0.0
    %1073 = vmatpush1.msra.mxu0 0.0
    %1074 = vmatprep.subr.mxu0 0.0
    %1075 = vmatpush1.msra.mxu0 0.0
    %1076 = vmatprep.subr.mxu0 0.0
    %1077 = vmatpush1.msra.mxu0 0.0
    %1078 = vmatprep.subr.mxu0 0.0
    %1079 = vmatpush1.msra.mxu0 0.0
    %1080 = vmatprep.subr.mxu0 0.0
    %1081 = vmatpush1.msra.mxu0 0.0
    %1082 = vmatprep.subr.mxu0 0.0
    %1083 = vmatpush1.msra.mxu0 0.0
    %1084 = vmatprep.subr.mxu0 0.0
    %1085 = vmatpush1.msra.mxu0 0.0
    %1086 = vmatprep.subr.mxu0 0.0
    %1087 = vmatpush1.msra.mxu0 0.0
    %1088 = vmatprep.subr.mxu0 0.0
    %1089 = vmatpush1.msra.mxu0 0.0
    %1090 = vmatprep.subr.mxu0 0.0
    %1091 = vmatpush1.msra.mxu0 0.0
    %1092 = vmatprep.subr.mxu0 0.0
    %1093 = vmatpush1.msra.mxu0 0.0
    %1094 = vmatprep.subr.mxu0 0.0
    %1095 = vmatpush1.msra.mxu0 0.0
    %1096 = vmatprep.subr.mxu0 0.0
    %1097 = vmatpush1.msra.mxu0 0.0
    %1098 = vmatprep.subr.mxu0 0.0
    %1099 = vmatpush1.msra.mxu0 0.0
    %1100 = vmatprep.subr.mxu0 0.0
    %1101 = vmatpush1.msra.mxu0 0.0
    %1102 = vmatprep.subr.mxu0 0.0
    %1103 = vmatpush1.msra.mxu0 0.0
    %1104 = vmatprep.subr.mxu0 0.0
    %1105 = vmatpush1.msra.mxu0 0.0
    %1106 = vmatprep.subr.mxu0 0.0
    %1107 = vmatpush1.msra.mxu0 0.0
    %1108 = vmatprep.subr.mxu0 0.0
    %1109 = vmatpush1.msra.mxu0 0.0
    %1110 = vmatprep.subr.mxu0 0.0
    %1111 = vmatpush1.msra.mxu0 0.0
    %1112 = vmatprep.subr.mxu0 0.0
    %1113 = vmatpush1.msra.mxu0 0.0
    %1114 = vmatprep.subr.mxu0 0.0
    %1115 = vmatpush1.msra.mxu0 0.0
    %1116 = vmatprep.subr.mxu0 0.0
    %1117 = vmatpush1.msra.mxu0 0.0
    %1118 = vmatprep.subr.mxu0 0.0
    %1119 = vmatpush1.msra.mxu0 0.0
    %1120 = vmatprep.subr.mxu0 0.0
    %1121 = vmatpush1.msra.mxu0 0.0
    %1122 = vmatprep.subr.mxu0 0.0
    %1123 = vmatpush1.msra.mxu0 0.0
    %1124 = vmatprep.subr.mxu0 0.0
    %1125 = vmatpush1.msra.mxu0 0.0
    %1126 = vmatprep.subr.mxu0 0.0
    %1127 = vmatpush1.msra.mxu0 0.0
    %1128 = vmatprep.mubr.f32.mxu0 0.0
    %1129 = vmatmul.mubr.f32.gmra.mrb[0].mxu0 %v1041
    %v1130 = vpop.f32.mrb[0].mxu0
    %v1131 = vadd.f32 0.0, %v1130
    %v1132 = vpop.f32.mrb[0].mxu0
    %1133 = vmatprep.mubr.f32.mxu0 0.0
    %1134 = vmatmul.mubr.f32.gmra.mrb[0].mxu0 %v1044
    %v1135 = vpop.f32.mrb[0].mxu0
    %v1136 = vadd.f32 0.0, %v1135
    %v1137 = vpop.f32.mrb[0].mxu0
    %1138 = vmatprep.mubr.f32.mxu0 0.0
    %1139 = vmatmul.mubr.f32.gmra.mrb[0].mxu0 %v1047
    %v1140 = vpop.f32.mrb[0].mxu0
    %v1141 = vadd.f32 0.0, %v1140
    %v1142 = vpop.f32.mrb[0].mxu0
    %1143 = vmatprep.mubr.f32.mxu0 0.0
    %1144 = vmatmul.mubr.f32.gmra.mrb[0].mxu0 %v1050
    %v1145 = vpop.f32.mrb[0].mxu0
    %v1146 = vadd.f32 0.0, %v1145
    %v1147 = vpop.f32.mrb[0].mxu0
    %1148 = vmatprep.mubr.f32.mxu0 0.0
    %1149 = vmatmul.mubr.f32.gmra.mrb[0].mxu0 %v1053
    %v1150 = vpop.f32.mrb[0].mxu0
    %v1151 = vadd.f32 0.0, %v1150
    %v1152 = vpop.f32.mrb[0].mxu0
    %1153 = vmatprep.mubr.f32.mxu0 0.0
    %1154 = vmatmul.mubr.f32.gmra.mrb[0].mxu0 %v1056
    %v1155 = vpop.f32.mrb[0].mxu0
    %v1156 = vadd.f32 0.0, %v1155
    %v1157 = vpop.f32.mrb[0].mxu0
    %1158 = vmatprep.mubr.f32.mxu0 0.0
    %1159 = vmatmul.mubr.f32.gmra.mrb[0].mxu0 %v1059
    %v1160 = vpop.f32.mrb[0].mxu0
    %v1161 = vadd.f32 0.0, %v1160
    %v1162 = vpop.f32.mrb[0].mxu0
    %1163 = vmatprep.mubr.f32.mxu0 0.0
    %1164 = vmatmul.mubr.f32.gmra.mrb[0].mxu0 %v1062
    %v1165 = vpop.f32.mrb[0].mxu0
    %v1166 = vadd.f32 0.0, %v1165
    %v1167 = vpop.f32.mrb[0].mxu0
    %1168 = vdwg.mxu0
    %v1169 = vmul.f32 %v1002, %v109
    %v1170 = vmul.f32 %v1007, %v113
    %v1171 = vmul.f32 %v1012, %v117
    %v1172 = vmul.f32 %v1017, %v121
    %v1173 = vmul.f32 %v1022, %v125
    %v1174 = vmul.f32 %v1027, %v129
    %v1175 = vmul.f32 %v1032, %v133
    %v1176 = vmul.f32 %v1037, %v137
    %v1177 = vmul.f32 %v1131, %v109
    %v1178 = vmul.f32 %v1136, %v113
    %v1179 = vmul.f32 %v1141, %v117
    %v1180 = vmul.f32 %v1146, %v121
    %v1181 = vmul.f32 %v1151, %v125
    %v1182 = vmul.f32 %v1156, %v129
    %v1183 = vmul.f32 %v1161, %v133
    %v1184 = vmul.f32 %v1166, %v137
    %v1185 = vsel %vm182, %v1169, 0.0
    %v1186 = vsel %vm182, %v1170, 0.0
    %v1187 = vadd.f32 %v1185, %v1186
    %v1188 = vsel %vm182, %v1171, 0.0
    %v1189 = vadd.f32 %v1187, %v1188
    %v1190 = vsel %vm182, %v1172, 0.0
    %v1191 = vadd.f32 %v1189, %v1190
    %v1192 = vsel %vm182, %v1173, 0.0
    %v1193 = vadd.f32 %v1191, %v1192
    %v1194 = vsel %vm182, %v1174, 0.0
    %v1195 = vadd.f32 %v1193, %v1194
    %v1196 = vsel %vm182, %v1175, 0.0
    %v1197 = vadd.f32 %v1195, %v1196
    %v1198 = vsel %vm182, %v1176, 0.0
    %v1199 = vadd.f32 %v1197, %v1198
    %v1200 = vsel %vm182, %v1177, 0.0
    %v1201 = vsel %vm182, %v1178, 0.0
    %v1202 = vadd.f32 %v1200, %v1201
    %v1203 = vsel %vm182, %v1179, 0.0
    %v1204 = vadd.f32 %v1202, %v1203
    %v1205 = vsel %vm182, %v1180, 0.0
    %v1206 = vadd.f32 %v1204, %v1205
    %v1207 = vsel %vm182, %v1181, 0.0
    %v1208 = vadd.f32 %v1206, %v1207
    %v1209 = vsel %vm182, %v1182, 0.0
    %v1210 = vadd.f32 %v1208, %v1209
    %v1211 = vsel %vm182, %v1183, 0.0
    %v1212 = vadd.f32 %v1210, %v1211
    %v1213 = vsel %vm182, %v1184, 0.0
    %v1214 = vadd.f32 %v1212, %v1213
    %v1215 = vlaneseq
    %v1216 = vshrl.u32 %v1215, 7
    %v1217 = vsub.s32 4, %v1216
    %v1218 = vrot.slane %v176, %v1217
    %v1220 = vsel %vm182, %v1199, 0
    %v1223 = vsel %vm182, %v1214, 0
    %1225 = vmatprep.subr.mxu0 0.0
    %1226 = vmatpush1.msra.mxu0 %v160
    %1227 = vmatprep.subr.mxu0 0.0
    %1228 = vmatpush1.msra.mxu0 %v161
    %1229 = vmatprep.subr.mxu0 0.0
    %1230 = vmatpush1.msra.mxu0 %v162
    %1231 = vmatprep.subr.mxu0 0.0
    %1232 = vmatpush1.msra.mxu0 %v163
    %1233 = vmatprep.subr.mxu0 0.0
    %1234 = vmatpush1.msra.mxu0 0.0
    %1235 = vmatprep.subr.mxu0 0.0
    %1236 = vmatpush1.msra.mxu0 0.0
    %1237 = vmatprep.subr.mxu0 0.0
    %1238 = vmatpush1.msra.mxu0 0.0
    %1239 = vmatprep.subr.mxu0 0.0
    %1240 = vmatpush1.msra.mxu0 0.0
    %1241 = vmatprep.subr.mxu0 0.0
    %1242 = vmatpush1.msra.mxu0 0.0
    %1243 = vmatprep.subr.mxu0 0.0
    %1244 = vmatpush1.msra.mxu0 0.0
    %1245 = vmatprep.subr.mxu0 0.0
    %1246 = vmatpush1.msra.mxu0 0.0
    %1247 = vmatprep.subr.mxu0 0.0
    %1248 = vmatpush1.msra.mxu0 0.0
    %1249 = vmatprep.subr.mxu0 0.0
    %1250 = vmatpush1.msra.mxu0 0.0
    %1251 = vmatprep.subr.mxu0 0.0
    %1252 = vmatpush1.msra.mxu0 0.0
    %1253 = vmatprep.subr.mxu0 0.0
    %1254 = vmatpush1.msra.mxu0 0.0
    %1255 = vmatprep.subr.mxu0 0.0
    %1256 = vmatpush1.msra.mxu0 0.0
    %1257 = vmatprep.subr.mxu0 0.0
    %1258 = vmatpush1.msra.mxu0 0.0
    %1259 = vmatprep.subr.mxu0 0.0
    %1260 = vmatpush1.msra.mxu0 0.0
    %1261 = vmatprep.subr.mxu0 0.0
    %1262 = vmatpush1.msra.mxu0 0.0
    %1263 = vmatprep.subr.mxu0 0.0
    %1264 = vmatpush1.msra.mxu0 0.0
    %1265 = vmatprep.subr.mxu0 0.0
    %1266 = vmatpush1.msra.mxu0 0.0
    %1267 = vmatprep.subr.mxu0 0.0
    %1268 = vmatpush1.msra.mxu0 0.0
    %1269 = vmatprep.subr.mxu0 0.0
    %1270 = vmatpush1.msra.mxu0 0.0
    %1271 = vmatprep.subr.mxu0 0.0
    %1272 = vmatpush1.msra.mxu0 0.0
    %1273 = vmatprep.subr.mxu0 0.0
    %1274 = vmatpush1.msra.mxu0 0.0
    %1275 = vmatprep.subr.mxu0 0.0
    %1276 = vmatpush1.msra.mxu0 0.0
    %1277 = vmatprep.subr.mxu0 0.0
    %1278 = vmatpush1.msra.mxu0 0.0
    %1279 = vmatprep.subr.mxu0 0.0
    %1280 = vmatpush1.msra.mxu0 0.0
    %1281 = vmatprep.subr.mxu0 0.0
    %1282 = vmatpush1.msra.mxu0 0.0
    %1283 = vmatprep.subr.mxu0 0.0
    %1284 = vmatpush1.msra.mxu0 0.0
    %1285 = vmatprep.subr.mxu0 0.0
    %1286 = vmatpush1.msra.mxu0 0.0
    %1287 = vmatprep.subr.mxu0 0.0
    %1288 = vmatpush1.msra.mxu0 0.0
    %1289 = vmatprep.mubr.f32.mxu0 0.0
    %1290 = vmatmul.mubr.f32.gmra.mrb[0].mxu0 %v1220
    %v1291 = vpop.f32.mrb[0].mxu0
    %v1292 = vadd.f32 %v1218, %v1291
    %v1293 = vpop.f32.mrb[0].mxu0
    %1294 = vmatprep.mubr.f32.mxu0 0.0
    %1295 = vmatmul.mubr.f32.gmra.mrb[0].mxu0 %v1223
    %v1296 = vpop.f32.mrb[0].mxu0
    %v1297 = vadd.f32 %v1218, %v1296
    %v1298 = vpop.f32.mrb[0].mxu0
    %1299 = vdwg.mxu0
    %v1300 = vadd.f32 %v1292, %v27
    %v1301 = vadd.f32 %v1297, %v28
    %v1302 = vsel %vm182, %v1300, 0.0
    %1303 = vadd.xlane.f32.xlu0 %v1302
    %v1304 = vpop.xlane.xlu0 %1303
    %v1305 = vsel %vm182, %v1301, 0.0
    %1306 = vadd.xlane.f32.xlu0 %v1305
    %v1307 = vpop.xlane.xlu0 %1306
    %v1308 = vrcp.pop 32.0
    %v1309 = vmul.f32 %v1304, %v1308
    %v1310 = vmul.f32 %v1307, %v1308
    %v1311 = vsub.f32 %v1300, %v1309
    %v1312 = vsub.f32 %v1301, %v1310
    %v1313 = vmul.f32 %v1311, %v1311
    %v1314 = vmul.f32 %v1312, %v1312
    %v1315 = vsel %vm182, %v1313, 0.0
    %1316 = vadd.xlane.f32.xlu0 %v1315
    %v1317 = vpop.xlane.xlu0 %1316
    %v1318 = vsel %vm182, %v1314, 0.0
    %1319 = vadd.xlane.f32.xlu0 %v1318
    %v1320 = vpop.xlane.xlu0 %1319
    %v1321 = vmul.f32 %v1317, %v1308
    %v1322 = vmul.f32 %v1320, %v1308
    %v1323 = vadd.f32 %v1321, 1e-05
    %v1324 = vadd.f32 %v1322, 1e-05
    %v1325 = vrsqrt.pop %v1323
    %v1326 = vmul.f32 %v1323, %v1325
    %vm1327 = vcmp.eq.f32.partialorder %v1323, inf
    %v1328 = vsel %vm1327, %v1323, %v1326
    %vm1329 = vcmp.eq.f32.partialorder %v1323, 0.0
    %v1330 = vand.u32 %v1323, 2147483648
    %v1331 = vsel %vm1329, %v1330, %v1328
    %v1332 = vrsqrt.pop %v1324
    %v1333 = vmul.f32 %v1324, %v1332
    %vm1334 = vcmp.eq.f32.partialorder %v1324, inf
    %v1335 = vsel %vm1334, %v1324, %v1333
    %vm1336 = vcmp.eq.f32.partialorder %v1324, 0.0
    %v1337 = vand.u32 %v1324, 2147483648
    %v1338 = vsel %vm1336, %v1337, %v1335
    %v1339 = vrcp.pop %v1331
    %v1340 = vmul.f32 %v1311, %v1339
    %v1341 = vrcp.pop %v1338
    %v1342 = vmul.f32 %v1312, %v1341
    %v1343 = vlaneseq
    %v1344 = vshrl.u32 %v1343, 7
    %v1345 = vsub.s32 6, %v1344
    %v1346 = vrot.slane %v176, %v1345
    %v1347 = vmul.f32 %v1340, %v1346
    %v1348 = vmul.f32 %v1342, %v1346
    %v1349 = vlaneseq
    %v1350 = vshrl.u32 %v1349, 7
    %v1351 = vsub.s32 7, %v1350
    %v1352 = vrot.slane %v176, %v1351
    %v1353 = vadd.f32 %v1347, %v1352
    %v1354 = vadd.f32 %v1348, %v1352
    %v1355 = vlaneseq
    %v1356 = vshrl.u32 %v1355, 7
    %v1357 = vsub.s32 0, %v1356
    %v1358 = vrot.slane %v176, %v1357
    %v1360 = vsel %vm182, %v1353, 0
    %v1363 = vsel %vm182, %v1354, 0
    %1365 = vmatprep.subr.mxu0 0.0
    %1366 = vmatpush1.msra.mxu0 %v164
    %1367 = vmatprep.subr.mxu0 0.0
    %1368 = vmatpush1.msra.mxu0 %v165
    %1369 = vmatprep.subr.mxu0 0.0
    %1370 = vmatpush1.msra.mxu0 %v166
    %1371 = vmatprep.subr.mxu0 0.0
    %1372 = vmatpush1.msra.mxu0 %v167
    %1373 = vmatprep.subr.mxu0 0.0
    %1374 = vmatpush1.msra.mxu0 0.0
    %1375 = vmatprep.subr.mxu0 0.0
    %1376 = vmatpush1.msra.mxu0 0.0
    %1377 = vmatprep.subr.mxu0 0.0
    %1378 = vmatpush1.msra.mxu0 0.0
    %1379 = vmatprep.subr.mxu0 0.0
    %1380 = vmatpush1.msra.mxu0 0.0
    %1381 = vmatprep.subr.mxu0 0.0
    %1382 = vmatpush1.msra.mxu0 0.0
    %1383 = vmatprep.subr.mxu0 0.0
    %1384 = vmatpush1.msra.mxu0 0.0
    %1385 = vmatprep.subr.mxu0 0.0
    %1386 = vmatpush1.msra.mxu0 0.0
    %1387 = vmatprep.subr.mxu0 0.0
    %1388 = vmatpush1.msra.mxu0 0.0
    %1389 = vmatprep.subr.mxu0 0.0
    %1390 = vmatpush1.msra.mxu0 0.0
    %1391 = vmatprep.subr.mxu0 0.0
    %1392 = vmatpush1.msra.mxu0 0.0
    %1393 = vmatprep.subr.mxu0 0.0
    %1394 = vmatpush1.msra.mxu0 0.0
    %1395 = vmatprep.subr.mxu0 0.0
    %1396 = vmatpush1.msra.mxu0 0.0
    %1397 = vmatprep.subr.mxu0 0.0
    %1398 = vmatpush1.msra.mxu0 0.0
    %1399 = vmatprep.subr.mxu0 0.0
    %1400 = vmatpush1.msra.mxu0 0.0
    %1401 = vmatprep.subr.mxu0 0.0
    %1402 = vmatpush1.msra.mxu0 0.0
    %1403 = vmatprep.subr.mxu0 0.0
    %1404 = vmatpush1.msra.mxu0 0.0
    %1405 = vmatprep.subr.mxu0 0.0
    %1406 = vmatpush1.msra.mxu0 0.0
    %1407 = vmatprep.subr.mxu0 0.0
    %1408 = vmatpush1.msra.mxu0 0.0
    %1409 = vmatprep.subr.mxu0 0.0
    %1410 = vmatpush1.msra.mxu0 0.0
    %1411 = vmatprep.subr.mxu0 0.0
    %1412 = vmatpush1.msra.mxu0 0.0
    %1413 = vmatprep.subr.mxu0 0.0
    %1414 = vmatpush1.msra.mxu0 0.0
    %1415 = vmatprep.subr.mxu0 0.0
    %1416 = vmatpush1.msra.mxu0 0.0
    %1417 = vmatprep.subr.mxu0 0.0
    %1418 = vmatpush1.msra.mxu0 0.0
    %1419 = vmatprep.subr.mxu0 0.0
    %1420 = vmatpush1.msra.mxu0 0.0
    %1421 = vmatprep.subr.mxu0 0.0
    %1422 = vmatpush1.msra.mxu0 0.0
    %1423 = vmatprep.subr.mxu0 0.0
    %1424 = vmatpush1.msra.mxu0 0.0
    %1425 = vmatprep.subr.mxu0 0.0
    %1426 = vmatpush1.msra.mxu0 0.0
    %1427 = vmatprep.subr.mxu0 0.0
    %1428 = vmatpush1.msra.mxu0 0.0
    %1429 = vmatprep.mubr.f32.mxu0 0.0
    %1430 = vmatmul.mubr.f32.gmra.mrb[0].mxu0 %v1360
    %v1431 = vpop.f32.mrb[0].mxu0
    %v1432 = vadd.f32 %v1358, %v1431
    %v1433 = vpop.f32.mrb[0].mxu0
    %1434 = vmatprep.mubr.f32.mxu0 0.0
    %1435 = vmatmul.mubr.f32.gmra.mrb[0].mxu0 %v1363
    %v1436 = vpop.f32.mrb[0].mxu0
    %v1437 = vadd.f32 %v1358, %v1436
    %v1438 = vpop.f32.mrb[0].mxu0
    %1439 = vdwg.mxu0
    %v1440 = vmax.f32 %v1432, 0.0
    %v1441 = vmax.f32 %v1437, 0.0
    %v1442 = vlaneseq
    %v1443 = vshrl.u32 %v1442, 7
    %v1444 = vsub.s32 5, %v1443
    %v1445 = vrot.slane %v176, %v1444
    %vm1446 = vcmask 523264
    %v1448 = vsel %vm1446, %v1440, 0
    %v1451 = vsel %vm1446, %v1441, 0
    %1453 = vmatprep.subr.mxu0 0.0
    %1454 = vmatpush1.msra.mxu0 %v168
    %1455 = vmatprep.subr.mxu0 0.0
    %1456 = vmatpush1.msra.mxu0 %v169
    %1457 = vmatprep.subr.mxu0 0.0
    %1458 = vmatpush1.msra.mxu0 %v170
    %1459 = vmatprep.subr.mxu0 0.0
    %1460 = vmatpush1.msra.mxu0 %v171
    %1461 = vmatprep.subr.mxu0 0.0
    %1462 = vmatpush1.msra.mxu0 %v172
    %1463 = vmatprep.subr.mxu0 0.0
    %1464 = vmatpush1.msra.mxu0 %v173
    %1465 = vmatprep.subr.mxu0 0.0
    %1466 = vmatpush1.msra.mxu0 %v174
    %1467 = vmatprep.subr.mxu0 0.0
    %1468 = vmatpush1.msra.mxu0 %v175
    %1469 = vmatprep.subr.mxu0 0.0
    %1470 = vmatpush1.msra.mxu0 0.0
    %1471 = vmatprep.subr.mxu0 0.0
    %1472 = vmatpush1.msra.mxu0 0.0
    %1473 = vmatprep.subr.mxu0 0.0
    %1474 = vmatpush1.msra.mxu0 0.0
    %1475 = vmatprep.subr.mxu0 0.0
    %1476 = vmatpush1.msra.mxu0 0.0
    %1477 = vmatprep.subr.mxu0 0.0
    %1478 = vmatpush1.msra.mxu0 0.0
    %1479 = vmatprep.subr.mxu0 0.0
    %1480 = vmatpush1.msra.mxu0 0.0
    %1481 = vmatprep.subr.mxu0 0.0
    %1482 = vmatpush1.msra.mxu0 0.0
    %1483 = vmatprep.subr.mxu0 0.0
    %1484 = vmatpush1.msra.mxu0 0.0
    %1485 = vmatprep.subr.mxu0 0.0
    %1486 = vmatpush1.msra.mxu0 0.0
    %1487 = vmatprep.subr.mxu0 0.0
    %1488 = vmatpush1.msra.mxu0 0.0
    %1489 = vmatprep.subr.mxu0 0.0
    %1490 = vmatpush1.msra.mxu0 0.0
    %1491 = vmatprep.subr.mxu0 0.0
    %1492 = vmatpush1.msra.mxu0 0.0
    %1493 = vmatprep.subr.mxu0 0.0
    %1494 = vmatpush1.msra.mxu0 0.0
    %1495 = vmatprep.subr.mxu0 0.0
    %1496 = vmatpush1.msra.mxu0 0.0
    %1497 = vmatprep.subr.mxu0 0.0
    %1498 = vmatpush1.msra.mxu0 0.0
    %1499 = vmatprep.subr.mxu0 0.0
    %1500 = vmatpush1.msra.mxu0 0.0
    %1501 = vmatprep.subr.mxu0 0.0
    %1502 = vmatpush1.msra.mxu0 0.0
    %1503 = vmatprep.subr.mxu0 0.0
    %1504 = vmatpush1.msra.mxu0 0.0
    %1505 = vmatprep.subr.mxu0 0.0
    %1506 = vmatpush1.msra.mxu0 0.0
    %1507 = vmatprep.subr.mxu0 0.0
    %1508 = vmatpush1.msra.mxu0 0.0
    %1509 = vmatprep.subr.mxu0 0.0
    %1510 = vmatpush1.msra.mxu0 0.0
    %1511 = vmatprep.subr.mxu0 0.0
    %1512 = vmatpush1.msra.mxu0 0.0
    %1513 = vmatprep.subr.mxu0 0.0
    %1514 = vmatpush1.msra.mxu0 0.0
    %1515 = vmatprep.subr.mxu0 0.0
    %1516 = vmatpush1.msra.mxu0 0.0
    %1517 = vmatprep.mubr.f32.mxu0 0.0
    %1518 = vmatmul.mubr.f32.gmra.mrb[0].mxu0 %v1448
    %v1519 = vpop.f32.mrb[0].mxu0
    %v1520 = vadd.f32 %v1445, %v1519
    %v1521 = vpop.f32.mrb[0].mxu0
    %1522 = vmatprep.mubr.f32.mxu0 0.0
    %1523 = vmatmul.mubr.f32.gmra.mrb[0].mxu0 %v1451
    %v1524 = vpop.f32.mrb[0].mxu0
    %v1525 = vadd.f32 %v1445, %v1524
    %v1526 = vpop.f32.mrb[0].mxu0
    %1527 = vdwg.mxu0
    %v1528 = vadd.f32 %v1520, %v1353
    %v1529 = vadd.f32 %v1525, %v1354
    %v1530 = vsel %vm182, %v1528, 0.0
    %1531 = vadd.xlane.f32.xlu0 %v1530
    %v1532 = vpop.xlane.xlu0 %1531
    %v1533 = vsel %vm182, %v1529, 0.0
    %1534 = vadd.xlane.f32.xlu0 %v1533
    %v1535 = vpop.xlane.xlu0 %1534
    %v1536 = vmul.f32 %v1532, %v1308
    %v1537 = vmul.f32 %v1535, %v1308
    %v1538 = vsub.f32 %v1528, %v1536
    %v1539 = vsub.f32 %v1529, %v1537
    %v1540 = vmul.f32 %v1538, %v1538
    %v1541 = vmul.f32 %v1539, %v1539
    %v1542 = vsel %vm182, %v1540, 0.0
    %1543 = vadd.xlane.f32.xlu0 %v1542
    %v1544 = vpop.xlane.xlu0 %1543
    %v1545 = vsel %vm182, %v1541, 0.0
    %1546 = vadd.xlane.f32.xlu0 %v1545
    %v1547 = vpop.xlane.xlu0 %1546
    %v1548 = vmul.f32 %v1544, %v1308
    %v1549 = vmul.f32 %v1547, %v1308
    %v1550 = vadd.f32 %v1548, 1e-05
    %v1551 = vadd.f32 %v1549, 1e-05
    %v1552 = vrsqrt.pop %v1550
    %v1553 = vmul.f32 %v1550, %v1552
    %vm1554 = vcmp.eq.f32.partialorder %v1550, inf
    %v1555 = vsel %vm1554, %v1550, %v1553
    %vm1556 = vcmp.eq.f32.partialorder %v1550, 0.0
    %v1557 = vand.u32 %v1550, 2147483648
    %v1558 = vsel %vm1556, %v1557, %v1555
    %v1559 = vrsqrt.pop %v1551
    %v1560 = vmul.f32 %v1551, %v1559
    %vm1561 = vcmp.eq.f32.partialorder %v1551, inf
    %v1562 = vsel %vm1561, %v1551, %v1560
    %vm1563 = vcmp.eq.f32.partialorder %v1551, 0.0
    %v1564 = vand.u32 %v1551, 2147483648
    %v1565 = vsel %vm1563, %v1564, %v1562
    %v1566 = vrcp.pop %v1558
    %v1567 = vmul.f32 %v1538, %v1566
    %v1568 = vrcp.pop %v1565
    %v1569 = vmul.f32 %v1539, %v1568
    %v1570 = vlaneseq
    %v1571 = vshrl.u32 %v1570, 7
    %v1572 = vsub.s32 0, %v1571
    %v1573 = vrot.slane %v177, %v1572
    %v1574 = vmul.f32 %v1567, %v1573
    %v1575 = vmul.f32 %v1569, %v1573
    %v1576 = vlaneseq
    %v1577 = vshrl.u32 %v1576, 7
    %v1578 = vsub.s32 1, %v1577
    %v1579 = vrot.slane %v177, %v1578
    %v1580 = vadd.f32 %v1574, %v1579
    %v1581 = vadd.f32 %v1575, %v1579
    %s1582 = scalar_lea.vmem %s2, 96
    %v1583 = vld [vmem:[%s1582] sm:$0xff]
    %v1584 = vld [vmem:[%s1582 + $0x8] sm:$0xff]
    %v1585 = vld [vmem:[%s1582 + $0x10] sm:$0xff]
    %v1586 = vld [vmem:[%s1582 + $0x18] sm:$0xff]
    %s1587 = scalar_lea.vmem %s2, 128
    %v1588 = vld [vmem:[%s1587] sm:$0xff]
    %v1589 = vld [vmem:[%s1587 + $0x8] sm:$0xff]
    %v1590 = vld [vmem:[%s1587 + $0x10] sm:$0xff]
    %v1591 = vld [vmem:[%s1587 + $0x18] sm:$0xff]
    %s1592 = scalar_lea.vmem %s2, 160
    %v1593 = vld [vmem:[%s1592] sm:$0xff]
    %v1594 = vld [vmem:[%s1592 + $0x8] sm:$0xff]
    %v1595 = vld [vmem:[%s1592 + $0x10] sm:$0xff]
    %v1596 = vld [vmem:[%s1592 + $0x18] sm:$0xff]
    %s1597 = scalar_lea.vmem %s3, 32
    %v1598 = vld [vmem:[%s1597] sm:$0xff]
    %v1599 = vld [vmem:[%s1597 + $0x8] sm:$0xff]
    %v1600 = vld [vmem:[%s1597 + $0x10] sm:$0xff]
    %v1601 = vld [vmem:[%s1597 + $0x18] sm:$0xff]
    %s1602 = scalar_lea.vmem %s4, 32
    %v1603 = vld [vmem:[%s1602] sm:$0xff]
    %v1604 = vld [vmem:[%s1602 + $0x8] sm:$0xff]
    %v1605 = vld [vmem:[%s1602 + $0x10] sm:$0xff]
    %v1606 = vld [vmem:[%s1602 + $0x18] sm:$0xff]
    %s1607 = scalar_lea.vmem %s5, 64
    %v1608 = vld [vmem:[%s1607] sm:$0xff]
    %v1609 = vld [vmem:[%s1607 + $0x8] sm:$0xff]
    %v1610 = vld [vmem:[%s1607 + $0x10] sm:$0xff]
    %v1611 = vld [vmem:[%s1607 + $0x18] sm:$0xff]
    %v1612 = vld [vmem:[%s1607 + $0x20] sm:$0xff]
    %v1613 = vld [vmem:[%s1607 + $0x28] sm:$0xff]
    %v1614 = vld [vmem:[%s1607 + $0x30] sm:$0xff]
    %v1615 = vld [vmem:[%s1607 + $0x38] sm:$0xff]
    %s1616 = scalar_lea.vmem %s6, 16
    %v1617 = vld [vmem:[%s1616] sm:$0xff]
    %v1618 = vld [vmem:[%s1616 + $0x8] sm:$0x3]
    %v1619 = vlaneseq
    %v1620 = vshrl.u32 %v1619, 7
    %v1621 = vsub.s32 1, %v1620
    %v1622 = vrot.slane %v1617, %v1621
    %v1624 = vsel %vm182, %v1580, 0
    %v1627 = vsel %vm182, %v1581, 0
    %1629 = vmatprep.subr.mxu0 0.0
    %1630 = vmatpush1.msra.mxu0 %v1583
    %1631 = vmatprep.subr.mxu0 0.0
    %1632 = vmatpush1.msra.mxu0 %v1584
    %1633 = vmatprep.subr.mxu0 0.0
    %1634 = vmatpush1.msra.mxu0 %v1585
    %1635 = vmatprep.subr.mxu0 0.0
    %1636 = vmatpush1.msra.mxu0 %v1586
    %1637 = vmatprep.subr.mxu0 0.0
    %1638 = vmatpush1.msra.mxu0 0.0
    %1639 = vmatprep.subr.mxu0 0.0
    %1640 = vmatpush1.msra.mxu0 0.0
    %1641 = vmatprep.subr.mxu0 0.0
    %1642 = vmatpush1.msra.mxu0 0.0
    %1643 = vmatprep.subr.mxu0 0.0
    %1644 = vmatpush1.msra.mxu0 0.0
    %1645 = vmatprep.subr.mxu0 0.0
    %1646 = vmatpush1.msra.mxu0 0.0
    %1647 = vmatprep.subr.mxu0 0.0
    %1648 = vmatpush1.msra.mxu0 0.0
    %1649 = vmatprep.subr.mxu0 0.0
    %1650 = vmatpush1.msra.mxu0 0.0
    %1651 = vmatprep.subr.mxu0 0.0
    %1652 = vmatpush1.msra.mxu0 0.0
    %1653 = vmatprep.subr.mxu0 0.0
    %1654 = vmatpush1.msra.mxu0 0.0
    %1655 = vmatprep.subr.mxu0 0.0
    %1656 = vmatpush1.msra.mxu0 0.0
    %1657 = vmatprep.subr.mxu0 0.0
    %1658 = vmatpush1.msra.mxu0 0.0
    %1659 = vmatprep.subr.mxu0 0.0
    %1660 = vmatpush1.msra.mxu0 0.0
    %1661 = vmatprep.subr.mxu0 0.0
    %1662 = vmatpush1.msra.mxu0 0.0
    %1663 = vmatprep.subr.mxu0 0.0
    %1664 = vmatpush1.msra.mxu0 0.0
    %1665 = vmatprep.subr.mxu0 0.0
    %1666 = vmatpush1.msra.mxu0 0.0
    %1667 = vmatprep.subr.mxu0 0.0
    %1668 = vmatpush1.msra.mxu0 0.0
    %1669 = vmatprep.subr.mxu0 0.0
    %1670 = vmatpush1.msra.mxu0 0.0
    %1671 = vmatprep.subr.mxu0 0.0
    %1672 = vmatpush1.msra.mxu0 0.0
    %1673 = vmatprep.subr.mxu0 0.0
    %1674 = vmatpush1.msra.mxu0 0.0
    %1675 = vmatprep.subr.mxu0 0.0
    %1676 = vmatpush1.msra.mxu0 0.0
    %1677 = vmatprep.subr.mxu0 0.0
    %1678 = vmatpush1.msra.mxu0 0.0
    %1679 = vmatprep.subr.mxu0 0.0
    %1680 = vmatpush1.msra.mxu0 0.0
    %1681 = vmatprep.subr.mxu0 0.0
    %1682 = vmatpush1.msra.mxu0 0.0
    %1683 = vmatprep.subr.mxu0 0.0
    %1684 = vmatpush1.msra.mxu0 0.0
    %1685 = vmatprep.subr.mxu0 0.0
    %1686 = vmatpush1.msra.mxu0 0.0
    %1687 = vmatprep.subr.mxu0 0.0
    %1688 = vmatpush1.msra.mxu0 0.0
    %1689 = vmatprep.subr.mxu0 0.0
    %1690 = vmatpush1.msra.mxu0 0.0
    %1691 = vmatprep.subr.mxu0 0.0
    %1692 = vmatpush1.msra.mxu0 0.0
    %1693 = vmatprep.mubr.f32.mxu0 0.0
    %1694 = vmatmul.mubr.f32.gmra.mrb[0].mxu0 %v1624
    %v1695 = vpop.f32.mrb[0].mxu0
    %v1696 = vadd.f32 %v1622, %v1695
    %v1697 = vpop.f32.mrb[0].mxu0
    %1698 = vmatprep.mubr.f32.mxu0 0.0
    %1699 = vmatmul.mubr.f32.gmra.mrb[0].mxu0 %v1627
    %v1700 = vpop.f32.mrb[0].mxu0
    %v1701 = vadd.f32 %v1622, %v1700
    %v1702 = vpop.f32.mrb[0].mxu0
    %1703 = vdwg.mxu0
    %v1704 = vlaneseq
    %v1705 = vshrl.u32 %v1704, 7
    %v1706 = vsub.s32 2, %v1705
    %v1707 = vrot.slane %v1617, %v1706
    %1708 = vmatprep.subr.mxu0 0.0
    %1709 = vmatpush1.msra.mxu0 %v1588
    %1710 = vmatprep.subr.mxu0 0.0
    %1711 = vmatpush1.msra.mxu0 %v1589
    %1712 = vmatprep.subr.mxu0 0.0
    %1713 = vmatpush1.msra.mxu0 %v1590
    %1714 = vmatprep.subr.mxu0 0.0
    %1715 = vmatpush1.msra.mxu0 %v1591
    %1716 = vmatprep.subr.mxu0 0.0
    %1717 = vmatpush1.msra.mxu0 0.0
    %1718 = vmatprep.subr.mxu0 0.0
    %1719 = vmatpush1.msra.mxu0 0.0
    %1720 = vmatprep.subr.mxu0 0.0
    %1721 = vmatpush1.msra.mxu0 0.0
    %1722 = vmatprep.subr.mxu0 0.0
    %1723 = vmatpush1.msra.mxu0 0.0
    %1724 = vmatprep.subr.mxu0 0.0
    %1725 = vmatpush1.msra.mxu0 0.0
    %1726 = vmatprep.subr.mxu0 0.0
    %1727 = vmatpush1.msra.mxu0 0.0
    %1728 = vmatprep.subr.mxu0 0.0
    %1729 = vmatpush1.msra.mxu0 0.0
    %1730 = vmatprep.subr.mxu0 0.0
    %1731 = vmatpush1.msra.mxu0 0.0
    %1732 = vmatprep.subr.mxu0 0.0
    %1733 = vmatpush1.msra.mxu0 0.0
    %1734 = vmatprep.subr.mxu0 0.0
    %1735 = vmatpush1.msra.mxu0 0.0
    %1736 = vmatprep.subr.mxu0 0.0
    %1737 = vmatpush1.msra.mxu0 0.0
    %1738 = vmatprep.subr.mxu0 0.0
    %1739 = vmatpush1.msra.mxu0 0.0
    %1740 = vmatprep.subr.mxu0 0.0
    %1741 = vmatpush1.msra.mxu0 0.0
    %1742 = vmatprep.subr.mxu0 0.0
    %1743 = vmatpush1.msra.mxu0 0.0
    %1744 = vmatprep.subr.mxu0 0.0
    %1745 = vmatpush1.msra.mxu0 0.0
    %1746 = vmatprep.subr.mxu0 0.0
    %1747 = vmatpush1.msra.mxu0 0.0
    %1748 = vmatprep.subr.mxu0 0.0
    %1749 = vmatpush1.msra.mxu0 0.0
    %1750 = vmatprep.subr.mxu0 0.0
    %1751 = vmatpush1.msra.mxu0 0.0
    %1752 = vmatprep.subr.mxu0 0.0
    %1753 = vmatpush1.msra.mxu0 0.0
    %1754 = vmatprep.subr.mxu0 0.0
    %1755 = vmatpush1.msra.mxu0 0.0
    %1756 = vmatprep.subr.mxu0 0.0
    %1757 = vmatpush1.msra.mxu0 0.0
    %1758 = vmatprep.subr.mxu0 0.0
    %1759 = vmatpush1.msra.mxu0 0.0
    %1760 = vmatprep.subr.mxu0 0.0
    %1761 = vmatpush1.msra.mxu0 0.0
    %1762 = vmatprep.subr.mxu0 0.0
    %1763 = vmatpush1.msra.mxu0 0.0
    %1764 = vmatprep.subr.mxu0 0.0
    %1765 = vmatpush1.msra.mxu0 0.0
    %1766 = vmatprep.subr.mxu0 0.0
    %1767 = vmatpush1.msra.mxu0 0.0
    %1768 = vmatprep.subr.mxu0 0.0
    %1769 = vmatpush1.msra.mxu0 0.0
    %1770 = vmatprep.subr.mxu0 0.0
    %1771 = vmatpush1.msra.mxu0 0.0
    %1772 = vmatprep.mubr.f32.mxu0 0.0
    %1773 = vmatmul.mubr.f32.gmra.mrb[0].mxu0 %v1624
    %v1774 = vpop.f32.mrb[0].mxu0
    %v1775 = vadd.f32 %v1707, %v1774
    %v1776 = vpop.f32.mrb[0].mxu0
    %1777 = vmatprep.mubr.f32.mxu0 0.0
    %1778 = vmatmul.mubr.f32.gmra.mrb[0].mxu0 %v1627
    %v1779 = vpop.f32.mrb[0].mxu0
    %v1780 = vadd.f32 %v1707, %v1779
    %v1781 = vpop.f32.mrb[0].mxu0
    %1782 = vdwg.mxu0
    %v1783 = vlaneseq
    %v1784 = vshrl.u32 %v1783, 7
    %v1785 = vsub.s32 3, %v1784
    %v1786 = vrot.slane %v1617, %v1785
    %1787 = vmatprep.subr.mxu0 0.0
    %1788 = vmatpush1.msra.mxu0 %v1593
    %1789 = vmatprep.subr.mxu0 0.0
    %1790 = vmatpush1.msra.mxu0 %v1594
    %1791 = vmatprep.subr.mxu0 0.0
    %1792 = vmatpush1.msra.mxu0 %v1595
    %1793 = vmatprep.subr.mxu0 0.0
    %1794 = vmatpush1.msra.mxu0 %v1596
    %1795 = vmatprep.subr.mxu0 0.0
    %1796 = vmatpush1.msra.mxu0 0.0
    %1797 = vmatprep.subr.mxu0 0.0
    %1798 = vmatpush1.msra.mxu0 0.0
    %1799 = vmatprep.subr.mxu0 0.0
    %1800 = vmatpush1.msra.mxu0 0.0
    %1801 = vmatprep.subr.mxu0 0.0
    %1802 = vmatpush1.msra.mxu0 0.0
    %1803 = vmatprep.subr.mxu0 0.0
    %1804 = vmatpush1.msra.mxu0 0.0
    %1805 = vmatprep.subr.mxu0 0.0
    %1806 = vmatpush1.msra.mxu0 0.0
    %1807 = vmatprep.subr.mxu0 0.0
    %1808 = vmatpush1.msra.mxu0 0.0
    %1809 = vmatprep.subr.mxu0 0.0
    %1810 = vmatpush1.msra.mxu0 0.0
    %1811 = vmatprep.subr.mxu0 0.0
    %1812 = vmatpush1.msra.mxu0 0.0
    %1813 = vmatprep.subr.mxu0 0.0
    %1814 = vmatpush1.msra.mxu0 0.0
    %1815 = vmatprep.subr.mxu0 0.0
    %1816 = vmatpush1.msra.mxu0 0.0
    %1817 = vmatprep.subr.mxu0 0.0
    %1818 = vmatpush1.msra.mxu0 0.0
    %1819 = vmatprep.subr.mxu0 0.0
    %1820 = vmatpush1.msra.mxu0 0.0
    %1821 = vmatprep.subr.mxu0 0.0
    %1822 = vmatpush1.msra.mxu0 0.0
    %1823 = vmatprep.subr.mxu0 0.0
    %1824 = vmatpush1.msra.mxu0 0.0
    %1825 = vmatprep.subr.mxu0 0.0
    %1826 = vmatpush1.msra.mxu0 0.0
    %1827 = vmatprep.subr.mxu0 0.0
    %1828 = vmatpush1.msra.mxu0 0.0
    %1829 = vmatprep.subr.mxu0 0.0
    %1830 = vmatpush1.msra.mxu0 0.0
    %1831 = vmatprep.subr.mxu0 0.0
    %1832 = vmatpush1.msra.mxu0 0.0
    %1833 = vmatprep.subr.mxu0 0.0
    %1834 = vmatpush1.msra.mxu0 0.0
    %1835 = vmatprep.subr.mxu0 0.0
    %1836 = vmatpush1.msra.mxu0 0.0
    %1837 = vmatprep.subr.mxu0 0.0
    %1838 = vmatpush1.msra.mxu0 0.0
    %1839 = vmatprep.subr.mxu0 0.0
    %1840 = vmatpush1.msra.mxu0 0.0
    %1841 = vmatprep.subr.mxu0 0.0
    %1842 = vmatpush1.msra.mxu0 0.0
    %1843 = vmatprep.subr.mxu0 0.0
    %1844 = vmatpush1.msra.mxu0 0.0
    %1845 = vmatprep.subr.mxu0 0.0
    %1846 = vmatpush1.msra.mxu0 0.0
    %1847 = vmatprep.subr.mxu0 0.0
    %1848 = vmatpush1.msra.mxu0 0.0
    %1849 = vmatprep.subr.mxu0 0.0
    %1850 = vmatpush1.msra.mxu0 0.0
    %1851 = vmatprep.mubr.f32.mxu0 0.0
    %1852 = vmatmul.mubr.f32.gmra.mrb[0].mxu0 %v1624
    %v1853 = vpop.f32.mrb[0].mxu0
    %v1854 = vadd.f32 %v1786, %v1853
    %v1855 = vpop.f32.mrb[0].mxu0
    %1856 = vmatprep.mubr.f32.mxu0 0.0
    %1857 = vmatmul.mubr.f32.gmra.mrb[0].mxu0 %v1627
    %v1858 = vpop.f32.mrb[0].mxu0
    %v1859 = vadd.f32 %v1786, %v1858
    %v1860 = vpop.f32.mrb[0].mxu0
    %1861 = vdwg.mxu0
    %v1862 = vmul.f32 %v1696, %v109
    %v1863 = vmul.f32 %v1696, %v113
    %v1864 = vmul.f32 %v1696, %v117
    %v1865 = vmul.f32 %v1696, %v121
    %v1866 = vmul.f32 %v1696, %v125
    %v1867 = vmul.f32 %v1696, %v129
    %v1868 = vmul.f32 %v1696, %v133
    %v1869 = vmul.f32 %v1696, %v137
    %v1870 = vmul.f32 %v1701, %v109
    %v1871 = vmul.f32 %v1701, %v113
    %v1872 = vmul.f32 %v1701, %v117
    %v1873 = vmul.f32 %v1701, %v121
    %v1874 = vmul.f32 %v1701, %v125
    %v1875 = vmul.f32 %v1701, %v129
    %v1876 = vmul.f32 %v1701, %v133
    %v1877 = vmul.f32 %v1701, %v137
    %v1879 = vsel %vm182, %v1862, 0
    %v1882 = vsel %vm182, %v1863, 0
    %v1885 = vsel %vm182, %v1864, 0
    %v1888 = vsel %vm182, %v1865, 0
    %v1891 = vsel %vm182, %v1866, 0
    %v1894 = vsel %vm182, %v1867, 0
    %v1897 = vsel %vm182, %v1868, 0
    %v1900 = vsel %vm182, %v1869, 0
    %v1903 = vsel %vm182, %v1775, 0
    %1905 = vmatprep.subr.mxu0 0.0
    %1906 = vmatpush1.xpose.msra.mxu0 %v1903
    %1907 = vmatprep.subr.mxu0 0.0
    %1908 = vmatpush1.xpose.msra.mxu0 0.0
    %1909 = vmatprep.subr.mxu0 0.0
    %1910 = vmatpush1.xpose.msra.mxu0 0.0
    %1911 = vmatprep.subr.mxu0 0.0
    %1912 = vmatpush1.xpose.msra.mxu0 0.0
    %1913 = vmatprep.subr.mxu0 0.0
    %1914 = vmatpush1.xpose.msra.mxu0 0.0
    %1915 = vmatprep.subr.mxu0 0.0
    %1916 = vmatpush1.xpose.msra.mxu0 0.0
    %1917 = vmatprep.subr.mxu0 0.0
    %1918 = vmatpush1.xpose.msra.mxu0 0.0
    %1919 = vmatprep.subr.mxu0 0.0
    %1920 = vmatpush1.xpose.msra.mxu0 0.0
    %1921 = vmatprep.subr.mxu0 0.0
    %1922 = vmatpush1.xpose.msra.mxu0 0.0
    %1923 = vmatprep.subr.mxu0 0.0
    %1924 = vmatpush1.xpose.msra.mxu0 0.0
    %1925 = vmatprep.subr.mxu0 0.0
    %1926 = vmatpush1.xpose.msra.mxu0 0.0
    %1927 = vmatprep.subr.mxu0 0.0
    %1928 = vmatpush1.xpose.msra.mxu0 0.0
    %1929 = vmatprep.subr.mxu0 0.0
    %1930 = vmatpush1.xpose.msra.mxu0 0.0
    %1931 = vmatprep.subr.mxu0 0.0
    %1932 = vmatpush1.xpose.msra.mxu0 0.0
    %1933 = vmatprep.subr.mxu0 0.0
    %1934 = vmatpush1.xpose.msra.mxu0 0.0
    %1935 = vmatprep.subr.mxu0 0.0
    %1936 = vmatpush1.xpose.msra.mxu0 0.0
    %1937 = vmatprep.subr.mxu0 0.0
    %1938 = vmatpush1.xpose.msra.mxu0 0.0
    %1939 = vmatprep.subr.mxu0 0.0
    %1940 = vmatpush1.xpose.msra.mxu0 0.0
    %1941 = vmatprep.subr.mxu0 0.0
    %1942 = vmatpush1.xpose.msra.mxu0 0.0
    %1943 = vmatprep.subr.mxu0 0.0
    %1944 = vmatpush1.xpose.msra.mxu0 0.0
    %1945 = vmatprep.subr.mxu0 0.0
    %1946 = vmatpush1.xpose.msra.mxu0 0.0
    %1947 = vmatprep.subr.mxu0 0.0
    %1948 = vmatpush1.xpose.msra.mxu0 0.0
    %1949 = vmatprep.subr.mxu0 0.0
    %1950 = vmatpush1.xpose.msra.mxu0 0.0
    %1951 = vmatprep.subr.mxu0 0.0
    %1952 = vmatpush1.xpose.msra.mxu0 0.0
    %1953 = vmatprep.subr.mxu0 0.0
    %1954 = vmatpush1.xpose.msra.mxu0 0.0
    %1955 = vmatprep.subr.mxu0 0.0
    %1956 = vmatpush1.xpose.msra.mxu0 0.0
    %1957 = vmatprep.subr.mxu0 0.0
    %1958 = vmatpush1.xpose.msra.mxu0 0.0
    %1959 = vmatprep.subr.mxu0 0.0
    %1960 = vmatpush1.xpose.msra.mxu0 0.0
    %1961 = vmatprep.subr.mxu0 0.0
    %1962 = vmatpush1.xpose.msra.mxu0 0.0
    %1963 = vmatprep.subr.mxu0 0.0
    %1964 = vmatpush1.xpose.msra.mxu0 0.0
    %1965 = vmatprep.subr.mxu0 0.0
    %1966 = vmatpush1.xpose.msra.mxu0 0.0
    %1967 = vmatprep.subr.mxu0 0.0
    %1968 = vmatpush1.xpose.msra.mxu0 0.0
    %1969 = vmatprep.mubr.f32.mxu0 0.0
    %1970 = vmatmul.mubr.f32.gmra.mrb[0].mxu0 %v1879
    %v1971 = vpop.f32.mrb[0].mxu0
    %v1972 = vadd.f32 0.0, %v1971
    %v1973 = vpop.f32.mrb[0].mxu0
    %1974 = vmatprep.mubr.f32.mxu0 0.0
    %1975 = vmatmul.mubr.f32.gmra.mrb[0].mxu0 %v1882
    %v1976 = vpop.f32.mrb[0].mxu0
    %v1977 = vadd.f32 0.0, %v1976
    %v1978 = vpop.f32.mrb[0].mxu0
    %1979 = vmatprep.mubr.f32.mxu0 0.0
    %1980 = vmatmul.mubr.f32.gmra.mrb[0].mxu0 %v1885
    %v1981 = vpop.f32.mrb[0].mxu0
    %v1982 = vadd.f32 0.0, %v1981
    %v1983 = vpop.f32.mrb[0].mxu0
    %1984 = vmatprep.mubr.f32.mxu0 0.0
    %1985 = vmatmul.mubr.f32.gmra.mrb[0].mxu0 %v1888
    %v1986 = vpop.f32.mrb[0].mxu0
    %v1987 = vadd.f32 0.0, %v1986
    %v1988 = vpop.f32.mrb[0].mxu0
    %1989 = vmatprep.mubr.f32.mxu0 0.0
    %1990 = vmatmul.mubr.f32.gmra.mrb[0].mxu0 %v1891
    %v1991 = vpop.f32.mrb[0].mxu0
    %v1992 = vadd.f32 0.0, %v1991
    %v1993 = vpop.f32.mrb[0].mxu0
    %1994 = vmatprep.mubr.f32.mxu0 0.0
    %1995 = vmatmul.mubr.f32.gmra.mrb[0].mxu0 %v1894
    %v1996 = vpop.f32.mrb[0].mxu0
    %v1997 = vadd.f32 0.0, %v1996
    %v1998 = vpop.f32.mrb[0].mxu0
    %1999 = vmatprep.mubr.f32.mxu0 0.0
    %2000 = vmatmul.mubr.f32.gmra.mrb[0].mxu0 %v1897
    %v2001 = vpop.f32.mrb[0].mxu0
    %v2002 = vadd.f32 0.0, %v2001
    %v2003 = vpop.f32.mrb[0].mxu0
    %2004 = vmatprep.mubr.f32.mxu0 0.0
    %2005 = vmatmul.mubr.f32.gmra.mrb[0].mxu0 %v1900
    %v2006 = vpop.f32.mrb[0].mxu0
    %v2007 = vadd.f32 0.0, %v2006
    %v2008 = vpop.f32.mrb[0].mxu0
    %2009 = vdwg.mxu0
    %v2011 = vsel %vm182, %v1870, 0
    %v2014 = vsel %vm182, %v1871, 0
    %v2017 = vsel %vm182, %v1872, 0
    %v2020 = vsel %vm182, %v1873, 0
    %v2023 = vsel %vm182, %v1874, 0
    %v2026 = vsel %vm182, %v1875, 0
    %v2029 = vsel %vm182, %v1876, 0
    %v2032 = vsel %vm182, %v1877, 0
    %v2035 = vsel %vm182, %v1780, 0
    %2037 = vmatprep.subr.mxu0 0.0
    %2038 = vmatpush1.xpose.msra.mxu0 %v2035
    %2039 = vmatprep.subr.mxu0 0.0
    %2040 = vmatpush1.xpose.msra.mxu0 0.0
    %2041 = vmatprep.subr.mxu0 0.0
    %2042 = vmatpush1.xpose.msra.mxu0 0.0
    %2043 = vmatprep.subr.mxu0 0.0
    %2044 = vmatpush1.xpose.msra.mxu0 0.0
    %2045 = vmatprep.subr.mxu0 0.0
    %2046 = vmatpush1.xpose.msra.mxu0 0.0
    %2047 = vmatprep.subr.mxu0 0.0
    %2048 = vmatpush1.xpose.msra.mxu0 0.0
    %2049 = vmatprep.subr.mxu0 0.0
    %2050 = vmatpush1.xpose.msra.mxu0 0.0
    %2051 = vmatprep.subr.mxu0 0.0
    %2052 = vmatpush1.xpose.msra.mxu0 0.0
    %2053 = vmatprep.subr.mxu0 0.0
    %2054 = vmatpush1.xpose.msra.mxu0 0.0
    %2055 = vmatprep.subr.mxu0 0.0
    %2056 = vmatpush1.xpose.msra.mxu0 0.0
    %2057 = vmatprep.subr.mxu0 0.0
    %2058 = vmatpush1.xpose.msra.mxu0 0.0
    %2059 = vmatprep.subr.mxu0 0.0
    %2060 = vmatpush1.xpose.msra.mxu0 0.0
    %2061 = vmatprep.subr.mxu0 0.0
    %2062 = vmatpush1.xpose.msra.mxu0 0.0
    %2063 = vmatprep.subr.mxu0 0.0
    %2064 = vmatpush1.xpose.msra.mxu0 0.0
    %2065 = vmatprep.subr.mxu0 0.0
    %2066 = vmatpush1.xpose.msra.mxu0 0.0
    %2067 = vmatprep.subr.mxu0 0.0
    %2068 = vmatpush1.xpose.msra.mxu0 0.0
    %2069 = vmatprep.subr.mxu0 0.0
    %2070 = vmatpush1.xpose.msra.mxu0 0.0
    %2071 = vmatprep.subr.mxu0 0.0
    %2072 = vmatpush1.xpose.msra.mxu0 0.0
    %2073 = vmatprep.subr.mxu0 0.0
    %2074 = vmatpush1.xpose.msra.mxu0 0.0
    %2075 = vmatprep.subr.mxu0 0.0
    %2076 = vmatpush1.xpose.msra.mxu0 0.0
    %2077 = vmatprep.subr.mxu0 0.0
    %2078 = vmatpush1.xpose.msra.mxu0 0.0
    %2079 = vmatprep.subr.mxu0 0.0
    %2080 = vmatpush1.xpose.msra.mxu0 0.0
    %2081 = vmatprep.subr.mxu0 0.0
    %2082 = vmatpush1.xpose.msra.mxu0 0.0
    %2083 = vmatprep.subr.mxu0 0.0
    %2084 = vmatpush1.xpose.msra.mxu0 0.0
    %2085 = vmatprep.subr.mxu0 0.0
    %2086 = vmatpush1.xpose.msra.mxu0 0.0
    %2087 = vmatprep.subr.mxu0 0.0
    %2088 = vmatpush1.xpose.msra.mxu0 0.0
    %2089 = vmatprep.subr.mxu0 0.0
    %2090 = vmatpush1.xpose.msra.mxu0 0.0
    %2091 = vmatprep.subr.mxu0 0.0
    %2092 = vmatpush1.xpose.msra.mxu0 0.0
    %2093 = vmatprep.subr.mxu0 0.0
    %2094 = vmatpush1.xpose.msra.mxu0 0.0
    %2095 = vmatprep.subr.mxu0 0.0
    %2096 = vmatpush1.xpose.msra.mxu0 0.0
    %2097 = vmatprep.subr.mxu0 0.0
    %2098 = vmatpush1.xpose.msra.mxu0 0.0
    %2099 = vmatprep.subr.mxu0 0.0
    %2100 = vmatpush1.xpose.msra.mxu0 0.0
    %2101 = vmatprep.mubr.f32.mxu0 0.0
    %2102 = vmatmul.mubr.f32.gmra.mrb[0].mxu0 %v2011
    %v2103 = vpop.f32.mrb[0].mxu0
    %v2104 = vadd.f32 0.0, %v2103
    %v2105 = vpop.f32.mrb[0].mxu0
    %2106 = vmatprep.mubr.f32.mxu0 0.0
    %2107 = vmatmul.mubr.f32.gmra.mrb[0].mxu0 %v2014
    %v2108 = vpop.f32.mrb[0].mxu0
    %v2109 = vadd.f32 0.0, %v2108
    %v2110 = vpop.f32.mrb[0].mxu0
    %2111 = vmatprep.mubr.f32.mxu0 0.0
    %2112 = vmatmul.mubr.f32.gmra.mrb[0].mxu0 %v2017
    %v2113 = vpop.f32.mrb[0].mxu0
    %v2114 = vadd.f32 0.0, %v2113
    %v2115 = vpop.f32.mrb[0].mxu0
    %2116 = vmatprep.mubr.f32.mxu0 0.0
    %2117 = vmatmul.mubr.f32.gmra.mrb[0].mxu0 %v2020
    %v2118 = vpop.f32.mrb[0].mxu0
    %v2119 = vadd.f32 0.0, %v2118
    %v2120 = vpop.f32.mrb[0].mxu0
    %2121 = vmatprep.mubr.f32.mxu0 0.0
    %2122 = vmatmul.mubr.f32.gmra.mrb[0].mxu0 %v2023
    %v2123 = vpop.f32.mrb[0].mxu0
    %v2124 = vadd.f32 0.0, %v2123
    %v2125 = vpop.f32.mrb[0].mxu0
    %2126 = vmatprep.mubr.f32.mxu0 0.0
    %2127 = vmatmul.mubr.f32.gmra.mrb[0].mxu0 %v2026
    %v2128 = vpop.f32.mrb[0].mxu0
    %v2129 = vadd.f32 0.0, %v2128
    %v2130 = vpop.f32.mrb[0].mxu0
    %2131 = vmatprep.mubr.f32.mxu0 0.0
    %2132 = vmatmul.mubr.f32.gmra.mrb[0].mxu0 %v2029
    %v2133 = vpop.f32.mrb[0].mxu0
    %v2134 = vadd.f32 0.0, %v2133
    %v2135 = vpop.f32.mrb[0].mxu0
    %2136 = vmatprep.mubr.f32.mxu0 0.0
    %2137 = vmatmul.mubr.f32.gmra.mrb[0].mxu0 %v2032
    %v2138 = vpop.f32.mrb[0].mxu0
    %v2139 = vadd.f32 0.0, %v2138
    %v2140 = vpop.f32.mrb[0].mxu0
    %2141 = vdwg.mxu0
    %v2142 = vmul.f32 %v1972, 0.5
    %v2143 = vmul.f32 %v1977, 0.5
    %v2144 = vmul.f32 %v1982, 0.5
    %v2145 = vmul.f32 %v1987, 0.5
    %v2146 = vmul.f32 %v1992, 0.5
    %v2147 = vmul.f32 %v1997, 0.5
    %v2148 = vmul.f32 %v2002, 0.5
    %v2149 = vmul.f32 %v2007, 0.5
    %v2150 = vmul.f32 %v2104, 0.5
    %v2151 = vmul.f32 %v2109, 0.5
    %v2152 = vmul.f32 %v2114, 0.5
    %v2153 = vmul.f32 %v2119, 0.5
    %v2154 = vmul.f32 %v2124, 0.5
    %v2155 = vmul.f32 %v2129, 0.5
    %v2156 = vmul.f32 %v2134, 0.5
    %v2157 = vmul.f32 %v2139, 0.5
    %v2158 = vadd.f32 %v2142, %v29
    %v2159 = vadd.f32 %v2143, %v30
    %v2160 = vadd.f32 %v2144, %v31
    %v2161 = vadd.f32 %v2145, %v32
    %v2162 = vadd.f32 %v2146, %v33
    %v2163 = vadd.f32 %v2147, %v34
    %v2164 = vadd.f32 %v2148, %v35
    %v2165 = vadd.f32 %v2149, %v36
    %v2166 = vadd.f32 %v2150, %v37
    %v2167 = vadd.f32 %v2151, %v38
    %v2168 = vadd.f32 %v2152, %v39
    %v2169 = vadd.f32 %v2153, %v40
    %v2170 = vadd.f32 %v2154, %v41
    %v2171 = vadd.f32 %v2155, %v42
    %v2172 = vadd.f32 %v2156, %v43
    %v2173 = vadd.f32 %v2157, %v44
    %v2174 = vsel %vm734, %v2158, -inf
    %2175 = vmax.xlane.f32.xlu0 %v2174
    %v2176 = vpop.xlane.xlu0 %2175
    %v2177 = vsel %vm734, %v2159, -inf
    %2178 = vmax.xlane.f32.xlu0 %v2177
    %v2179 = vpop.xlane.xlu0 %2178
    %v2180 = vsel %vm734, %v2160, -inf
    %2181 = vmax.xlane.f32.xlu0 %v2180
    %v2182 = vpop.xlane.xlu0 %2181
    %v2183 = vsel %vm734, %v2161, -inf
    %2184 = vmax.xlane.f32.xlu0 %v2183
    %v2185 = vpop.xlane.xlu0 %2184
    %v2186 = vsel %vm734, %v2162, -inf
    %2187 = vmax.xlane.f32.xlu0 %v2186
    %v2188 = vpop.xlane.xlu0 %2187
    %v2189 = vsel %vm734, %v2163, -inf
    %2190 = vmax.xlane.f32.xlu0 %v2189
    %v2191 = vpop.xlane.xlu0 %2190
    %v2192 = vsel %vm734, %v2164, -inf
    %2193 = vmax.xlane.f32.xlu0 %v2192
    %v2194 = vpop.xlane.xlu0 %2193
    %v2195 = vsel %vm734, %v2165, -inf
    %2196 = vmax.xlane.f32.xlu0 %v2195
    %v2197 = vpop.xlane.xlu0 %2196
    %v2198 = vsel %vm734, %v2166, -inf
    %2199 = vmax.xlane.f32.xlu0 %v2198
    %v2200 = vpop.xlane.xlu0 %2199
    %v2201 = vsel %vm734, %v2167, -inf
    %2202 = vmax.xlane.f32.xlu0 %v2201
    %v2203 = vpop.xlane.xlu0 %2202
    %v2204 = vsel %vm734, %v2168, -inf
    %2205 = vmax.xlane.f32.xlu0 %v2204
    %v2206 = vpop.xlane.xlu0 %2205
    %v2207 = vsel %vm734, %v2169, -inf
    %2208 = vmax.xlane.f32.xlu0 %v2207
    %v2209 = vpop.xlane.xlu0 %2208
    %v2210 = vsel %vm734, %v2170, -inf
    %2211 = vmax.xlane.f32.xlu0 %v2210
    %v2212 = vpop.xlane.xlu0 %2211
    %v2213 = vsel %vm734, %v2171, -inf
    %2214 = vmax.xlane.f32.xlu0 %v2213
    %v2215 = vpop.xlane.xlu0 %2214
    %v2216 = vsel %vm734, %v2172, -inf
    %2217 = vmax.xlane.f32.xlu0 %v2216
    %v2218 = vpop.xlane.xlu0 %2217
    %v2219 = vsel %vm734, %v2173, -inf
    %2220 = vmax.xlane.f32.xlu0 %v2219
    %v2221 = vpop.xlane.xlu0 %2220
    %v2222 = vsub.f32 %v2158, %v2176
    %v2223 = vsub.f32 %v2159, %v2179
    %v2224 = vsub.f32 %v2160, %v2182
    %v2225 = vsub.f32 %v2161, %v2185
    %v2226 = vsub.f32 %v2162, %v2188
    %v2227 = vsub.f32 %v2163, %v2191
    %v2228 = vsub.f32 %v2164, %v2194
    %v2229 = vsub.f32 %v2165, %v2197
    %v2230 = vsub.f32 %v2166, %v2200
    %v2231 = vsub.f32 %v2167, %v2203
    %v2232 = vsub.f32 %v2168, %v2206
    %v2233 = vsub.f32 %v2169, %v2209
    %v2234 = vsub.f32 %v2170, %v2212
    %v2235 = vsub.f32 %v2171, %v2215
    %v2236 = vsub.f32 %v2172, %v2218
    %v2237 = vsub.f32 %v2173, %v2221
    %v2238 = vmul.f32 %v2222, 1.442695
    %v2239 = vpow.pop %v2238
    %v2240 = vmul.f32 %v2223, 1.442695
    %v2241 = vpow.pop %v2240
    %v2242 = vmul.f32 %v2224, 1.442695
    %v2243 = vpow.pop %v2242
    %v2244 = vmul.f32 %v2225, 1.442695
    %v2245 = vpow.pop %v2244
    %v2246 = vmul.f32 %v2226, 1.442695
    %v2247 = vpow.pop %v2246
    %v2248 = vmul.f32 %v2227, 1.442695
    %v2249 = vpow.pop %v2248
    %v2250 = vmul.f32 %v2228, 1.442695
    %v2251 = vpow.pop %v2250
    %v2252 = vmul.f32 %v2229, 1.442695
    %v2253 = vpow.pop %v2252
    %v2254 = vmul.f32 %v2230, 1.442695
    %v2255 = vpow.pop %v2254
    %v2256 = vmul.f32 %v2231, 1.442695
    %v2257 = vpow.pop %v2256
    %v2258 = vmul.f32 %v2232, 1.442695
    %v2259 = vpow.pop %v2258
    %v2260 = vmul.f32 %v2233, 1.442695
    %v2261 = vpow.pop %v2260
    %v2262 = vmul.f32 %v2234, 1.442695
    %v2263 = vpow.pop %v2262
    %v2264 = vmul.f32 %v2235, 1.442695
    %v2265 = vpow.pop %v2264
    %v2266 = vmul.f32 %v2236, 1.442695
    %v2267 = vpow.pop %v2266
    %v2268 = vmul.f32 %v2237, 1.442695
    %v2269 = vpow.pop %v2268
    %v2270 = vsel %vm734, %v2239, 0.0
    %2271 = vadd.xlane.f32.xlu0 %v2270
    %v2272 = vpop.xlane.xlu0 %2271
    %v2273 = vsel %vm734, %v2241, 0.0
    %2274 = vadd.xlane.f32.xlu0 %v2273
    %v2275 = vpop.xlane.xlu0 %2274
    %v2276 = vsel %vm734, %v2243, 0.0
    %2277 = vadd.xlane.f32.xlu0 %v2276
    %v2278 = vpop.xlane.xlu0 %2277
    %v2279 = vsel %vm734, %v2245, 0.0
    %2280 = vadd.xlane.f32.xlu0 %v2279
    %v2281 = vpop.xlane.xlu0 %2280
    %v2282 = vsel %vm734, %v2247, 0.0
    %2283 = vadd.xlane.f32.xlu0 %v2282
    %v2284 = vpop.xlane.xlu0 %2283
    %v2285 = vsel %vm734, %v2249, 0.0
    %2286 = vadd.xlane.f32.xlu0 %v2285
    %v2287 = vpop.xlane.xlu0 %2286
    %v2288 = vsel %vm734, %v2251, 0.0
    %2289 = vadd.xlane.f32.xlu0 %v2288
    %v2290 = vpop.xlane.xlu0 %2289
    %v2291 = vsel %vm734, %v2253, 0.0
    %2292 = vadd.xlane.f32.xlu0 %v2291
    %v2293 = vpop.xlane.xlu0 %2292
    %v2294 = vsel %vm734, %v2255, 0.0
    %2295 = vadd.xlane.f32.xlu0 %v2294
    %v2296 = vpop.xlane.xlu0 %2295
    %v2297 = vsel %vm734, %v2257, 0.0
    %2298 = vadd.xlane.f32.xlu0 %v2297
    %v2299 = vpop.xlane.xlu0 %2298
    %v2300 = vsel %vm734, %v2259, 0.0
    %2301 = vadd.xlane.f32.xlu0 %v2300
    %v2302 = vpop.xlane.xlu0 %2301
    %v2303 = vsel %vm734, %v2261, 0.0
    %2304 = vadd.xlane.f32.xlu0 %v2303
    %v2305 = vpop.xlane.xlu0 %2304
    %v2306 = vsel %vm734, %v2263, 0.0
    %2307 = vadd.xlane.f32.xlu0 %v2306
    %v2308 = vpop.xlane.xlu0 %2307
    %v2309 = vsel %vm734, %v2265, 0.0
    %2310 = vadd.xlane.f32.xlu0 %v2309
    %v2311 = vpop.xlane.xlu0 %2310
    %v2312 = vsel %vm734, %v2267, 0.0
    %2313 = vadd.xlane.f32.xlu0 %v2312
    %v2314 = vpop.xlane.xlu0 %2313
    %v2315 = vsel %vm734, %v2269, 0.0
    %2316 = vadd.xlane.f32.xlu0 %v2315
    %v2317 = vpop.xlane.xlu0 %2316
    %v2318 = vrcp.pop %v2272
    %v2319 = vrcp.pop %v2275
    %v2320 = vrcp.pop %v2278
    %v2321 = vrcp.pop %v2281
    %v2322 = vrcp.pop %v2284
    %v2323 = vrcp.pop %v2287
    %v2324 = vrcp.pop %v2290
    %v2325 = vrcp.pop %v2293
    %v2326 = vrcp.pop %v2296
    %v2327 = vrcp.pop %v2299
    %v2328 = vrcp.pop %v2302
    %v2329 = vrcp.pop %v2305
    %v2330 = vrcp.pop %v2308
    %v2331 = vrcp.pop %v2311
    %v2332 = vrcp.pop %v2314
    %v2333 = vrcp.pop %v2317
    %v2334 = vmul.f32 %v2239, %v2318
    %v2335 = vmul.f32 %v2241, %v2319
    %v2336 = vmul.f32 %v2243, %v2320
    %v2337 = vmul.f32 %v2245, %v2321
    %v2338 = vmul.f32 %v2247, %v2322
    %v2339 = vmul.f32 %v2249, %v2323
    %v2340 = vmul.f32 %v2251, %v2324
    %v2341 = vmul.f32 %v2253, %v2325
    %v2342 = vmul.f32 %v2255, %v2326
    %v2343 = vmul.f32 %v2257, %v2327
    %v2344 = vmul.f32 %v2259, %v2328
    %v2345 = vmul.f32 %v2261, %v2329
    %v2346 = vmul.f32 %v2263, %v2330
    %v2347 = vmul.f32 %v2265, %v2331
    %v2348 = vmul.f32 %v2267, %v2332
    %v2349 = vmul.f32 %v2269, %v2333
    %v2351 = vsel %vm734, %v2334, 0
    %v2354 = vsel %vm734, %v2335, 0
    %v2357 = vsel %vm734, %v2336, 0
    %v2360 = vsel %vm734, %v2337, 0
    %v2363 = vsel %vm734, %v2338, 0
    %v2366 = vsel %vm734, %v2339, 0
    %v2369 = vsel %vm734, %v2340, 0
    %v2372 = vsel %vm734, %v2341, 0
    %2374 = vmatprep.subr.mxu0 0.0
    %2375 = vmatpush1.msra.mxu0 %v1854
    %2376 = vmatprep.subr.mxu0 0.0
    %2377 = vmatpush1.msra.mxu0 0.0
    %2378 = vmatprep.subr.mxu0 0.0
    %2379 = vmatpush1.msra.mxu0 0.0
    %2380 = vmatprep.subr.mxu0 0.0
    %2381 = vmatpush1.msra.mxu0 0.0
    %2382 = vmatprep.subr.mxu0 0.0
    %2383 = vmatpush1.msra.mxu0 0.0
    %2384 = vmatprep.subr.mxu0 0.0
    %2385 = vmatpush1.msra.mxu0 0.0
    %2386 = vmatprep.subr.mxu0 0.0
    %2387 = vmatpush1.msra.mxu0 0.0
    %2388 = vmatprep.subr.mxu0 0.0
    %2389 = vmatpush1.msra.mxu0 0.0
    %2390 = vmatprep.subr.mxu0 0.0
    %2391 = vmatpush1.msra.mxu0 0.0
    %2392 = vmatprep.subr.mxu0 0.0
    %2393 = vmatpush1.msra.mxu0 0.0
    %2394 = vmatprep.subr.mxu0 0.0
    %2395 = vmatpush1.msra.mxu0 0.0
    %2396 = vmatprep.subr.mxu0 0.0
    %2397 = vmatpush1.msra.mxu0 0.0
    %2398 = vmatprep.subr.mxu0 0.0
    %2399 = vmatpush1.msra.mxu0 0.0
    %2400 = vmatprep.subr.mxu0 0.0
    %2401 = vmatpush1.msra.mxu0 0.0
    %2402 = vmatprep.subr.mxu0 0.0
    %2403 = vmatpush1.msra.mxu0 0.0
    %2404 = vmatprep.subr.mxu0 0.0
    %2405 = vmatpush1.msra.mxu0 0.0
    %2406 = vmatprep.subr.mxu0 0.0
    %2407 = vmatpush1.msra.mxu0 0.0
    %2408 = vmatprep.subr.mxu0 0.0
    %2409 = vmatpush1.msra.mxu0 0.0
    %2410 = vmatprep.subr.mxu0 0.0
    %2411 = vmatpush1.msra.mxu0 0.0
    %2412 = vmatprep.subr.mxu0 0.0
    %2413 = vmatpush1.msra.mxu0 0.0
    %2414 = vmatprep.subr.mxu0 0.0
    %2415 = vmatpush1.msra.mxu0 0.0
    %2416 = vmatprep.subr.mxu0 0.0
    %2417 = vmatpush1.msra.mxu0 0.0
    %2418 = vmatprep.subr.mxu0 0.0
    %2419 = vmatpush1.msra.mxu0 0.0
    %2420 = vmatprep.subr.mxu0 0.0
    %2421 = vmatpush1.msra.mxu0 0.0
    %2422 = vmatprep.subr.mxu0 0.0
    %2423 = vmatpush1.msra.mxu0 0.0
    %2424 = vmatprep.subr.mxu0 0.0
    %2425 = vmatpush1.msra.mxu0 0.0
    %2426 = vmatprep.subr.mxu0 0.0
    %2427 = vmatpush1.msra.mxu0 0.0
    %2428 = vmatprep.subr.mxu0 0.0
    %2429 = vmatpush1.msra.mxu0 0.0
    %2430 = vmatprep.subr.mxu0 0.0
    %2431 = vmatpush1.msra.mxu0 0.0
    %2432 = vmatprep.subr.mxu0 0.0
    %2433 = vmatpush1.msra.mxu0 0.0
    %2434 = vmatprep.subr.mxu0 0.0
    %2435 = vmatpush1.msra.mxu0 0.0
    %2436 = vmatprep.subr.mxu0 0.0
    %2437 = vmatpush1.msra.mxu0 0.0
    %2438 = vmatprep.mubr.f32.mxu0 0.0
    %2439 = vmatmul.mubr.f32.gmra.mrb[0].mxu0 %v2351
    %v2440 = vpop.f32.mrb[0].mxu0
    %v2441 = vadd.f32 0.0, %v2440
    %v2442 = vpop.f32.mrb[0].mxu0
    %2443 = vmatprep.mubr.f32.mxu0 0.0
    %2444 = vmatmul.mubr.f32.gmra.mrb[0].mxu0 %v2354
    %v2445 = vpop.f32.mrb[0].mxu0
    %v2446 = vadd.f32 0.0, %v2445
    %v2447 = vpop.f32.mrb[0].mxu0
    %2448 = vmatprep.mubr.f32.mxu0 0.0
    %2449 = vmatmul.mubr.f32.gmra.mrb[0].mxu0 %v2357
    %v2450 = vpop.f32.mrb[0].mxu0
    %v2451 = vadd.f32 0.0, %v2450
    %v2452 = vpop.f32.mrb[0].mxu0
    %2453 = vmatprep.mubr.f32.mxu0 0.0
    %2454 = vmatmul.mubr.f32.gmra.mrb[0].mxu0 %v2360
    %v2455 = vpop.f32.mrb[0].mxu0
    %v2456 = vadd.f32 0.0, %v2455
    %v2457 = vpop.f32.mrb[0].mxu0
    %2458 = vmatprep.mubr.f32.mxu0 0.0
    %2459 = vmatmul.mubr.f32.gmra.mrb[0].mxu0 %v2363
    %v2460 = vpop.f32.mrb[0].mxu0
    %v2461 = vadd.f32 0.0, %v2460
    %v2462 = vpop.f32.mrb[0].mxu0
    %2463 = vmatprep.mubr.f32.mxu0 0.0
    %2464 = vmatmul.mubr.f32.gmra.mrb[0].mxu0 %v2366
    %v2465 = vpop.f32.mrb[0].mxu0
    %v2466 = vadd.f32 0.0, %v2465
    %v2467 = vpop.f32.mrb[0].mxu0
    %2468 = vmatprep.mubr.f32.mxu0 0.0
    %2469 = vmatmul.mubr.f32.gmra.mrb[0].mxu0 %v2369
    %v2470 = vpop.f32.mrb[0].mxu0
    %v2471 = vadd.f32 0.0, %v2470
    %v2472 = vpop.f32.mrb[0].mxu0
    %2473 = vmatprep.mubr.f32.mxu0 0.0
    %2474 = vmatmul.mubr.f32.gmra.mrb[0].mxu0 %v2372
    %v2475 = vpop.f32.mrb[0].mxu0
    %v2476 = vadd.f32 0.0, %v2475
    %v2477 = vpop.f32.mrb[0].mxu0
    %2478 = vdwg.mxu0
    %v2480 = vsel %vm734, %v2342, 0
    %v2483 = vsel %vm734, %v2343, 0
    %v2486 = vsel %vm734, %v2344, 0
    %v2489 = vsel %vm734, %v2345, 0
    %v2492 = vsel %vm734, %v2346, 0
    %v2495 = vsel %vm734, %v2347, 0
    %v2498 = vsel %vm734, %v2348, 0
    %v2501 = vsel %vm734, %v2349, 0
    %2503 = vmatprep.subr.mxu0 0.0
    %2504 = vmatpush1.msra.mxu0 %v1859
    %2505 = vmatprep.subr.mxu0 0.0
    %2506 = vmatpush1.msra.mxu0 0.0
    %2507 = vmatprep.subr.mxu0 0.0
    %2508 = vmatpush1.msra.mxu0 0.0
    %2509 = vmatprep.subr.mxu0 0.0
    %2510 = vmatpush1.msra.mxu0 0.0
    %2511 = vmatprep.subr.mxu0 0.0
    %2512 = vmatpush1.msra.mxu0 0.0
    %2513 = vmatprep.subr.mxu0 0.0
    %2514 = vmatpush1.msra.mxu0 0.0
    %2515 = vmatprep.subr.mxu0 0.0
    %2516 = vmatpush1.msra.mxu0 0.0
    %2517 = vmatprep.subr.mxu0 0.0
    %2518 = vmatpush1.msra.mxu0 0.0
    %2519 = vmatprep.subr.mxu0 0.0
    %2520 = vmatpush1.msra.mxu0 0.0
    %2521 = vmatprep.subr.mxu0 0.0
    %2522 = vmatpush1.msra.mxu0 0.0
    %2523 = vmatprep.subr.mxu0 0.0
    %2524 = vmatpush1.msra.mxu0 0.0
    %2525 = vmatprep.subr.mxu0 0.0
    %2526 = vmatpush1.msra.mxu0 0.0
    %2527 = vmatprep.subr.mxu0 0.0
    %2528 = vmatpush1.msra.mxu0 0.0
    %2529 = vmatprep.subr.mxu0 0.0
    %2530 = vmatpush1.msra.mxu0 0.0
    %2531 = vmatprep.subr.mxu0 0.0
    %2532 = vmatpush1.msra.mxu0 0.0
    %2533 = vmatprep.subr.mxu0 0.0
    %2534 = vmatpush1.msra.mxu0 0.0
    %2535 = vmatprep.subr.mxu0 0.0
    %2536 = vmatpush1.msra.mxu0 0.0
    %2537 = vmatprep.subr.mxu0 0.0
    %2538 = vmatpush1.msra.mxu0 0.0
    %2539 = vmatprep.subr.mxu0 0.0
    %2540 = vmatpush1.msra.mxu0 0.0
    %2541 = vmatprep.subr.mxu0 0.0
    %2542 = vmatpush1.msra.mxu0 0.0
    %2543 = vmatprep.subr.mxu0 0.0
    %2544 = vmatpush1.msra.mxu0 0.0
    %2545 = vmatprep.subr.mxu0 0.0
    %2546 = vmatpush1.msra.mxu0 0.0
    %2547 = vmatprep.subr.mxu0 0.0
    %2548 = vmatpush1.msra.mxu0 0.0
    %2549 = vmatprep.subr.mxu0 0.0
    %2550 = vmatpush1.msra.mxu0 0.0
    %2551 = vmatprep.subr.mxu0 0.0
    %2552 = vmatpush1.msra.mxu0 0.0
    %2553 = vmatprep.subr.mxu0 0.0
    %2554 = vmatpush1.msra.mxu0 0.0
    %2555 = vmatprep.subr.mxu0 0.0
    %2556 = vmatpush1.msra.mxu0 0.0
    %2557 = vmatprep.subr.mxu0 0.0
    %2558 = vmatpush1.msra.mxu0 0.0
    %2559 = vmatprep.subr.mxu0 0.0
    %2560 = vmatpush1.msra.mxu0 0.0
    %2561 = vmatprep.subr.mxu0 0.0
    %2562 = vmatpush1.msra.mxu0 0.0
    %2563 = vmatprep.subr.mxu0 0.0
    %2564 = vmatpush1.msra.mxu0 0.0
    %2565 = vmatprep.subr.mxu0 0.0
    %2566 = vmatpush1.msra.mxu0 0.0
    %2567 = vmatprep.mubr.f32.mxu0 0.0
    %2568 = vmatmul.mubr.f32.gmra.mrb[0].mxu0 %v2480
    %v2569 = vpop.f32.mrb[0].mxu0
    %v2570 = vadd.f32 0.0, %v2569
    %v2571 = vpop.f32.mrb[0].mxu0
    %2572 = vmatprep.mubr.f32.mxu0 0.0
    %2573 = vmatmul.mubr.f32.gmra.mrb[0].mxu0 %v2483
    %v2574 = vpop.f32.mrb[0].mxu0
    %v2575 = vadd.f32 0.0, %v2574
    %v2576 = vpop.f32.mrb[0].mxu0
    %2577 = vmatprep.mubr.f32.mxu0 0.0
    %2578 = vmatmul.mubr.f32.gmra.mrb[0].mxu0 %v2486
    %v2579 = vpop.f32.mrb[0].mxu0
    %v2580 = vadd.f32 0.0, %v2579
    %v2581 = vpop.f32.mrb[0].mxu0
    %2582 = vmatprep.mubr.f32.mxu0 0.0
    %2583 = vmatmul.mubr.f32.gmra.mrb[0].mxu0 %v2489
    %v2584 = vpop.f32.mrb[0].mxu0
    %v2585 = vadd.f32 0.0, %v2584
    %v2586 = vpop.f32.mrb[0].mxu0
    %2587 = vmatprep.mubr.f32.mxu0 0.0
    %2588 = vmatmul.mubr.f32.gmra.mrb[0].mxu0 %v2492
    %v2589 = vpop.f32.mrb[0].mxu0
    %v2590 = vadd.f32 0.0, %v2589
    %v2591 = vpop.f32.mrb[0].mxu0
    %2592 = vmatprep.mubr.f32.mxu0 0.0
    %2593 = vmatmul.mubr.f32.gmra.mrb[0].mxu0 %v2495
    %v2594 = vpop.f32.mrb[0].mxu0
    %v2595 = vadd.f32 0.0, %v2594
    %v2596 = vpop.f32.mrb[0].mxu0
    %2597 = vmatprep.mubr.f32.mxu0 0.0
    %2598 = vmatmul.mubr.f32.gmra.mrb[0].mxu0 %v2498
    %v2599 = vpop.f32.mrb[0].mxu0
    %v2600 = vadd.f32 0.0, %v2599
    %v2601 = vpop.f32.mrb[0].mxu0
    %2602 = vmatprep.mubr.f32.mxu0 0.0
    %2603 = vmatmul.mubr.f32.gmra.mrb[0].mxu0 %v2501
    %v2604 = vpop.f32.mrb[0].mxu0
    %v2605 = vadd.f32 0.0, %v2604
    %v2606 = vpop.f32.mrb[0].mxu0
    %2607 = vdwg.mxu0
    %v2608 = vmul.f32 %v2441, %v109
    %v2609 = vmul.f32 %v2446, %v113
    %v2610 = vmul.f32 %v2451, %v117
    %v2611 = vmul.f32 %v2456, %v121
    %v2612 = vmul.f32 %v2461, %v125
    %v2613 = vmul.f32 %v2466, %v129
    %v2614 = vmul.f32 %v2471, %v133
    %v2615 = vmul.f32 %v2476, %v137
    %v2616 = vmul.f32 %v2570, %v109
    %v2617 = vmul.f32 %v2575, %v113
    %v2618 = vmul.f32 %v2580, %v117
    %v2619 = vmul.f32 %v2585, %v121
    %v2620 = vmul.f32 %v2590, %v125
    %v2621 = vmul.f32 %v2595, %v129
    %v2622 = vmul.f32 %v2600, %v133
    %v2623 = vmul.f32 %v2605, %v137
    %v2624 = vsel %vm182, %v2608, 0.0
    %v2625 = vsel %vm182, %v2609, 0.0
    %v2626 = vadd.f32 %v2624, %v2625
    %v2627 = vsel %vm182, %v2610, 0.0
    %v2628 = vadd.f32 %v2626, %v2627
    %v2629 = vsel %vm182, %v2611, 0.0
    %v2630 = vadd.f32 %v2628, %v2629
    %v2631 = vsel %vm182, %v2612, 0.0
    %v2632 = vadd.f32 %v2630, %v2631
    %v2633 = vsel %vm182, %v2613, 0.0
    %v2634 = vadd.f32 %v2632, %v2633
    %v2635 = vsel %vm182, %v2614, 0.0
    %v2636 = vadd.f32 %v2634, %v2635
    %v2637 = vsel %vm182, %v2615, 0.0
    %v2638 = vadd.f32 %v2636, %v2637
    %v2639 = vsel %vm182, %v2616, 0.0
    %v2640 = vsel %vm182, %v2617, 0.0
    %v2641 = vadd.f32 %v2639, %v2640
    %v2642 = vsel %vm182, %v2618, 0.0
    %v2643 = vadd.f32 %v2641, %v2642
    %v2644 = vsel %vm182, %v2619, 0.0
    %v2645 = vadd.f32 %v2643, %v2644
    %v2646 = vsel %vm182, %v2620, 0.0
    %v2647 = vadd.f32 %v2645, %v2646
    %v2648 = vsel %vm182, %v2621, 0.0
    %v2649 = vadd.f32 %v2647, %v2648
    %v2650 = vsel %vm182, %v2622, 0.0
    %v2651 = vadd.f32 %v2649, %v2650
    %v2652 = vsel %vm182, %v2623, 0.0
    %v2653 = vadd.f32 %v2651, %v2652
    %v2654 = vlaneseq
    %v2655 = vshrl.u32 %v2654, 7
    %v2656 = vsub.s32 4, %v2655
    %v2657 = vrot.slane %v1617, %v2656
    %v2659 = vsel %vm182, %v2638, 0
    %v2662 = vsel %vm182, %v2653, 0
    %2664 = vmatprep.subr.mxu0 0.0
    %2665 = vmatpush1.msra.mxu0 %v1598
    %2666 = vmatprep.subr.mxu0 0.0
    %2667 = vmatpush1.msra.mxu0 %v1599
    %2668 = vmatprep.subr.mxu0 0.0
    %2669 = vmatpush1.msra.mxu0 %v1600
    %2670 = vmatprep.subr.mxu0 0.0
    %2671 = vmatpush1.msra.mxu0 %v1601
    %2672 = vmatprep.subr.mxu0 0.0
    %2673 = vmatpush1.msra.mxu0 0.0
    %2674 = vmatprep.subr.mxu0 0.0
    %2675 = vmatpush1.msra.mxu0 0.0
    %2676 = vmatprep.subr.mxu0 0.0
    %2677 = vmatpush1.msra.mxu0 0.0
    %2678 = vmatprep.subr.mxu0 0.0
    %2679 = vmatpush1.msra.mxu0 0.0
    %2680 = vmatprep.subr.mxu0 0.0
    %2681 = vmatpush1.msra.mxu0 0.0
    %2682 = vmatprep.subr.mxu0 0.0
    %2683 = vmatpush1.msra.mxu0 0.0
    %2684 = vmatprep.subr.mxu0 0.0
    %2685 = vmatpush1.msra.mxu0 0.0
    %2686 = vmatprep.subr.mxu0 0.0
    %2687 = vmatpush1.msra.mxu0 0.0
    %2688 = vmatprep.subr.mxu0 0.0
    %2689 = vmatpush1.msra.mxu0 0.0
    %2690 = vmatprep.subr.mxu0 0.0
    %2691 = vmatpush1.msra.mxu0 0.0
    %2692 = vmatprep.subr.mxu0 0.0
    %2693 = vmatpush1.msra.mxu0 0.0
    %2694 = vmatprep.subr.mxu0 0.0
    %2695 = vmatpush1.msra.mxu0 0.0
    %2696 = vmatprep.subr.mxu0 0.0
    %2697 = vmatpush1.msra.mxu0 0.0
    %2698 = vmatprep.subr.mxu0 0.0
    %2699 = vmatpush1.msra.mxu0 0.0
    %2700 = vmatprep.subr.mxu0 0.0
    %2701 = vmatpush1.msra.mxu0 0.0
    %2702 = vmatprep.subr.mxu0 0.0
    %2703 = vmatpush1.msra.mxu0 0.0
    %2704 = vmatprep.subr.mxu0 0.0
    %2705 = vmatpush1.msra.mxu0 0.0
    %2706 = vmatprep.subr.mxu0 0.0
    %2707 = vmatpush1.msra.mxu0 0.0
    %2708 = vmatprep.subr.mxu0 0.0
    %2709 = vmatpush1.msra.mxu0 0.0
    %2710 = vmatprep.subr.mxu0 0.0
    %2711 = vmatpush1.msra.mxu0 0.0
    %2712 = vmatprep.subr.mxu0 0.0
    %2713 = vmatpush1.msra.mxu0 0.0
    %2714 = vmatprep.subr.mxu0 0.0
    %2715 = vmatpush1.msra.mxu0 0.0
    %2716 = vmatprep.subr.mxu0 0.0
    %2717 = vmatpush1.msra.mxu0 0.0
    %2718 = vmatprep.subr.mxu0 0.0
    %2719 = vmatpush1.msra.mxu0 0.0
    %2720 = vmatprep.subr.mxu0 0.0
    %2721 = vmatpush1.msra.mxu0 0.0
    %2722 = vmatprep.subr.mxu0 0.0
    %2723 = vmatpush1.msra.mxu0 0.0
    %2724 = vmatprep.subr.mxu0 0.0
    %2725 = vmatpush1.msra.mxu0 0.0
    %2726 = vmatprep.subr.mxu0 0.0
    %2727 = vmatpush1.msra.mxu0 0.0
    %2728 = vmatprep.mubr.f32.mxu0 0.0
    %2729 = vmatmul.mubr.f32.gmra.mrb[0].mxu0 %v2659
    %v2730 = vpop.f32.mrb[0].mxu0
    %v2731 = vadd.f32 %v2657, %v2730
    %v2732 = vpop.f32.mrb[0].mxu0
    %2733 = vmatprep.mubr.f32.mxu0 0.0
    %2734 = vmatmul.mubr.f32.gmra.mrb[0].mxu0 %v2662
    %v2735 = vpop.f32.mrb[0].mxu0
    %v2736 = vadd.f32 %v2657, %v2735
    %v2737 = vpop.f32.mrb[0].mxu0
    %2738 = vdwg.mxu0
    %v2739 = vadd.f32 %v2731, %v1580
    %v2740 = vadd.f32 %v2736, %v1581
    %v2741 = vsel %vm182, %v2739, 0.0
    %2742 = vadd.xlane.f32.xlu0 %v2741
    %v2743 = vpop.xlane.xlu0 %2742
    %v2744 = vsel %vm182, %v2740, 0.0
    %2745 = vadd.xlane.f32.xlu0 %v2744
    %v2746 = vpop.xlane.xlu0 %2745
    %v2747 = vmul.f32 %v2743, %v1308
    %v2748 = vmul.f32 %v2746, %v1308
    %v2749 = vsub.f32 %v2739, %v2747
    %v2750 = vsub.f32 %v2740, %v2748
    %v2751 = vmul.f32 %v2749, %v2749
    %v2752 = vmul.f32 %v2750, %v2750
    %v2753 = vsel %vm182, %v2751, 0.0
    %2754 = vadd.xlane.f32.xlu0 %v2753
    %v2755 = vpop.xlane.xlu0 %2754
    %v2756 = vsel %vm182, %v2752, 0.0
    %2757 = vadd.xlane.f32.xlu0 %v2756
    %v2758 = vpop.xlane.xlu0 %2757
    %v2759 = vmul.f32 %v2755, %v1308
    %v2760 = vmul.f32 %v2758, %v1308
    %v2761 = vadd.f32 %v2759, 1e-05
    %v2762 = vadd.f32 %v2760, 1e-05
    %v2763 = vrsqrt.pop %v2761
    %v2764 = vmul.f32 %v2761, %v2763
    %vm2765 = vcmp.eq.f32.partialorder %v2761, inf
    %v2766 = vsel %vm2765, %v2761, %v2764
    %vm2767 = vcmp.eq.f32.partialorder %v2761, 0.0
    %v2768 = vand.u32 %v2761, 2147483648
    %v2769 = vsel %vm2767, %v2768, %v2766
    %v2770 = vrsqrt.pop %v2762
    %v2771 = vmul.f32 %v2762, %v2770
    %vm2772 = vcmp.eq.f32.partialorder %v2762, inf
    %v2773 = vsel %vm2772, %v2762, %v2771
    %vm2774 = vcmp.eq.f32.partialorder %v2762, 0.0
    %v2775 = vand.u32 %v2762, 2147483648
    %v2776 = vsel %vm2774, %v2775, %v2773
    %v2777 = vrcp.pop %v2769
    %v2778 = vmul.f32 %v2749, %v2777
    %v2779 = vrcp.pop %v2776
    %v2780 = vmul.f32 %v2750, %v2779
    %v2781 = vlaneseq
    %v2782 = vshrl.u32 %v2781, 7
    %v2783 = vsub.s32 6, %v2782
    %v2784 = vrot.slane %v1617, %v2783
    %v2785 = vmul.f32 %v2778, %v2784
    %v2786 = vmul.f32 %v2780, %v2784
    %v2787 = vlaneseq
    %v2788 = vshrl.u32 %v2787, 7
    %v2789 = vsub.s32 7, %v2788
    %v2790 = vrot.slane %v1617, %v2789
    %v2791 = vadd.f32 %v2785, %v2790
    %v2792 = vadd.f32 %v2786, %v2790
    %v2793 = vlaneseq
    %v2794 = vshrl.u32 %v2793, 7
    %v2795 = vsub.s32 0, %v2794
    %v2796 = vrot.slane %v1617, %v2795
    %v2798 = vsel %vm182, %v2791, 0
    %v2801 = vsel %vm182, %v2792, 0
    %2803 = vmatprep.subr.mxu0 0.0
    %2804 = vmatpush1.msra.mxu0 %v1603
    %2805 = vmatprep.subr.mxu0 0.0
    %2806 = vmatpush1.msra.mxu0 %v1604
    %2807 = vmatprep.subr.mxu0 0.0
    %2808 = vmatpush1.msra.mxu0 %v1605
    %2809 = vmatprep.subr.mxu0 0.0
    %2810 = vmatpush1.msra.mxu0 %v1606
    %2811 = vmatprep.subr.mxu0 0.0
    %2812 = vmatpush1.msra.mxu0 0.0
    %2813 = vmatprep.subr.mxu0 0.0
    %2814 = vmatpush1.msra.mxu0 0.0
    %2815 = vmatprep.subr.mxu0 0.0
    %2816 = vmatpush1.msra.mxu0 0.0
    %2817 = vmatprep.subr.mxu0 0.0
    %2818 = vmatpush1.msra.mxu0 0.0
    %2819 = vmatprep.subr.mxu0 0.0
    %2820 = vmatpush1.msra.mxu0 0.0
    %2821 = vmatprep.subr.mxu0 0.0
    %2822 = vmatpush1.msra.mxu0 0.0
    %2823 = vmatprep.subr.mxu0 0.0
    %2824 = vmatpush1.msra.mxu0 0.0
    %2825 = vmatprep.subr.mxu0 0.0
    %2826 = vmatpush1.msra.mxu0 0.0
    %2827 = vmatprep.subr.mxu0 0.0
    %2828 = vmatpush1.msra.mxu0 0.0
    %2829 = vmatprep.subr.mxu0 0.0
    %2830 = vmatpush1.msra.mxu0 0.0
    %2831 = vmatprep.subr.mxu0 0.0
    %2832 = vmatpush1.msra.mxu0 0.0
    %2833 = vmatprep.subr.mxu0 0.0
    %2834 = vmatpush1.msra.mxu0 0.0
    %2835 = vmatprep.subr.mxu0 0.0
    %2836 = vmatpush1.msra.mxu0 0.0
    %2837 = vmatprep.subr.mxu0 0.0
    %2838 = vmatpush1.msra.mxu0 0.0
    %2839 = vmatprep.subr.mxu0 0.0
    %2840 = vmatpush1.msra.mxu0 0.0
    %2841 = vmatprep.subr.mxu0 0.0
    %2842 = vmatpush1.msra.mxu0 0.0
    %2843 = vmatprep.subr.mxu0 0.0
    %2844 = vmatpush1.msra.mxu0 0.0
    %2845 = vmatprep.subr.mxu0 0.0
    %2846 = vmatpush1.msra.mxu0 0.0
    %2847 = vmatprep.subr.mxu0 0.0
    %2848 = vmatpush1.msra.mxu0 0.0
    %2849 = vmatprep.subr.mxu0 0.0
    %2850 = vmatpush1.msra.mxu0 0.0
    %2851 = vmatprep.subr.mxu0 0.0
    %2852 = vmatpush1.msra.mxu0 0.0
    %2853 = vmatprep.subr.mxu0 0.0
    %2854 = vmatpush1.msra.mxu0 0.0
    %2855 = vmatprep.subr.mxu0 0.0
    %2856 = vmatpush1.msra.mxu0 0.0
    %2857 = vmatprep.subr.mxu0 0.0
    %2858 = vmatpush1.msra.mxu0 0.0
    %2859 = vmatprep.subr.mxu0 0.0
    %2860 = vmatpush1.msra.mxu0 0.0
    %2861 = vmatprep.subr.mxu0 0.0
    %2862 = vmatpush1.msra.mxu0 0.0
    %2863 = vmatprep.subr.mxu0 0.0
    %2864 = vmatpush1.msra.mxu0 0.0
    %2865 = vmatprep.subr.mxu0 0.0
    %2866 = vmatpush1.msra.mxu0 0.0
    %2867 = vmatprep.mubr.f32.mxu0 0.0
    %2868 = vmatmul.mubr.f32.gmra.mrb[0].mxu0 %v2798
    %v2869 = vpop.f32.mrb[0].mxu0
    %v2870 = vadd.f32 %v2796, %v2869
    %v2871 = vpop.f32.mrb[0].mxu0
    %2872 = vmatprep.mubr.f32.mxu0 0.0
    %2873 = vmatmul.mubr.f32.gmra.mrb[0].mxu0 %v2801
    %v2874 = vpop.f32.mrb[0].mxu0
    %v2875 = vadd.f32 %v2796, %v2874
    %v2876 = vpop.f32.mrb[0].mxu0
    %2877 = vdwg.mxu0
    %v2878 = vmax.f32 %v2870, 0.0
    %v2879 = vmax.f32 %v2875, 0.0
    %v2880 = vlaneseq
    %v2881 = vshrl.u32 %v2880, 7
    %v2882 = vsub.s32 5, %v2881
    %v2883 = vrot.slane %v1617, %v2882
    %v2885 = vsel %vm1446, %v2878, 0
    %v2888 = vsel %vm1446, %v2879, 0
    %2890 = vmatprep.subr.mxu0 0.0
    %2891 = vmatpush1.msra.mxu0 %v1608
    %2892 = vmatprep.subr.mxu0 0.0
    %2893 = vmatpush1.msra.mxu0 %v1609
    %2894 = vmatprep.subr.mxu0 0.0
    %2895 = vmatpush1.msra.mxu0 %v1610
    %2896 = vmatprep.subr.mxu0 0.0
    %2897 = vmatpush1.msra.mxu0 %v1611
    %2898 = vmatprep.subr.mxu0 0.0
    %2899 = vmatpush1.msra.mxu0 %v1612
    %2900 = vmatprep.subr.mxu0 0.0
    %2901 = vmatpush1.msra.mxu0 %v1613
    %2902 = vmatprep.subr.mxu0 0.0
    %2903 = vmatpush1.msra.mxu0 %v1614
    %2904 = vmatprep.subr.mxu0 0.0
    %2905 = vmatpush1.msra.mxu0 %v1615
    %2906 = vmatprep.subr.mxu0 0.0
    %2907 = vmatpush1.msra.mxu0 0.0
    %2908 = vmatprep.subr.mxu0 0.0
    %2909 = vmatpush1.msra.mxu0 0.0
    %2910 = vmatprep.subr.mxu0 0.0
    %2911 = vmatpush1.msra.mxu0 0.0
    %2912 = vmatprep.subr.mxu0 0.0
    %2913 = vmatpush1.msra.mxu0 0.0
    %2914 = vmatprep.subr.mxu0 0.0
    %2915 = vmatpush1.msra.mxu0 0.0
    %2916 = vmatprep.subr.mxu0 0.0
    %2917 = vmatpush1.msra.mxu0 0.0
    %2918 = vmatprep.subr.mxu0 0.0
    %2919 = vmatpush1.msra.mxu0 0.0
    %2920 = vmatprep.subr.mxu0 0.0
    %2921 = vmatpush1.msra.mxu0 0.0
    %2922 = vmatprep.subr.mxu0 0.0
    %2923 = vmatpush1.msra.mxu0 0.0
    %2924 = vmatprep.subr.mxu0 0.0
    %2925 = vmatpush1.msra.mxu0 0.0
    %2926 = vmatprep.subr.mxu0 0.0
    %2927 = vmatpush1.msra.mxu0 0.0
    %2928 = vmatprep.subr.mxu0 0.0
    %2929 = vmatpush1.msra.mxu0 0.0
    %2930 = vmatprep.subr.mxu0 0.0
    %2931 = vmatpush1.msra.mxu0 0.0
    %2932 = vmatprep.subr.mxu0 0.0
    %2933 = vmatpush1.msra.mxu0 0.0
    %2934 = vmatprep.subr.mxu0 0.0
    %2935 = vmatpush1.msra.mxu0 0.0
    %2936 = vmatprep.subr.mxu0 0.0
    %2937 = vmatpush1.msra.mxu0 0.0
    %2938 = vmatprep.subr.mxu0 0.0
    %2939 = vmatpush1.msra.mxu0 0.0
    %2940 = vmatprep.subr.mxu0 0.0
    %2941 = vmatpush1.msra.mxu0 0.0
    %2942 = vmatprep.subr.mxu0 0.0
    %2943 = vmatpush1.msra.mxu0 0.0
    %2944 = vmatprep.subr.mxu0 0.0
    %2945 = vmatpush1.msra.mxu0 0.0
    %2946 = vmatprep.subr.mxu0 0.0
    %2947 = vmatpush1.msra.mxu0 0.0
    %2948 = vmatprep.subr.mxu0 0.0
    %2949 = vmatpush1.msra.mxu0 0.0
    %2950 = vmatprep.subr.mxu0 0.0
    %2951 = vmatpush1.msra.mxu0 0.0
    %2952 = vmatprep.subr.mxu0 0.0
    %2953 = vmatpush1.msra.mxu0 0.0
    %2954 = vmatprep.mubr.f32.mxu0 0.0
    %2955 = vmatmul.mubr.f32.gmra.mrb[0].mxu0 %v2885
    %v2956 = vpop.f32.mrb[0].mxu0
    %v2957 = vadd.f32 %v2883, %v2956
    %v2958 = vpop.f32.mrb[0].mxu0
    %2959 = vmatprep.mubr.f32.mxu0 0.0
    %2960 = vmatmul.mubr.f32.gmra.mrb[0].mxu0 %v2888
    %v2961 = vpop.f32.mrb[0].mxu0
    %v2962 = vadd.f32 %v2883, %v2961
    %v2963 = vpop.f32.mrb[0].mxu0
    %2964 = vdwg.mxu0
    %v2965 = vadd.f32 %v2957, %v2791
    %v2966 = vadd.f32 %v2962, %v2792
    %v2967 = vsel %vm182, %v2965, 0.0
    %2968 = vadd.xlane.f32.xlu0 %v2967
    %v2969 = vpop.xlane.xlu0 %2968
    %v2970 = vsel %vm182, %v2966, 0.0
    %2971 = vadd.xlane.f32.xlu0 %v2970
    %v2972 = vpop.xlane.xlu0 %2971
    %v2973 = vmul.f32 %v2969, %v1308
    %v2974 = vmul.f32 %v2972, %v1308
    %v2975 = vsub.f32 %v2965, %v2973
    %v2976 = vsub.f32 %v2966, %v2974
    %v2977 = vmul.f32 %v2975, %v2975
    %v2978 = vmul.f32 %v2976, %v2976
    %v2979 = vsel %vm182, %v2977, 0.0
    %2980 = vadd.xlane.f32.xlu0 %v2979
    %v2981 = vpop.xlane.xlu0 %2980
    %v2982 = vsel %vm182, %v2978, 0.0
    %2983 = vadd.xlane.f32.xlu0 %v2982
    %v2984 = vpop.xlane.xlu0 %2983
    %v2985 = vmul.f32 %v2981, %v1308
    %v2986 = vmul.f32 %v2984, %v1308
    %v2987 = vadd.f32 %v2985, 1e-05
    %v2988 = vadd.f32 %v2986, 1e-05
    %v2989 = vrsqrt.pop %v2987
    %v2990 = vmul.f32 %v2987, %v2989
    %vm2991 = vcmp.eq.f32.partialorder %v2987, inf
    %v2992 = vsel %vm2991, %v2987, %v2990
    %vm2993 = vcmp.eq.f32.partialorder %v2987, 0.0
    %v2994 = vand.u32 %v2987, 2147483648
    %v2995 = vsel %vm2993, %v2994, %v2992
    %v2996 = vrsqrt.pop %v2988
    %v2997 = vmul.f32 %v2988, %v2996
    %vm2998 = vcmp.eq.f32.partialorder %v2988, inf
    %v2999 = vsel %vm2998, %v2988, %v2997
    %vm3000 = vcmp.eq.f32.partialorder %v2988, 0.0
    %v3001 = vand.u32 %v2988, 2147483648
    %v3002 = vsel %vm3000, %v3001, %v2999
    %v3003 = vrcp.pop %v2995
    %v3004 = vmul.f32 %v2975, %v3003
    %v3005 = vrcp.pop %v3002
    %v3006 = vmul.f32 %v2976, %v3005
    %v3007 = vlaneseq
    %v3008 = vshrl.u32 %v3007, 7
    %v3009 = vsub.s32 0, %v3008
    %v3010 = vrot.slane %v1618, %v3009
    %v3011 = vmul.f32 %v3004, %v3010
    %v3012 = vmul.f32 %v3006, %v3010
    %v3013 = vlaneseq
    %v3014 = vshrl.u32 %v3013, 7
    %v3015 = vsub.s32 1, %v3014
    %v3016 = vrot.slane %v1618, %v3015
    %v3017 = vadd.f32 %v3011, %v3016
    %v3018 = vadd.f32 %v3012, %v3016
    %3019 = vst.msk [vmem:[#allocation2] sm:$0xff] %vm182, %v3017
    %3020 = vst.msk [vmem:[#allocation2 + $0x8] sm:$0xff] %vm182, %v3018
    // Predicated region
    $region30: #{transformer_encoder.1} parent=1 // pred_check
      _
    $region31: #{transformer_encoder.1} parent=1 // pred_check_branch
      %3022 = sbr.rel (0) target = $region33
    $region32: #{transformer_encoder.1} parent=1 // pred_region
      %s3024 = ssub.s32 256, 256
      %3025 = vsyncadd [#allocation3], %s3024
      %s3026 = sshll.u32 [#allocation2], 4
      %s3027 = int_to_ptr.vmem [resolvable:$true] %s3026
      %3032 = dma.vmem_to_hbm [thread:$0]  %s3027, 256, %s7, [#allocation3], 128, 128, 8
    $region33: #{transformer_encoder.1} parent=1 // pred_fallthru
      _
    // Predicated region
    $region34: #{transformer_encoder.1} parent=1 // pred_check
      _
    $region35: #{transformer_encoder.1} parent=1 // pred_check_branch
      %3034 = sbr.rel (0) target = $region37
    $region36: #{transformer_encoder.1} parent=1 // pred_region
      %3035 = dma.done [#allocation3], 256
    $region37: #{transformer_encoder.1} parent=1 // pred_fallthru
      _
    %3036 = vsyncpa [#allocation3], 1

</llo_original>
